<compile_context>
chip_gen: v7x
topology: tpu7x:2x2x1
jax: 0.10.0
libtpu: 0.0.40
codegen_flags: <defaults>
</compile_context>

<pallas_src>
import functools

import jax
import jax.numpy as jnp
import numpy as np
from jax.experimental import pallas as pl
from jax.experimental.pallas import tpu as pltpu

_BT = 8  # images per grid step (fixed batch tile)


# ----------------------------------------------------------------------------
# Fused kernel: whole MNISTNet forward for one batch tile.
# Row spaces (all 2-D slabs, channels/cols in lanes):
#   conv1 out : row = b*28 + oh   , lane = ow*8  + c    (oh<24, ow<24 valid)
#   pooled1   : row = b*14 + ph   , lane = pw*8  + c    (ph<12, pw<12 valid)
#   conv2 out : row = b*14 + oh2  , lane = ow2*16 + c   (oh2<8, ow2<8 valid)
#   pooled2   : row = b*7  + ph2  , lane = pw2*16 + c   (ph2<4, pw2<4 valid)
# Invalid rows carry finite garbage and are never selected into valid rows.
# ----------------------------------------------------------------------------
def _mnist_fused_kernel(x_ref, t1_ref, b1_ref, se1_ref, so1_ref, ce1_ref,
                        co1_ref, t2_ref, b2_ref, se2_ref, so2_ref, ce2_ref,
                        co2_ref, s3_ref, w1_ref, bf1_ref, w2_ref, bf2_ref,
                        w3_ref, bf3_ref, o_ref, *, bt):
    f32, bf16 = jnp.float32, jnp.bfloat16
    r1 = bt * 28 - 4      # conv1 rows computed
    r2 = bt * 14 - 4      # conv2 rows computed
    r3 = bt * 7 - 3       # flatten rows computed

    def mm(a, b):
        return jnp.dot(a, b, preferred_element_type=f32)

    # conv1 (1->8, k=5) + bias + ReLU: one MXU matmul vs Toeplitz weights.
    x = x_ref[...]                                                    # [bt*28, 28] f32
    lhs1 = jnp.concatenate([x[i:i + r1, :] for i in range(5)], axis=-1)
    c1 = jnp.maximum(mm(lhs1.astype(bf16), t1_ref[...]) + b1_ref[...], 0.0)
    c1 = c1.astype(bf16)                                              # [r1, 192]

    # 2x2/2 max-pool: row pairs & lane pairs via 0/1 selection matmuls.
    hp1 = jnp.maximum(mm(se1_ref[...], c1), mm(so1_ref[...], c1)).astype(bf16)
    p1 = jnp.maximum(mm(hp1, ce1_ref[...]), mm(hp1, co1_ref[...]))    # [bt*14, 96] f32

    # conv2 (8->16, k=5) + bias + ReLU.
    lhs2 = jnp.concatenate([p1[i:i + r2, :] for i in range(5)], axis=-1)
    c2 = jnp.maximum(mm(lhs2.astype(bf16), t2_ref[...]) + b2_ref[...], 0.0)
    c2 = c2.astype(bf16)                                              # [r2, 128]

    hp2 = jnp.maximum(mm(se2_ref[...], c2), mm(so2_ref[...], c2)).astype(bf16)
    p2 = jnp.maximum(mm(hp2, ce2_ref[...]), mm(hp2, co2_ref[...]))    # [bt*7, 64] f32

    # Flatten (PyTorch (c,h,w) order folded into w1) + fc1/fc2/fc3.
    feats = jnp.concatenate([p2[h:h + r3, :] for h in range(4)], axis=-1)
    f = mm(s3_ref[...], feats.astype(bf16)).astype(bf16)              # [bt, 256]
    h1 = jnp.maximum(mm(f, w1_ref[...]) + bf1_ref[...], 0.0).astype(bf16)
    h2 = jnp.maximum(mm(h1, w2_ref[...]) + bf2_ref[...], 0.0).astype(bf16)
    o_ref[...] = (mm(h2, w3_ref[...]) + bf3_ref[...]).astype(o_ref.dtype)


# ----------------------------------------------------------------------------
# Host-side constant builders (0/1 selection matrices, batch-tile dependent).
# ----------------------------------------------------------------------------
def _selection_constants(bt, dtype=jnp.bfloat16):
    r1, r2, r3 = bt * 28 - 4, bt * 14 - 4, bt * 7 - 3

    def row_sel(period_in, rows_in):
        half = period_in // 2
        se = np.zeros((bt * half, rows_in), np.float32)
        so = np.zeros((bt * half, rows_in), np.float32)
        for b in range(bt):
            for q in range(half):
                c = b * period_in + 2 * q
                if c < rows_in:
                    se[b * half + q, c] = 1.0
                if c + 1 < rows_in:
                    so[b * half + q, c + 1] = 1.0
        return jnp.asarray(se, dtype), jnp.asarray(so, dtype)

    def lane_sel(groups_in, group):
        out_groups = groups_in // 2
        ce = np.zeros((groups_in * group, out_groups * group), np.float32)
        co = np.zeros_like(ce)
        for pw in range(out_groups):
            for c in range(group):
                ce[(2 * pw) * group + c, pw * group + c] = 1.0
                co[(2 * pw + 1) * group + c, pw * group + c] = 1.0
        return jnp.asarray(ce, dtype), jnp.asarray(co, dtype)

    se1, so1 = row_sel(28, r1)          # pool1 over H
    se2, so2 = row_sel(14, r2)          # pool2 over H
    ce1, co1 = lane_sel(24, 8)          # pool1 over W  (192 -> 96 lanes)
    ce2, co2 = lane_sel(8, 16)          # pool2 over W  (128 -> 64 lanes)
    s3 = np.zeros((bt, r3), np.float32)  # pick the one valid flatten row/image
    for b in range(bt):
        s3[b, 7 * b] = 1.0
    return se1, so1, ce1, co1, se2, so2, ce2, co2, jnp.asarray(s3, dtype)


# ----------------------------------------------------------------------------
# Parameters (deterministic init, PyTorch shapes) + one-time preparation.
# ----------------------------------------------------------------------------
def init_params(key):
    ks = jax.random.split(key, 10)
    s = 0.05
    return {
        "conv1_w": jax.random.normal(ks[0], (8, 1, 5, 5), jnp.float32) * s,
        "conv1_b": jax.random.normal(ks[1], (8,), jnp.float32) * s,
        "conv2_w": jax.random.normal(ks[2], (16, 8, 5, 5), jnp.float32) * s,
        "conv2_b": jax.random.normal(ks[3], (16,), jnp.float32) * s,
        "fc1_w": jax.random.normal(ks[4], (128, 256), jnp.float32) * s,
        "fc1_b": jax.random.normal(ks[5], (128,), jnp.float32) * s,
        "fc2_w": jax.random.normal(ks[6], (64, 128), jnp.float32) * s,
        "fc2_b": jax.random.normal(ks[7], (64,), jnp.float32) * s,
        "fc3_w": jax.random.normal(ks[8], (10, 64), jnp.float32) * s,
        "fc3_b": jax.random.normal(ks[9], (10,), jnp.float32) * s,
    }


def prepare_params(params, compute_dtype=jnp.bfloat16):
    """Build Toeplitz conv weights, tiled biases and permuted fc weights once."""
    # conv1: T1[i*28 + w_in, ow*8 + co] = W1[co, 0, i, w_in - ow]  (if 0<=diff<5)
    sel1 = np.zeros((5, 28, 24), np.float32)
    for j in range(5):
        for o in range(24):
            sel1[j, o + j, o] = 1.0
    t1 = jnp.einsum("jwo,cij->iwoc", jnp.asarray(sel1), params["conv1_w"][:, 0])
    t1 = t1.reshape(5 * 28, 24 * 8).astype(compute_dtype)              # [140, 192]

    # conv2: T2[i*96 + w_in*8 + ci, ow2*16 + co] = W2[co, ci, i, w_in - ow2]
    sel2 = np.zeros((5, 12, 8), np.float32)
    for j in range(5):
        for o in range(8):
            sel2[j, o + j, o] = 1.0
    t2 = jnp.einsum("jwo,cdij->iwdoc", jnp.asarray(sel2), params["conv2_w"])
    t2 = t2.reshape(5 * 12 * 8, 8 * 16).astype(compute_dtype)           # [480, 128]

    # fc1 permuted so that feature lane order (h, w, c) matches torch (c, h, w).
    w1p = params["fc1_w"].reshape(128, 16, 4, 4).transpose(2, 3, 1, 0)
    w1p = w1p.reshape(256, 128).astype(compute_dtype)

    return {
        "t1": t1,
        "b1": jnp.tile(params["conv1_b"], 24).reshape(1, 192).astype(jnp.float32),
        "t2": t2,
        "b2": jnp.tile(params["conv2_b"], 8).reshape(1, 128).astype(jnp.float32),
        "w1": w1p,
        "bf1": params["fc1_b"].reshape(1, 128).astype(jnp.float32),
        "w2": params["fc2_w"].T.astype(compute_dtype),                  # [128, 64]
        "bf2": params["fc2_b"].reshape(1, 64).astype(jnp.float32),
        "w3": params["fc3_w"].T.astype(compute_dtype),                  # [64, 10]
        "bf3": params["fc3_b"].reshape(1, 10).astype(jnp.float32),
    }


# ----------------------------------------------------------------------------
# Forward pass: one pallas_call for the whole network.
# ----------------------------------------------------------------------------
def mnist_forward(prep, x_nchw, *, batch_tile=_BT):
    assert x_nchw.shape[1:] == (1, 28, 28), x_nchw.shape
    b_in = x_nchw.shape[0]
    bt = batch_tile
    n_tiles = pl.cdiv(b_in, bt)
    b_pad = n_tiles * bt
    if b_pad != b_in:                      # zero-pad: no partial blocks, no NaNs
        x_nchw = jnp.pad(x_nchw, ((0, b_pad - b_in), (0, 0), (0, 0), (0, 0)))
    x2d = x_nchw[:, 0, :, :].reshape(b_pad * 28, 28)          # f32, cast in-kernel

    se1, so1, ce1, co1, se2, so2, ce2, co2, s3 = _selection_constants(bt)

    operands = [x2d, prep["t1"], prep["b1"], se1, so1, ce1, co1,
                prep["t2"], prep["b2"], se2, so2, ce2, co2, s3,
                prep["w1"], prep["bf1"], prep["w2"], prep["bf2"],
                prep["w3"], prep["bf3"]]

    def resident(a):
        return pl.BlockSpec(a.shape, lambda i: (0, 0))

    in_specs = [pl.BlockSpec((bt * 28, 28), lambda i: (i, 0))]
    in_specs += [resident(a) for a in operands[1:]]

    out = pl.pallas_call(
        functools.partial(_mnist_fused_kernel, bt=bt),
        out_shape=jax.ShapeDtypeStruct((b_pad, 10), jnp.float32),
        grid=(n_tiles,),
        in_specs=in_specs,
        out_specs=pl.BlockSpec((bt, 10), lambda i: (i, 0)),
        compiler_params=pltpu.CompilerParams(
            dimension_semantics=("parallel",)),
    )(*operands)
    return out[:b_in]


# ----------------------------------------------------------------------------
# Pure-JAX reference (f32), mirroring the PyTorch module exactly.
# ----------------------------------------------------------------------------
def mnist_forward_reference(params, x):
    dn = ("NCHW", "OIHW", "NCHW")
    b = x.shape[0]
    y = jax.lax.conv_general_dilated(x, params["conv1_w"], (1, 1), "VALID",
                                     dimension_numbers=dn)
    y = jnp.maximum(y + params["conv1_b"].reshape(1, -1, 1, 1), 0.0)
    y = y.reshape(b, 8, 12, 2, 12, 2).max(axis=(3, 5))
    y = jax.lax.conv_general_dilated(y, params["conv2_w"], (1, 1), "VALID",
                                     dimension_numbers=dn)
    y = jnp.maximum(y + params["conv2_b"].reshape(1, -1, 1, 1), 0.0)
    y = y.reshape(b, 16, 4, 2, 4, 2).max(axis=(3, 5))
    y = y.reshape(b, 16 * 4 * 4)
    y = jnp.maximum(y @ params["fc1_w"].T + params["fc1_b"], 0.0)
    y = jnp.maximum(y @ params["fc2_w"].T + params["fc2_b"], 0.0)
    return y @ params["fc3_w"].T + params["fc3_b"]


if __name__ == "__main__":
    key = jax.random.PRNGKey(0)
    pkey, xkey = jax.random.split(key)
    params = init_params(pkey)
    prep = prepare_params(params)

    # MNIST-shaped input (spatial size fixed by fc1 = 16*4*4), small batch.
    x = jax.random.normal(xkey, (2, 1, 28, 28), jnp.float32)

    fwd = jax.jit(mnist_forward)
    out = jax.block_until_ready(fwd(prep, x))
    assert out.shape == (2, 10), out.shape

    ref = mnist_forward_reference(params, x)
    assert bool(jnp.allclose(out, ref, atol=2e-2, rtol=2e-2)), (
        "max |diff| = %f" % float(jnp.max(jnp.abs(out - ref))))

    print("KERNEL_OK")
</pallas_src>

<mosaic_0001>
module attributes {stable_mosaic.version = 11 : i64} {
  func.func @_mnist_fused_kernel(%arg0: i32, %arg1: memref<224x28xf32, #tpu.memory_space<vmem>>, %arg2: memref<140x192xbf16, #tpu.memory_space<vmem>>, %arg3: memref<1x192xf32, #tpu.memory_space<vmem>>, %arg4: memref<112x220xbf16, #tpu.memory_space<vmem>>, %arg5: memref<112x220xbf16, #tpu.memory_space<vmem>>, %arg6: memref<192x96xbf16, #tpu.memory_space<vmem>>, %arg7: memref<192x96xbf16, #tpu.memory_space<vmem>>, %arg8: memref<480x128xbf16, #tpu.memory_space<vmem>>, %arg9: memref<1x128xf32, #tpu.memory_space<vmem>>, %arg10: memref<56x108xbf16, #tpu.memory_space<vmem>>, %arg11: memref<56x108xbf16, #tpu.memory_space<vmem>>, %arg12: memref<128x64xbf16, #tpu.memory_space<vmem>>, %arg13: memref<128x64xbf16, #tpu.memory_space<vmem>>, %arg14: memref<8x53xbf16, #tpu.memory_space<vmem>>, %arg15: memref<256x128xbf16, #tpu.memory_space<vmem>>, %arg16: memref<1x128xf32, #tpu.memory_space<vmem>>, %arg17: memref<128x64xbf16, #tpu.memory_space<vmem>>, %arg18: memref<1x64xf32, #tpu.memory_space<vmem>>, %arg19: memref<64x10xbf16, #tpu.memory_space<vmem>>, %arg20: memref<1x10xf32, #tpu.memory_space<vmem>>, %arg21: memref<8x10xf32, #tpu.memory_space<vmem>>) attributes {dimension_semantics = [#tpu.dimension_semantics<parallel>], iteration_bounds = array<i64: 1>, scalar_prefetch = 0 : i64, scratch_operands = 0 : i64, tpu.core_type = #tpu.core_type<tc>, window_params = [{transform_indices = @transform_0, window_bounds = array<i64: 224, 28>}, {pipeline_mode = #tpu.pipeline_mode<synchronous>, transform_indices = @transform_1, window_bounds = array<i64: 140, 192>}, {pipeline_mode = #tpu.pipeline_mode<synchronous>, transform_indices = @transform_2, window_bounds = array<i64: 1, 192>}, {pipeline_mode = #tpu.pipeline_mode<synchronous>, transform_indices = @transform_3, window_bounds = array<i64: 112, 220>}, {pipeline_mode = #tpu.pipeline_mode<synchronous>, transform_indices = @transform_4, window_bounds = array<i64: 112, 220>}, {pipeline_mode = #tpu.pipeline_mode<synchronous>, transform_indices = @transform_5, window_bounds = array<i64: 192, 96>}, {pipeline_mode = #tpu.pipeline_mode<synchronous>, transform_indices = @transform_6, window_bounds = array<i64: 192, 96>}, {pipeline_mode = #tpu.pipeline_mode<synchronous>, transform_indices = @transform_7, window_bounds = array<i64: 480, 128>}, {pipeline_mode = #tpu.pipeline_mode<synchronous>, transform_indices = @transform_8, window_bounds = array<i64: 1, 128>}, {pipeline_mode = #tpu.pipeline_mode<synchronous>, transform_indices = @transform_9, window_bounds = array<i64: 56, 108>}, {pipeline_mode = #tpu.pipeline_mode<synchronous>, transform_indices = @transform_10, window_bounds = array<i64: 56, 108>}, {pipeline_mode = #tpu.pipeline_mode<synchronous>, transform_indices = @transform_11, window_bounds = array<i64: 128, 64>}, {pipeline_mode = #tpu.pipeline_mode<synchronous>, transform_indices = @transform_12, window_bounds = array<i64: 128, 64>}, {pipeline_mode = #tpu.pipeline_mode<synchronous>, transform_indices = @transform_13, window_bounds = array<i64: 8, 53>}, {pipeline_mode = #tpu.pipeline_mode<synchronous>, transform_indices = @transform_14, window_bounds = array<i64: 256, 128>}, {pipeline_mode = #tpu.pipeline_mode<synchronous>, transform_indices = @transform_15, window_bounds = array<i64: 1, 128>}, {pipeline_mode = #tpu.pipeline_mode<synchronous>, transform_indices = @transform_16, window_bounds = array<i64: 128, 64>}, {pipeline_mode = #tpu.pipeline_mode<synchronous>, transform_indices = @transform_17, window_bounds = array<i64: 1, 64>}, {pipeline_mode = #tpu.pipeline_mode<synchronous>, transform_indices = @transform_18, window_bounds = array<i64: 64, 10>}, {pipeline_mode = #tpu.pipeline_mode<synchronous>, transform_indices = @transform_19, window_bounds = array<i64: 1, 10>}, {transform_indices = @transform_20, window_bounds = array<i64: 8, 10>}]} {
    %c0 = arith.constant 0 : index
    %c0_0 = arith.constant 0 : index
    %0 = vector.load %arg1[%c0, %c0_0] : memref<224x28xf32, #tpu.memory_space<vmem>>, vector<224x28xf32>
    %1 = vector.extract_strided_slice %0 {offsets = [0, 0], sizes = [220, 28], strides = [1, 1]} : vector<224x28xf32> to vector<220x28xf32>
    %2 = vector.extract_strided_slice %0 {offsets = [1, 0], sizes = [220, 28], strides = [1, 1]} : vector<224x28xf32> to vector<220x28xf32>
    %3 = vector.extract_strided_slice %0 {offsets = [2, 0], sizes = [220, 28], strides = [1, 1]} : vector<224x28xf32> to vector<220x28xf32>
    %4 = vector.extract_strided_slice %0 {offsets = [3, 0], sizes = [220, 28], strides = [1, 1]} : vector<224x28xf32> to vector<220x28xf32>
    %5 = vector.extract_strided_slice %0 {offsets = [4, 0], sizes = [220, 28], strides = [1, 1]} : vector<224x28xf32> to vector<220x28xf32>
    %6 = tpu.concatenate %1, %2, %3, %4, %5 in 1 : vector<220x28xf32>, vector<220x28xf32>, vector<220x28xf32>, vector<220x28xf32>, vector<220x28xf32> -> vector<220x140xf32>
    %7 = arith.truncf %6 : vector<220x140xf32> to vector<220x140xbf16>
    %c0_1 = arith.constant 0 : index
    %c0_2 = arith.constant 0 : index
    %8 = vector.load %arg2[%c0_1, %c0_2] : memref<140x192xbf16, #tpu.memory_space<vmem>>, vector<140x192xbf16>
    %cst = arith.constant dense<0.000000e+00> : vector<220x192xf32>
    %9 = tpu.matmul %7, %8, %cst {dimension_numbers = #tpu.dot_dimension_numbers<[1], [0], [0], [1], [0, 0, 1, 1], [], []>} : vector<220x140xbf16>, vector<140x192xbf16>, vector<220x192xf32> -> vector<220x192xf32>
    %c0_3 = arith.constant 0 : index
    %c0_4 = arith.constant 0 : index
    %10 = vector.load %arg3[%c0_3, %c0_4] : memref<1x192xf32, #tpu.memory_space<vmem>>, vector<1x192xf32>
    %11 = vector.broadcast %10 : vector<1x192xf32> to vector<220x192xf32>
    %12 = arith.addf %9, %11 : vector<220x192xf32>
    %cst_5 = arith.constant 0.000000e+00 : f32
    %13 = vector.broadcast %cst_5 : f32 to vector<220x192xf32>
    %14 = arith.maximumf %12, %13 : vector<220x192xf32>
    %15 = arith.truncf %14 : vector<220x192xf32> to vector<220x192xbf16>
    %c0_6 = arith.constant 0 : index
    %c0_7 = arith.constant 0 : index
    %16 = vector.load %arg4[%c0_6, %c0_7] : memref<112x220xbf16, #tpu.memory_space<vmem>>, vector<112x220xbf16>
    %cst_8 = arith.constant dense<0.000000e+00> : vector<112x192xf32>
    %17 = tpu.matmul %16, %15, %cst_8 {dimension_numbers = #tpu.dot_dimension_numbers<[1], [0], [0], [1], [0, 0, 1, 1], [], []>} : vector<112x220xbf16>, vector<220x192xbf16>, vector<112x192xf32> -> vector<112x192xf32>
    %c0_9 = arith.constant 0 : index
    %c0_10 = arith.constant 0 : index
    %18 = vector.load %arg5[%c0_9, %c0_10] : memref<112x220xbf16, #tpu.memory_space<vmem>>, vector<112x220xbf16>
    %cst_11 = arith.constant dense<0.000000e+00> : vector<112x192xf32>
    %19 = tpu.matmul %18, %15, %cst_11 {dimension_numbers = #tpu.dot_dimension_numbers<[1], [0], [0], [1], [0, 0, 1, 1], [], []>} : vector<112x220xbf16>, vector<220x192xbf16>, vector<112x192xf32> -> vector<112x192xf32>
    %20 = arith.maximumf %17, %19 : vector<112x192xf32>
    %21 = arith.truncf %20 : vector<112x192xf32> to vector<112x192xbf16>
    %c0_12 = arith.constant 0 : index
    %c0_13 = arith.constant 0 : index
    %22 = vector.load %arg6[%c0_12, %c0_13] : memref<192x96xbf16, #tpu.memory_space<vmem>>, vector<192x96xbf16>
    %cst_14 = arith.constant dense<0.000000e+00> : vector<112x96xf32>
    %23 = tpu.matmul %21, %22, %cst_14 {dimension_numbers = #tpu.dot_dimension_numbers<[1], [0], [0], [1], [0, 0, 1, 1], [], []>} : vector<112x192xbf16>, vector<192x96xbf16>, vector<112x96xf32> -> vector<112x96xf32>
    %c0_15 = arith.constant 0 : index
    %c0_16 = arith.constant 0 : index
    %24 = vector.load %arg7[%c0_15, %c0_16] : memref<192x96xbf16, #tpu.memory_space<vmem>>, vector<192x96xbf16>
    %cst_17 = arith.constant dense<0.000000e+00> : vector<112x96xf32>
    %25 = tpu.matmul %21, %24, %cst_17 {dimension_numbers = #tpu.dot_dimension_numbers<[1], [0], [0], [1], [0, 0, 1, 1], [], []>} : vector<112x192xbf16>, vector<192x96xbf16>, vector<112x96xf32> -> vector<112x96xf32>
    %26 = arith.maximumf %23, %25 : vector<112x96xf32>
    %27 = vector.extract_strided_slice %26 {offsets = [0, 0], sizes = [108, 96], strides = [1, 1]} : vector<112x96xf32> to vector<108x96xf32>
    %28 = vector.extract_strided_slice %26 {offsets = [1, 0], sizes = [108, 96], strides = [1, 1]} : vector<112x96xf32> to vector<108x96xf32>
    %29 = vector.extract_strided_slice %26 {offsets = [2, 0], sizes = [108, 96], strides = [1, 1]} : vector<112x96xf32> to vector<108x96xf32>
    %30 = vector.extract_strided_slice %26 {offsets = [3, 0], sizes = [108, 96], strides = [1, 1]} : vector<112x96xf32> to vector<108x96xf32>
    %31 = vector.extract_strided_slice %26 {offsets = [4, 0], sizes = [108, 96], strides = [1, 1]} : vector<112x96xf32> to vector<108x96xf32>
    %32 = tpu.concatenate %27, %28, %29, %30, %31 in 1 : vector<108x96xf32>, vector<108x96xf32>, vector<108x96xf32>, vector<108x96xf32>, vector<108x96xf32> -> vector<108x480xf32>
    %33 = arith.truncf %32 : vector<108x480xf32> to vector<108x480xbf16>
    %c0_18 = arith.constant 0 : index
    %c0_19 = arith.constant 0 : index
    %34 = vector.load %arg8[%c0_18, %c0_19] : memref<480x128xbf16, #tpu.memory_space<vmem>>, vector<480x128xbf16>
    %cst_20 = arith.constant dense<0.000000e+00> : vector<108x128xf32>
    %35 = tpu.matmul %33, %34, %cst_20 {dimension_numbers = #tpu.dot_dimension_numbers<[1], [0], [0], [1], [0, 0, 1, 1], [], []>} : vector<108x480xbf16>, vector<480x128xbf16>, vector<108x128xf32> -> vector<108x128xf32>
    %c0_21 = arith.constant 0 : index
    %c0_22 = arith.constant 0 : index
    %36 = vector.load %arg9[%c0_21, %c0_22] : memref<1x128xf32, #tpu.memory_space<vmem>>, vector<1x128xf32>
    %37 = vector.broadcast %36 : vector<1x128xf32> to vector<108x128xf32>
    %38 = arith.addf %35, %37 : vector<108x128xf32>
    %cst_23 = arith.constant 0.000000e+00 : f32
    %39 = vector.broadcast %cst_23 : f32 to vector<108x128xf32>
    %40 = arith.maximumf %38, %39 : vector<108x128xf32>
    %41 = arith.truncf %40 : vector<108x128xf32> to vector<108x128xbf16>
    %c0_24 = arith.constant 0 : index
    %c0_25 = arith.constant 0 : index
    %42 = vector.load %arg10[%c0_24, %c0_25] : memref<56x108xbf16, #tpu.memory_space<vmem>>, vector<56x108xbf16>
    %cst_26 = arith.constant dense<0.000000e+00> : vector<56x128xf32>
    %43 = tpu.matmul %42, %41, %cst_26 {dimension_numbers = #tpu.dot_dimension_numbers<[1], [0], [0], [1], [0, 0, 1, 1], [], []>} : vector<56x108xbf16>, vector<108x128xbf16>, vector<56x128xf32> -> vector<56x128xf32>
    %c0_27 = arith.constant 0 : index
    %c0_28 = arith.constant 0 : index
    %44 = vector.load %arg11[%c0_27, %c0_28] : memref<56x108xbf16, #tpu.memory_space<vmem>>, vector<56x108xbf16>
    %cst_29 = arith.constant dense<0.000000e+00> : vector<56x128xf32>
    %45 = tpu.matmul %44, %41, %cst_29 {dimension_numbers = #tpu.dot_dimension_numbers<[1], [0], [0], [1], [0, 0, 1, 1], [], []>} : vector<56x108xbf16>, vector<108x128xbf16>, vector<56x128xf32> -> vector<56x128xf32>
    %46 = arith.maximumf %43, %45 : vector<56x128xf32>
    %47 = arith.truncf %46 : vector<56x128xf32> to vector<56x128xbf16>
    %c0_30 = arith.constant 0 : index
    %c0_31 = arith.constant 0 : index
    %48 = vector.load %arg12[%c0_30, %c0_31] : memref<128x64xbf16, #tpu.memory_space<vmem>>, vector<128x64xbf16>
    %cst_32 = arith.constant dense<0.000000e+00> : vector<56x64xf32>
    %49 = tpu.matmul %47, %48, %cst_32 {dimension_numbers = #tpu.dot_dimension_numbers<[1], [0], [0], [1], [0, 0, 1, 1], [], []>} : vector<56x128xbf16>, vector<128x64xbf16>, vector<56x64xf32> -> vector<56x64xf32>
    %c0_33 = arith.constant 0 : index
    %c0_34 = arith.constant 0 : index
    %50 = vector.load %arg13[%c0_33, %c0_34] : memref<128x64xbf16, #tpu.memory_space<vmem>>, vector<128x64xbf16>
    %cst_35 = arith.constant dense<0.000000e+00> : vector<56x64xf32>
    %51 = tpu.matmul %47, %50, %cst_35 {dimension_numbers = #tpu.dot_dimension_numbers<[1], [0], [0], [1], [0, 0, 1, 1], [], []>} : vector<56x128xbf16>, vector<128x64xbf16>, vector<56x64xf32> -> vector<56x64xf32>
    %52 = arith.maximumf %49, %51 : vector<56x64xf32>
    %53 = vector.extract_strided_slice %52 {offsets = [0, 0], sizes = [53, 64], strides = [1, 1]} : vector<56x64xf32> to vector<53x64xf32>
    %54 = vector.extract_strided_slice %52 {offsets = [1, 0], sizes = [53, 64], strides = [1, 1]} : vector<56x64xf32> to vector<53x64xf32>
    %55 = vector.extract_strided_slice %52 {offsets = [2, 0], sizes = [53, 64], strides = [1, 1]} : vector<56x64xf32> to vector<53x64xf32>
    %56 = vector.extract_strided_slice %52 {offsets = [3, 0], sizes = [53, 64], strides = [1, 1]} : vector<56x64xf32> to vector<53x64xf32>
    %57 = tpu.concatenate %53, %54, %55, %56 in 1 : vector<53x64xf32>, vector<53x64xf32>, vector<53x64xf32>, vector<53x64xf32> -> vector<53x256xf32>
    %c0_36 = arith.constant 0 : index
    %c0_37 = arith.constant 0 : index
    %58 = vector.load %arg14[%c0_36, %c0_37] : memref<8x53xbf16, #tpu.memory_space<vmem>>, vector<8x53xbf16>
    %59 = arith.truncf %57 : vector<53x256xf32> to vector<53x256xbf16>
    %cst_38 = arith.constant dense<0.000000e+00> : vector<8x256xf32>
    %60 = tpu.matmul %58, %59, %cst_38 {dimension_numbers = #tpu.dot_dimension_numbers<[1], [0], [0], [1], [0, 0, 1, 1], [], []>} : vector<8x53xbf16>, vector<53x256xbf16>, vector<8x256xf32> -> vector<8x256xf32>
    %61 = arith.truncf %60 : vector<8x256xf32> to vector<8x256xbf16>
    %c0_39 = arith.constant 0 : index
    %c0_40 = arith.constant 0 : index
    %62 = vector.load %arg15[%c0_39, %c0_40] : memref<256x128xbf16, #tpu.memory_space<vmem>>, vector<256x128xbf16>
    %cst_41 = arith.constant dense<0.000000e+00> : vector<8x128xf32>
    %63 = tpu.matmul %61, %62, %cst_41 {dimension_numbers = #tpu.dot_dimension_numbers<[1], [0], [0], [1], [0, 0, 1, 1], [], []>} : vector<8x256xbf16>, vector<256x128xbf16>, vector<8x128xf32> -> vector<8x128xf32>
    %c0_42 = arith.constant 0 : index
    %c0_43 = arith.constant 0 : index
    %64 = vector.load %arg16[%c0_42, %c0_43] : memref<1x128xf32, #tpu.memory_space<vmem>>, vector<1x128xf32>
    %65 = vector.broadcast %64 : vector<1x128xf32> to vector<8x128xf32>
    %66 = arith.addf %63, %65 : vector<8x128xf32>
    %cst_44 = arith.constant 0.000000e+00 : f32
    %67 = vector.broadcast %cst_44 : f32 to vector<8x128xf32>
    %68 = arith.maximumf %66, %67 : vector<8x128xf32>
    %69 = arith.truncf %68 : vector<8x128xf32> to vector<8x128xbf16>
    %c0_45 = arith.constant 0 : index
    %c0_46 = arith.constant 0 : index
    %70 = vector.load %arg17[%c0_45, %c0_46] : memref<128x64xbf16, #tpu.memory_space<vmem>>, vector<128x64xbf16>
    %cst_47 = arith.constant dense<0.000000e+00> : vector<8x64xf32>
    %71 = tpu.matmul %69, %70, %cst_47 {dimension_numbers = #tpu.dot_dimension_numbers<[1], [0], [0], [1], [0, 0, 1, 1], [], []>} : vector<8x128xbf16>, vector<128x64xbf16>, vector<8x64xf32> -> vector<8x64xf32>
    %c0_48 = arith.constant 0 : index
    %c0_49 = arith.constant 0 : index
    %72 = vector.load %arg18[%c0_48, %c0_49] : memref<1x64xf32, #tpu.memory_space<vmem>>, vector<1x64xf32>
    %73 = vector.broadcast %72 : vector<1x64xf32> to vector<8x64xf32>
    %74 = arith.addf %71, %73 : vector<8x64xf32>
    %cst_50 = arith.constant 0.000000e+00 : f32
    %75 = vector.broadcast %cst_50 : f32 to vector<8x64xf32>
    %76 = arith.maximumf %74, %75 : vector<8x64xf32>
    %77 = arith.truncf %76 : vector<8x64xf32> to vector<8x64xbf16>
    %c0_51 = arith.constant 0 : index
    %c0_52 = arith.constant 0 : index
    %78 = vector.load %arg19[%c0_51, %c0_52] : memref<64x10xbf16, #tpu.memory_space<vmem>>, vector<64x10xbf16>
    %cst_53 = arith.constant dense<0.000000e+00> : vector<8x10xf32>
    %79 = tpu.matmul %77, %78, %cst_53 {dimension_numbers = #tpu.dot_dimension_numbers<[1], [0], [0], [1], [0, 0, 1, 1], [], []>} : vector<8x64xbf16>, vector<64x10xbf16>, vector<8x10xf32> -> vector<8x10xf32>
    %c0_54 = arith.constant 0 : index
    %c0_55 = arith.constant 0 : index
    %80 = vector.load %arg20[%c0_54, %c0_55] : memref<1x10xf32, #tpu.memory_space<vmem>>, vector<1x10xf32>
    %81 = vector.broadcast %80 : vector<1x10xf32> to vector<8x10xf32>
    %82 = arith.addf %79, %81 : vector<8x10xf32>
    %c0_56 = arith.constant 0 : index
    %c0_57 = arith.constant 0 : index
    %83 = vector.load %arg21[%c0_56, %c0_57] : memref<8x10xf32, #tpu.memory_space<vmem>>, vector<8x10xf32>
    tpu.vector_store %arg21[%c0_56, %c0_57], %82 {strides = array<i32>} : memref<8x10xf32, #tpu.memory_space<vmem>>, vector<8x10xf32>,
    return
  }
  func.func @transform_0(%arg0: i32) -> (i32, i32) {
    %c0_i32 = arith.constant 0 : i32
    %c0_i32_0 = arith.constant 0 : i32
    return %arg0, %c0_i32 : i32, i32
  }
  func.func @transform_1(%arg0: i32) -> (i32, i32) {
    %c0_i32 = arith.constant 0 : i32
    %c0_i32_0 = arith.constant 0 : i32
    %c0_i32_1 = arith.constant 0 : i32
    return %c0_i32, %c0_i32_0 : i32, i32
  }
  func.func @transform_2(%arg0: i32) -> (i32, i32) {
    %c0_i32 = arith.constant 0 : i32
    %c0_i32_0 = arith.constant 0 : i32
    %c0_i32_1 = arith.constant 0 : i32
    return %c0_i32, %c0_i32_0 : i32, i32
  }
  func.func @transform_3(%arg0: i32) -> (i32, i32) {
    %c0_i32 = arith.constant 0 : i32
    %c0_i32_0 = arith.constant 0 : i32
    %c0_i32_1 = arith.constant 0 : i32
    return %c0_i32, %c0_i32_0 : i32, i32
  }
  func.func @transform_4(%arg0: i32) -> (i32, i32) {
    %c0_i32 = arith.constant 0 : i32
    %c0_i32_0 = arith.constant 0 : i32
    %c0_i32_1 = arith.constant 0 : i32
    return %c0_i32, %c0_i32_0 : i32, i32
  }
  func.func @transform_5(%arg0: i32) -> (i32, i32) {
    %c0_i32 = arith.constant 0 : i32
    %c0_i32_0 = arith.constant 0 : i32
    %c0_i32_1 = arith.constant 0 : i32
    return %c0_i32, %c0_i32_0 : i32, i32
  }
  func.func @transform_6(%arg0: i32) -> (i32, i32) {
    %c0_i32 = arith.constant 0 : i32
    %c0_i32_0 = arith.constant 0 : i32
    %c0_i32_1 = arith.constant 0 : i32
    return %c0_i32, %c0_i32_0 : i32, i32
  }
  func.func @transform_7(%arg0: i32) -> (i32, i32) {
    %c0_i32 = arith.constant 0 : i32
    %c0_i32_0 = arith.constant 0 : i32
    %c0_i32_1 = arith.constant 0 : i32
    return %c0_i32, %c0_i32_0 : i32, i32
  }
  func.func @transform_8(%arg0: i32) -> (i32, i32) {
    %c0_i32 = arith.constant 0 : i32
    %c0_i32_0 = arith.constant 0 : i32
    %c0_i32_1 = arith.constant 0 : i32
    return %c0_i32, %c0_i32_0 : i32, i32
  }
  func.func @transform_9(%arg0: i32) -> (i32, i32) {
    %c0_i32 = arith.constant 0 : i32
    %c0_i32_0 = arith.constant 0 : i32
    %c0_i32_1 = arith.constant 0 : i32
    return %c0_i32, %c0_i32_0 : i32, i32
  }
  func.func @transform_10(%arg0: i32) -> (i32, i32) {
    %c0_i32 = arith.constant 0 : i32
    %c0_i32_0 = arith.constant 0 : i32
    %c0_i32_1 = arith.constant 0 : i32
    return %c0_i32, %c0_i32_0 : i32, i32
  }
  func.func @transform_11(%arg0: i32) -> (i32, i32) {
    %c0_i32 = arith.constant 0 : i32
    %c0_i32_0 = arith.constant 0 : i32
    %c0_i32_1 = arith.constant 0 : i32
    return %c0_i32, %c0_i32_0 : i32, i32
  }
  func.func @transform_12(%arg0: i32) -> (i32, i32) {
    %c0_i32 = arith.constant 0 : i32
    %c0_i32_0 = arith.constant 0 : i32
    %c0_i32_1 = arith.constant 0 : i32
    return %c0_i32, %c0_i32_0 : i32, i32
  }
  func.func @transform_13(%arg0: i32) -> (i32, i32) {
    %c0_i32 = arith.constant 0 : i32
    %c0_i32_0 = arith.constant 0 : i32
    %c0_i32_1 = arith.constant 0 : i32
    return %c0_i32, %c0_i32_0 : i32, i32
  }
  func.func @transform_14(%arg0: i32) -> (i32, i32) {
    %c0_i32 = arith.constant 0 : i32
    %c0_i32_0 = arith.constant 0 : i32
    %c0_i32_1 = arith.constant 0 : i32
    return %c0_i32, %c0_i32_0 : i32, i32
  }
  func.func @transform_15(%arg0: i32) -> (i32, i32) {
    %c0_i32 = arith.constant 0 : i32
    %c0_i32_0 = arith.constant 0 : i32
    %c0_i32_1 = arith.constant 0 : i32
    return %c0_i32, %c0_i32_0 : i32, i32
  }
  func.func @transform_16(%arg0: i32) -> (i32, i32) {
    %c0_i32 = arith.constant 0 : i32
    %c0_i32_0 = arith.constant 0 : i32
    %c0_i32_1 = arith.constant 0 : i32
    return %c0_i32, %c0_i32_0 : i32, i32
  }
  func.func @transform_17(%arg0: i32) -> (i32, i32) {
    %c0_i32 = arith.constant 0 : i32
    %c0_i32_0 = arith.constant 0 : i32
    %c0_i32_1 = arith.constant 0 : i32
    return %c0_i32, %c0_i32_0 : i32, i32
  }
  func.func @transform_18(%arg0: i32) -> (i32, i32) {
    %c0_i32 = arith.constant 0 : i32
    %c0_i32_0 = arith.constant 0 : i32
    %c0_i32_1 = arith.constant 0 : i32
    return %c0_i32, %c0_i32_0 : i32, i32
  }
  func.func @transform_19(%arg0: i32) -> (i32, i32) {
    %c0_i32 = arith.constant 0 : i32
    %c0_i32_0 = arith.constant 0 : i32
    %c0_i32_1 = arith.constant 0 : i32
    return %c0_i32, %c0_i32_0 : i32, i32
  }
  func.func @transform_20(%arg0: i32) -> (i32, i32) {
    %c0_i32 = arith.constant 0 : i32
    %c0_i32_0 = arith.constant 0 : i32
    return %arg0, %c0_i32 : i32, i32
  }
}

</mosaic_0001>

<llo_original>
// kernel: mnist_forward.1
$region0: #{mnist_forward.1}
  #allocation0 [shape = 'u32[]', space=smem, size = 0x4, offset = 0x4, fixed_abs, tag = 'smem constant byte address 0x4 - core index']
  #allocation1 [shape = 'u32[144,128]{1,0:T(1,128)}', space=vmem, size = 0x12000, scoped, tag = 'internal scratch']
  %s0 = inlined_call_operand.vmem [shape: f32[224,28], index: 0, kind: input, shape index: {}]
  %s1 = inlined_call_operand.vmem [shape: bf16[140,192], index: 1, kind: input, shape index: {}]
  %s2 = inlined_call_operand.vmem [shape: f32[1,192], index: 2, kind: input, shape index: {}]
  %s3 = inlined_call_operand.vmem [shape: bf16[112,220], index: 3, kind: input, shape index: {}]
  %s4 = inlined_call_operand.vmem [shape: bf16[112,220], index: 4, kind: input, shape index: {}]
  %s5 = inlined_call_operand.vmem [shape: bf16[192,96], index: 5, kind: input, shape index: {}]
  %s6 = inlined_call_operand.vmem [shape: bf16[192,96], index: 6, kind: input, shape index: {}]
  %s7 = inlined_call_operand.vmem [shape: bf16[480,128], index: 7, kind: input, shape index: {}]
  %s8 = inlined_call_operand.vmem [shape: f32[1,128], index: 8, kind: input, shape index: {}]
  %s9 = inlined_call_operand.hbm [shape: bf16[56,108], index: 9, kind: input, shape index: {}]
  %s10 = inlined_call_operand.hbm [shape: bf16[56,108], index: 10, kind: input, shape index: {}]
  %s11 = inlined_call_operand.hbm [shape: bf16[128,64], index: 11, kind: input, shape index: {}]
  %s12 = inlined_call_operand.hbm [shape: bf16[128,64], index: 12, kind: input, shape index: {}]
  %s13 = inlined_call_operand.vmem [shape: bf16[8,53], index: 13, kind: input, shape index: {}]
  %s14 = inlined_call_operand.vmem [shape: bf16[256,128], index: 14, kind: input, shape index: {}]
  %s15 = inlined_call_operand.vmem [shape: f32[1,128], index: 15, kind: input, shape index: {}]
  %s16 = inlined_call_operand.vmem [shape: bf16[128,64], index: 16, kind: input, shape index: {}]
  %s17 = inlined_call_operand.vmem [shape: f32[1,64], index: 17, kind: input, shape index: {}]
  %s18 = inlined_call_operand.vmem [shape: bf16[64,10], index: 18, kind: input, shape index: {}]
  %s19 = inlined_call_operand.vmem [shape: f32[1,10], index: 19, kind: input, shape index: {}]
  %s20 = inlined_call_operand.vmem [shape: f32[8,10], index: 20, kind: output, shape index: {}]
  %s21 = sld [smem:[#allocation0]]
  $region106: #{mnist_forward.1} parent=0
    _
  %s23 = ssub.s32 1, %s21
  %s24 = scalar_select 0, %s23, %s21
  $region1: #{mnist_forward.1} parent=0
    #allocation2 [shape = 'u8[14336]{0}', space=vmem, size = 0x3800, scoped, tag = 'input window, operand 9, single buffered']
    #allocation3 [shape = 's32[1]{0}', space=sflag, size = 0x4, scoped, tag = 'scoped memory for mnist_forward.1']
    #allocation4 [shape = 'u8[14336]{0}', space=vmem, size = 0x3800, scoped, tag = 'input window, operand 10, single buffered']
    #allocation5 [shape = 's32[1]{0}', space=sflag, size = 0x4, scoped, tag = 'scoped memory for mnist_forward.1']
    #allocation6 [shape = 'u8[32768]{0}', space=vmem, size = 0x8000, scoped, tag = 'input window, operand 11, single buffered']
    #allocation7 [shape = 'u8[32768]{0}', space=vmem, size = 0x8000, scoped, tag = 'input window, operand 12, single buffered']
    #allocation8 [shape = 's32[1]{0}', space=sflag, size = 0x4, scoped, tag = 'scoped memory for mnist_forward.1']
    %25 = vsyncpa [#allocation3], 0
    %26 = vsyncpa [#allocation5], 0
    %27 = vsyncpa [#allocation8], 0
    // Predicated region
    $region2: #{mnist_forward.1} parent=1 // pred_check
      _
    $region3: #{mnist_forward.1} parent=1 // pred_check_branch
      %29 = sbr.rel (0) target = $region5
    $region4: #{mnist_forward.1} parent=1 // pred_region
      _
    $region5: #{mnist_forward.1} parent=1 // pred_fallthru
      _
    // Predicated region
    $region6: #{mnist_forward.1} parent=1 // pred_check
      _
    $region7: #{mnist_forward.1} parent=1 // pred_check_branch
      %31 = sbr.rel (0) target = $region9
    $region8: #{mnist_forward.1} parent=1 // pred_region
      _
    $region9: #{mnist_forward.1} parent=1 // pred_fallthru
      _
    // Predicated region
    $region10: #{mnist_forward.1} parent=1 // pred_check
      _
    $region11: #{mnist_forward.1} parent=1 // pred_check_branch
      %33 = sbr.rel (0) target = $region13
    $region12: #{mnist_forward.1} parent=1 // pred_region
      _
    $region13: #{mnist_forward.1} parent=1 // pred_fallthru
      _
    // Predicated region
    $region14: #{mnist_forward.1} parent=1 // pred_check
      _
    $region15: #{mnist_forward.1} parent=1 // pred_check_branch
      %35 = sbr.rel (0) target = $region17
    $region16: #{mnist_forward.1} parent=1 // pred_region
      _
    $region17: #{mnist_forward.1} parent=1 // pred_fallthru
      _
    // Predicated region
    $region18: #{mnist_forward.1} parent=1 // pred_check
      _
    $region19: #{mnist_forward.1} parent=1 // pred_check_branch
      %37 = sbr.rel (0) target = $region21
    $region20: #{mnist_forward.1} parent=1 // pred_region
      _
    $region21: #{mnist_forward.1} parent=1 // pred_fallthru
      _
    // Predicated region
    $region22: #{mnist_forward.1} parent=1 // pred_check
      _
    $region23: #{mnist_forward.1} parent=1 // pred_check_branch
      %39 = sbr.rel (0) target = $region25
    $region24: #{mnist_forward.1} parent=1 // pred_region
      _
    $region25: #{mnist_forward.1} parent=1 // pred_fallthru
      _
    // Predicated region
    $region26: #{mnist_forward.1} parent=1 // pred_check
      _
    $region27: #{mnist_forward.1} parent=1 // pred_check_branch
      %41 = sbr.rel (0) target = $region29
    $region28: #{mnist_forward.1} parent=1 // pred_region
      _
    $region29: #{mnist_forward.1} parent=1 // pred_fallthru
      _
    // Predicated region
    $region30: #{mnist_forward.1} parent=1 // pred_check
      _
    $region31: #{mnist_forward.1} parent=1 // pred_check_branch
      %43 = sbr.rel (0) target = $region33
    $region32: #{mnist_forward.1} parent=1 // pred_region
      _
    $region33: #{mnist_forward.1} parent=1 // pred_fallthru
      _
    // Predicated region
    $region34: #{mnist_forward.1} parent=1 // pred_check
      _
    $region35: #{mnist_forward.1} parent=1 // pred_check_branch
      %45 = sbr.rel (0) target = $region37
    $region36: #{mnist_forward.1} parent=1 // pred_region
      _
    $region37: #{mnist_forward.1} parent=1 // pred_fallthru
      _
    // Predicated region
    $region38: #{mnist_forward.1} parent=1 // pred_check
      _
    $region39: #{mnist_forward.1} parent=1 // pred_check_branch
      %47 = sbr.rel (0) target = $region41
    $region40: #{mnist_forward.1} parent=1 // pred_region
      %s49 = ssub.s32 448, 448
      %50 = vsyncadd [#allocation3], %s49
      %s51 = sshll.u32 [#allocation2], 4
      %s52 = int_to_ptr.vmem [resolvable:$true] %s51
      %57 = dma.hbm_to_vmem [thread:$0]  %s9, 448, %s52, [#allocation3], 64, 64, 4
    $region41: #{mnist_forward.1} parent=1 // pred_fallthru
      _
    // Predicated region
    $region42: #{mnist_forward.1} parent=1 // pred_check
      _
    $region43: #{mnist_forward.1} parent=1 // pred_check_branch
      %59 = sbr.rel (0) target = $region45
    $region44: #{mnist_forward.1} parent=1 // pred_region
      %s61 = ssub.s32 448, 448
      %62 = vsyncadd [#allocation5], %s61
      %s63 = sshll.u32 [#allocation4], 4
      %s64 = int_to_ptr.vmem [resolvable:$true] %s63
      %69 = dma.hbm_to_vmem [thread:$0]  %s10, 448, %s64, [#allocation5], 64, 64, 4
    $region45: #{mnist_forward.1} parent=1 // pred_fallthru
      _
    // Predicated region
    $region46: #{mnist_forward.1} parent=1 // pred_check
      _
    $region47: #{mnist_forward.1} parent=1 // pred_check_branch
      %71 = sbr.rel (0) target = $region49
    $region48: #{mnist_forward.1} parent=1 // pred_region
      %s73 = ssub.s32 1024, 1024
      %74 = vsyncadd [#allocation5], %s73
      %s75 = sshll.u32 [#allocation6], 4
      %s76 = int_to_ptr.vmem [resolvable:$true] %s75
      %81 = dma.hbm_to_vmem [thread:$0]  %s11, 1024, %s76, [#allocation5], 64, 64, 4
    $region49: #{mnist_forward.1} parent=1 // pred_fallthru
      _
    // Predicated region
    $region50: #{mnist_forward.1} parent=1 // pred_check
      _
    $region51: #{mnist_forward.1} parent=1 // pred_check_branch
      %83 = sbr.rel (0) target = $region53
    $region52: #{mnist_forward.1} parent=1 // pred_region
      %s85 = ssub.s32 1024, 1024
      %86 = vsyncadd [#allocation8], %s85
      %s87 = sshll.u32 [#allocation7], 4
      %s88 = int_to_ptr.vmem [resolvable:$true] %s87
      %93 = dma.hbm_to_vmem [thread:$0]  %s12, 1024, %s88, [#allocation8], 64, 64, 4
    $region53: #{mnist_forward.1} parent=1 // pred_fallthru
      _
    // Predicated region
    $region54: #{mnist_forward.1} parent=1 // pred_check
      _
    $region55: #{mnist_forward.1} parent=1 // pred_check_branch
      %95 = sbr.rel (0) target = $region57
    $region56: #{mnist_forward.1} parent=1 // pred_region
      _
    $region57: #{mnist_forward.1} parent=1 // pred_fallthru
      _
    // Predicated region
    $region58: #{mnist_forward.1} parent=1 // pred_check
      _
    $region59: #{mnist_forward.1} parent=1 // pred_check_branch
      %97 = sbr.rel (0) target = $region61
    $region60: #{mnist_forward.1} parent=1 // pred_region
      _
    $region61: #{mnist_forward.1} parent=1 // pred_fallthru
      _
    // Predicated region
    $region62: #{mnist_forward.1} parent=1 // pred_check
      _
    $region63: #{mnist_forward.1} parent=1 // pred_check_branch
      %99 = sbr.rel (0) target = $region65
    $region64: #{mnist_forward.1} parent=1 // pred_region
      _
    $region65: #{mnist_forward.1} parent=1 // pred_fallthru
      _
    // Predicated region
    $region66: #{mnist_forward.1} parent=1 // pred_check
      _
    $region67: #{mnist_forward.1} parent=1 // pred_check_branch
      %101 = sbr.rel (0) target = $region69
    $region68: #{mnist_forward.1} parent=1 // pred_region
      _
    $region69: #{mnist_forward.1} parent=1 // pred_fallthru
      _
    // Predicated region
    $region70: #{mnist_forward.1} parent=1 // pred_check
      _
    $region71: #{mnist_forward.1} parent=1 // pred_check_branch
      %103 = sbr.rel (0) target = $region73
    $region72: #{mnist_forward.1} parent=1 // pred_region
      _
    $region73: #{mnist_forward.1} parent=1 // pred_fallthru
      _
    // Predicated region
    $region74: #{mnist_forward.1} parent=1 // pred_check
      _
    $region75: #{mnist_forward.1} parent=1 // pred_check_branch
      %105 = sbr.rel (0) target = $region77
    $region76: #{mnist_forward.1} parent=1 // pred_region
      _
    $region77: #{mnist_forward.1} parent=1 // pred_fallthru
      _
    // Predicated region
    $region78: #{mnist_forward.1} parent=1 // pred_check
      _
    $region79: #{mnist_forward.1} parent=1 // pred_check_branch
      %107 = sbr.rel (0) target = $region81
    $region80: #{mnist_forward.1} parent=1 // pred_region
      _
    $region81: #{mnist_forward.1} parent=1 // pred_fallthru
      _
    // Predicated region
    $region82: #{mnist_forward.1} parent=1 // pred_check
      _
    $region83: #{mnist_forward.1} parent=1 // pred_check_branch
      %109 = sbr.rel (0) target = $region85
    $region84: #{mnist_forward.1} parent=1 // pred_region
      %110 = dma.done [#allocation3], 448
    $region85: #{mnist_forward.1} parent=1 // pred_fallthru
      _
    // Predicated region
    $region86: #{mnist_forward.1} parent=1 // pred_check
      _
    $region87: #{mnist_forward.1} parent=1 // pred_check_branch
      %112 = sbr.rel (0) target = $region89
    $region88: #{mnist_forward.1} parent=1 // pred_region
      %113 = dma.done [#allocation5], 448
    $region89: #{mnist_forward.1} parent=1 // pred_fallthru
      _
    // Predicated region
    $region90: #{mnist_forward.1} parent=1 // pred_check
      _
    $region91: #{mnist_forward.1} parent=1 // pred_check_branch
      %115 = sbr.rel (0) target = $region93
    $region92: #{mnist_forward.1} parent=1 // pred_region
      %116 = dma.done [#allocation5], 1024
    $region93: #{mnist_forward.1} parent=1 // pred_fallthru
      _
    // Predicated region
    $region94: #{mnist_forward.1} parent=1 // pred_check
      _
    $region95: #{mnist_forward.1} parent=1 // pred_check_branch
      %118 = sbr.rel (0) target = $region97
    $region96: #{mnist_forward.1} parent=1 // pred_region
      %119 = dma.done [#allocation8], 1024
    $region97: #{mnist_forward.1} parent=1 // pred_fallthru
      _
    %v121 = vld [vmem:[%s0] sm:$0xff]
    %v122 = vld [vmem:[%s0 + $0x8] sm:$0xff]
    %v123 = vld [vmem:[%s0 + $0x10] sm:$0xff]
    %v124 = vld [vmem:[%s0 + $0x18] sm:$0xff]
    %v125 = vld [vmem:[%s0 + $0x20] sm:$0xff]
    %v126 = vld [vmem:[%s0 + $0x28] sm:$0xff]
    %v127 = vld [vmem:[%s0 + $0x30] sm:$0xff]
    %v128 = vld [vmem:[%s0 + $0x38] sm:$0xff]
    %v129 = vld [vmem:[%s0 + $0x40] sm:$0xff]
    %v130 = vld [vmem:[%s0 + $0x48] sm:$0xff]
    %v131 = vld [vmem:[%s0 + $0x50] sm:$0xff]
    %v132 = vld [vmem:[%s0 + $0x58] sm:$0xff]
    %v133 = vld [vmem:[%s0 + $0x60] sm:$0xff]
    %v134 = vld [vmem:[%s0 + $0x68] sm:$0xff]
    %v135 = vld [vmem:[%s0 + $0x70] sm:$0xff]
    %v136 = vld [vmem:[%s0 + $0x78] sm:$0xff]
    %v137 = vld [vmem:[%s0 + $0x80] sm:$0xff]
    %v138 = vld [vmem:[%s0 + $0x88] sm:$0xff]
    %v139 = vld [vmem:[%s0 + $0x90] sm:$0xff]
    %v140 = vld [vmem:[%s0 + $0x98] sm:$0xff]
    %v141 = vld [vmem:[%s0 + $0xa0] sm:$0xff]
    %v142 = vld [vmem:[%s0 + $0xa8] sm:$0xff]
    %v143 = vld [vmem:[%s0 + $0xb0] sm:$0xff]
    %v144 = vld [vmem:[%s0 + $0xb8] sm:$0xff]
    %v145 = vld [vmem:[%s0 + $0xc0] sm:$0xff]
    %v146 = vld [vmem:[%s0 + $0xc8] sm:$0xff]
    %v147 = vld [vmem:[%s0 + $0xd0] sm:$0xff]
    %v148 = vld [vmem:[%s0 + $0xd8] sm:$0xff]
    %vm177 = vcmask 1046528
    %v178 = vrot.slane %v121, 1
    %v179 = vrot.slane %v122, 1
    %v180 = vsel %vm177, %v178, %v179
    %v181 = vrot.slane %v123, 1
    %v182 = vsel %vm177, %v179, %v181
    %v183 = vrot.slane %v124, 1
    %v184 = vsel %vm177, %v181, %v183
    %v185 = vrot.slane %v125, 1
    %v186 = vsel %vm177, %v183, %v185
    %v187 = vrot.slane %v126, 1
    %v188 = vsel %vm177, %v185, %v187
    %v189 = vrot.slane %v127, 1
    %v190 = vsel %vm177, %v187, %v189
    %v191 = vrot.slane %v128, 1
    %v192 = vsel %vm177, %v189, %v191
    %v193 = vrot.slane %v129, 1
    %v194 = vsel %vm177, %v191, %v193
    %v195 = vrot.slane %v130, 1
    %v196 = vsel %vm177, %v193, %v195
    %v197 = vrot.slane %v131, 1
    %v198 = vsel %vm177, %v195, %v197
    %v199 = vrot.slane %v132, 1
    %v200 = vsel %vm177, %v197, %v199
    %v201 = vrot.slane %v133, 1
    %v202 = vsel %vm177, %v199, %v201
    %v203 = vrot.slane %v134, 1
    %v204 = vsel %vm177, %v201, %v203
    %v205 = vrot.slane %v135, 1
    %v206 = vsel %vm177, %v203, %v205
    %v207 = vrot.slane %v136, 1
    %v208 = vsel %vm177, %v205, %v207
    %v209 = vrot.slane %v137, 1
    %v210 = vsel %vm177, %v207, %v209
    %v211 = vrot.slane %v138, 1
    %v212 = vsel %vm177, %v209, %v211
    %v213 = vrot.slane %v139, 1
    %v214 = vsel %vm177, %v211, %v213
    %v215 = vrot.slane %v140, 1
    %v216 = vsel %vm177, %v213, %v215
    %v217 = vrot.slane %v141, 1
    %v218 = vsel %vm177, %v215, %v217
    %v219 = vrot.slane %v142, 1
    %v220 = vsel %vm177, %v217, %v219
    %v221 = vrot.slane %v143, 1
    %v222 = vsel %vm177, %v219, %v221
    %v223 = vrot.slane %v144, 1
    %v224 = vsel %vm177, %v221, %v223
    %v225 = vrot.slane %v145, 1
    %v226 = vsel %vm177, %v223, %v225
    %v227 = vrot.slane %v146, 1
    %v228 = vsel %vm177, %v225, %v227
    %v229 = vrot.slane %v147, 1
    %v230 = vsel %vm177, %v227, %v229
    %v231 = vrot.slane %v148, 1
    %v232 = vsel %vm177, %v229, %v231
    %233 = vrot.lane.b32.xlu0 %v180, 28
    %v234 = vpop.permute.xlu0 %233
    %235 = vrot.lane.b32.xlu0 %v182, 28
    %v236 = vpop.permute.xlu0 %235
    %237 = vrot.lane.b32.xlu0 %v184, 28
    %v238 = vpop.permute.xlu0 %237
    %239 = vrot.lane.b32.xlu0 %v186, 28
    %v240 = vpop.permute.xlu0 %239
    %241 = vrot.lane.b32.xlu0 %v188, 28
    %v242 = vpop.permute.xlu0 %241
    %243 = vrot.lane.b32.xlu0 %v190, 28
    %v244 = vpop.permute.xlu0 %243
    %245 = vrot.lane.b32.xlu0 %v192, 28
    %v246 = vpop.permute.xlu0 %245
    %247 = vrot.lane.b32.xlu0 %v194, 28
    %v248 = vpop.permute.xlu0 %247
    %249 = vrot.lane.b32.xlu0 %v196, 28
    %v250 = vpop.permute.xlu0 %249
    %251 = vrot.lane.b32.xlu0 %v198, 28
    %v252 = vpop.permute.xlu0 %251
    %253 = vrot.lane.b32.xlu0 %v200, 28
    %v254 = vpop.permute.xlu0 %253
    %255 = vrot.lane.b32.xlu0 %v202, 28
    %v256 = vpop.permute.xlu0 %255
    %257 = vrot.lane.b32.xlu0 %v204, 28
    %v258 = vpop.permute.xlu0 %257
    %259 = vrot.lane.b32.xlu0 %v206, 28
    %v260 = vpop.permute.xlu0 %259
    %261 = vrot.lane.b32.xlu0 %v208, 28
    %v262 = vpop.permute.xlu0 %261
    %263 = vrot.lane.b32.xlu0 %v210, 28
    %v264 = vpop.permute.xlu0 %263
    %265 = vrot.lane.b32.xlu0 %v212, 28
    %v266 = vpop.permute.xlu0 %265
    %267 = vrot.lane.b32.xlu0 %v214, 28
    %v268 = vpop.permute.xlu0 %267
    %269 = vrot.lane.b32.xlu0 %v216, 28
    %v270 = vpop.permute.xlu0 %269
    %271 = vrot.lane.b32.xlu0 %v218, 28
    %v272 = vpop.permute.xlu0 %271
    %273 = vrot.lane.b32.xlu0 %v220, 28
    %v274 = vpop.permute.xlu0 %273
    %275 = vrot.lane.b32.xlu0 %v222, 28
    %v276 = vpop.permute.xlu0 %275
    %277 = vrot.lane.b32.xlu0 %v224, 28
    %v278 = vpop.permute.xlu0 %277
    %279 = vrot.lane.b32.xlu0 %v226, 28
    %v280 = vpop.permute.xlu0 %279
    %281 = vrot.lane.b32.xlu0 %v228, 28
    %v282 = vpop.permute.xlu0 %281
    %283 = vrot.lane.b32.xlu0 %v230, 28
    %v284 = vpop.permute.xlu0 %283
    %285 = vrot.lane.b32.xlu0 %v232, 28
    %v286 = vpop.permute.xlu0 %285
    %287 = vrot.lane.b32.xlu0 %v231, 28
    %v288 = vpop.permute.xlu0 %287
    %vm317 = vcmask 1045504
    %v318 = vrot.slane %v121, 2
    %v319 = vrot.slane %v122, 2
    %v320 = vsel %vm317, %v318, %v319
    %v321 = vrot.slane %v123, 2
    %v322 = vsel %vm317, %v319, %v321
    %v323 = vrot.slane %v124, 2
    %v324 = vsel %vm317, %v321, %v323
    %v325 = vrot.slane %v125, 2
    %v326 = vsel %vm317, %v323, %v325
    %v327 = vrot.slane %v126, 2
    %v328 = vsel %vm317, %v325, %v327
    %v329 = vrot.slane %v127, 2
    %v330 = vsel %vm317, %v327, %v329
    %v331 = vrot.slane %v128, 2
    %v332 = vsel %vm317, %v329, %v331
    %v333 = vrot.slane %v129, 2
    %v334 = vsel %vm317, %v331, %v333
    %v335 = vrot.slane %v130, 2
    %v336 = vsel %vm317, %v333, %v335
    %v337 = vrot.slane %v131, 2
    %v338 = vsel %vm317, %v335, %v337
    %v339 = vrot.slane %v132, 2
    %v340 = vsel %vm317, %v337, %v339
    %v341 = vrot.slane %v133, 2
    %v342 = vsel %vm317, %v339, %v341
    %v343 = vrot.slane %v134, 2
    %v344 = vsel %vm317, %v341, %v343
    %v345 = vrot.slane %v135, 2
    %v346 = vsel %vm317, %v343, %v345
    %v347 = vrot.slane %v136, 2
    %v348 = vsel %vm317, %v345, %v347
    %v349 = vrot.slane %v137, 2
    %v350 = vsel %vm317, %v347, %v349
    %v351 = vrot.slane %v138, 2
    %v352 = vsel %vm317, %v349, %v351
    %v353 = vrot.slane %v139, 2
    %v354 = vsel %vm317, %v351, %v353
    %v355 = vrot.slane %v140, 2
    %v356 = vsel %vm317, %v353, %v355
    %v357 = vrot.slane %v141, 2
    %v358 = vsel %vm317, %v355, %v357
    %v359 = vrot.slane %v142, 2
    %v360 = vsel %vm317, %v357, %v359
    %v361 = vrot.slane %v143, 2
    %v362 = vsel %vm317, %v359, %v361
    %v363 = vrot.slane %v144, 2
    %v364 = vsel %vm317, %v361, %v363
    %v365 = vrot.slane %v145, 2
    %v366 = vsel %vm317, %v363, %v365
    %v367 = vrot.slane %v146, 2
    %v368 = vsel %vm317, %v365, %v367
    %v369 = vrot.slane %v147, 2
    %v370 = vsel %vm317, %v367, %v369
    %v371 = vrot.slane %v148, 2
    %v372 = vsel %vm317, %v369, %v371
    %373 = vrot.lane.b32.xlu0 %v320, 56
    %v374 = vpop.permute.xlu0 %373
    %375 = vrot.lane.b32.xlu0 %v322, 56
    %v376 = vpop.permute.xlu0 %375
    %377 = vrot.lane.b32.xlu0 %v324, 56
    %v378 = vpop.permute.xlu0 %377
    %379 = vrot.lane.b32.xlu0 %v326, 56
    %v380 = vpop.permute.xlu0 %379
    %381 = vrot.lane.b32.xlu0 %v328, 56
    %v382 = vpop.permute.xlu0 %381
    %383 = vrot.lane.b32.xlu0 %v330, 56
    %v384 = vpop.permute.xlu0 %383
    %385 = vrot.lane.b32.xlu0 %v332, 56
    %v386 = vpop.permute.xlu0 %385
    %387 = vrot.lane.b32.xlu0 %v334, 56
    %v388 = vpop.permute.xlu0 %387
    %389 = vrot.lane.b32.xlu0 %v336, 56
    %v390 = vpop.permute.xlu0 %389
    %391 = vrot.lane.b32.xlu0 %v338, 56
    %v392 = vpop.permute.xlu0 %391
    %393 = vrot.lane.b32.xlu0 %v340, 56
    %v394 = vpop.permute.xlu0 %393
    %395 = vrot.lane.b32.xlu0 %v342, 56
    %v396 = vpop.permute.xlu0 %395
    %397 = vrot.lane.b32.xlu0 %v344, 56
    %v398 = vpop.permute.xlu0 %397
    %399 = vrot.lane.b32.xlu0 %v346, 56
    %v400 = vpop.permute.xlu0 %399
    %401 = vrot.lane.b32.xlu0 %v348, 56
    %v402 = vpop.permute.xlu0 %401
    %403 = vrot.lane.b32.xlu0 %v350, 56
    %v404 = vpop.permute.xlu0 %403
    %405 = vrot.lane.b32.xlu0 %v352, 56
    %v406 = vpop.permute.xlu0 %405
    %407 = vrot.lane.b32.xlu0 %v354, 56
    %v408 = vpop.permute.xlu0 %407
    %409 = vrot.lane.b32.xlu0 %v356, 56
    %v410 = vpop.permute.xlu0 %409
    %411 = vrot.lane.b32.xlu0 %v358, 56
    %v412 = vpop.permute.xlu0 %411
    %413 = vrot.lane.b32.xlu0 %v360, 56
    %v414 = vpop.permute.xlu0 %413
    %415 = vrot.lane.b32.xlu0 %v362, 56
    %v416 = vpop.permute.xlu0 %415
    %417 = vrot.lane.b32.xlu0 %v364, 56
    %v418 = vpop.permute.xlu0 %417
    %419 = vrot.lane.b32.xlu0 %v366, 56
    %v420 = vpop.permute.xlu0 %419
    %421 = vrot.lane.b32.xlu0 %v368, 56
    %v422 = vpop.permute.xlu0 %421
    %423 = vrot.lane.b32.xlu0 %v370, 56
    %v424 = vpop.permute.xlu0 %423
    %425 = vrot.lane.b32.xlu0 %v372, 56
    %v426 = vpop.permute.xlu0 %425
    %427 = vrot.lane.b32.xlu0 %v371, 56
    %v428 = vpop.permute.xlu0 %427
    %vm457 = vcmask 1044480
    %v458 = vrot.slane %v121, 3
    %v459 = vrot.slane %v122, 3
    %v460 = vsel %vm457, %v458, %v459
    %v461 = vrot.slane %v123, 3
    %v462 = vsel %vm457, %v459, %v461
    %v463 = vrot.slane %v124, 3
    %v464 = vsel %vm457, %v461, %v463
    %v465 = vrot.slane %v125, 3
    %v466 = vsel %vm457, %v463, %v465
    %v467 = vrot.slane %v126, 3
    %v468 = vsel %vm457, %v465, %v467
    %v469 = vrot.slane %v127, 3
    %v470 = vsel %vm457, %v467, %v469
    %v471 = vrot.slane %v128, 3
    %v472 = vsel %vm457, %v469, %v471
    %v473 = vrot.slane %v129, 3
    %v474 = vsel %vm457, %v471, %v473
    %v475 = vrot.slane %v130, 3
    %v476 = vsel %vm457, %v473, %v475
    %v477 = vrot.slane %v131, 3
    %v478 = vsel %vm457, %v475, %v477
    %v479 = vrot.slane %v132, 3
    %v480 = vsel %vm457, %v477, %v479
    %v481 = vrot.slane %v133, 3
    %v482 = vsel %vm457, %v479, %v481
    %v483 = vrot.slane %v134, 3
    %v484 = vsel %vm457, %v481, %v483
    %v485 = vrot.slane %v135, 3
    %v486 = vsel %vm457, %v483, %v485
    %v487 = vrot.slane %v136, 3
    %v488 = vsel %vm457, %v485, %v487
    %v489 = vrot.slane %v137, 3
    %v490 = vsel %vm457, %v487, %v489
    %v491 = vrot.slane %v138, 3
    %v492 = vsel %vm457, %v489, %v491
    %v493 = vrot.slane %v139, 3
    %v494 = vsel %vm457, %v491, %v493
    %v495 = vrot.slane %v140, 3
    %v496 = vsel %vm457, %v493, %v495
    %v497 = vrot.slane %v141, 3
    %v498 = vsel %vm457, %v495, %v497
    %v499 = vrot.slane %v142, 3
    %v500 = vsel %vm457, %v497, %v499
    %v501 = vrot.slane %v143, 3
    %v502 = vsel %vm457, %v499, %v501
    %v503 = vrot.slane %v144, 3
    %v504 = vsel %vm457, %v501, %v503
    %v505 = vrot.slane %v145, 3
    %v506 = vsel %vm457, %v503, %v505
    %v507 = vrot.slane %v146, 3
    %v508 = vsel %vm457, %v505, %v507
    %v509 = vrot.slane %v147, 3
    %v510 = vsel %vm457, %v507, %v509
    %v511 = vrot.slane %v148, 3
    %v512 = vsel %vm457, %v509, %v511
    %513 = vrot.lane.b32.xlu0 %v460, 84
    %v514 = vpop.permute.xlu0 %513
    %515 = vrot.lane.b32.xlu0 %v462, 84
    %v516 = vpop.permute.xlu0 %515
    %517 = vrot.lane.b32.xlu0 %v464, 84
    %v518 = vpop.permute.xlu0 %517
    %519 = vrot.lane.b32.xlu0 %v466, 84
    %v520 = vpop.permute.xlu0 %519
    %521 = vrot.lane.b32.xlu0 %v468, 84
    %v522 = vpop.permute.xlu0 %521
    %523 = vrot.lane.b32.xlu0 %v470, 84
    %v524 = vpop.permute.xlu0 %523
    %525 = vrot.lane.b32.xlu0 %v472, 84
    %v526 = vpop.permute.xlu0 %525
    %527 = vrot.lane.b32.xlu0 %v474, 84
    %v528 = vpop.permute.xlu0 %527
    %529 = vrot.lane.b32.xlu0 %v476, 84
    %v530 = vpop.permute.xlu0 %529
    %531 = vrot.lane.b32.xlu0 %v478, 84
    %v532 = vpop.permute.xlu0 %531
    %533 = vrot.lane.b32.xlu0 %v480, 84
    %v534 = vpop.permute.xlu0 %533
    %535 = vrot.lane.b32.xlu0 %v482, 84
    %v536 = vpop.permute.xlu0 %535
    %537 = vrot.lane.b32.xlu0 %v484, 84
    %v538 = vpop.permute.xlu0 %537
    %539 = vrot.lane.b32.xlu0 %v486, 84
    %v540 = vpop.permute.xlu0 %539
    %541 = vrot.lane.b32.xlu0 %v488, 84
    %v542 = vpop.permute.xlu0 %541
    %543 = vrot.lane.b32.xlu0 %v490, 84
    %v544 = vpop.permute.xlu0 %543
    %545 = vrot.lane.b32.xlu0 %v492, 84
    %v546 = vpop.permute.xlu0 %545
    %547 = vrot.lane.b32.xlu0 %v494, 84
    %v548 = vpop.permute.xlu0 %547
    %549 = vrot.lane.b32.xlu0 %v496, 84
    %v550 = vpop.permute.xlu0 %549
    %551 = vrot.lane.b32.xlu0 %v498, 84
    %v552 = vpop.permute.xlu0 %551
    %553 = vrot.lane.b32.xlu0 %v500, 84
    %v554 = vpop.permute.xlu0 %553
    %555 = vrot.lane.b32.xlu0 %v502, 84
    %v556 = vpop.permute.xlu0 %555
    %557 = vrot.lane.b32.xlu0 %v504, 84
    %v558 = vpop.permute.xlu0 %557
    %559 = vrot.lane.b32.xlu0 %v506, 84
    %v560 = vpop.permute.xlu0 %559
    %561 = vrot.lane.b32.xlu0 %v508, 84
    %v562 = vpop.permute.xlu0 %561
    %563 = vrot.lane.b32.xlu0 %v510, 84
    %v564 = vpop.permute.xlu0 %563
    %565 = vrot.lane.b32.xlu0 %v512, 84
    %v566 = vpop.permute.xlu0 %565
    %567 = vrot.lane.b32.xlu0 %v511, 84
    %v568 = vpop.permute.xlu0 %567
    %vm597 = vcmask 1043456
    %v598 = vrot.slane %v121, 4
    %v599 = vrot.slane %v122, 4
    %v600 = vsel %vm597, %v598, %v599
    %v601 = vrot.slane %v123, 4
    %v602 = vsel %vm597, %v599, %v601
    %v603 = vrot.slane %v124, 4
    %v604 = vsel %vm597, %v601, %v603
    %v605 = vrot.slane %v125, 4
    %v606 = vsel %vm597, %v603, %v605
    %v607 = vrot.slane %v126, 4
    %v608 = vsel %vm597, %v605, %v607
    %v609 = vrot.slane %v127, 4
    %v610 = vsel %vm597, %v607, %v609
    %v611 = vrot.slane %v128, 4
    %v612 = vsel %vm597, %v609, %v611
    %v613 = vrot.slane %v129, 4
    %v614 = vsel %vm597, %v611, %v613
    %v615 = vrot.slane %v130, 4
    %v616 = vsel %vm597, %v613, %v615
    %v617 = vrot.slane %v131, 4
    %v618 = vsel %vm597, %v615, %v617
    %v619 = vrot.slane %v132, 4
    %v620 = vsel %vm597, %v617, %v619
    %v621 = vrot.slane %v133, 4
    %v622 = vsel %vm597, %v619, %v621
    %v623 = vrot.slane %v134, 4
    %v624 = vsel %vm597, %v621, %v623
    %v625 = vrot.slane %v135, 4
    %v626 = vsel %vm597, %v623, %v625
    %v627 = vrot.slane %v136, 4
    %v628 = vsel %vm597, %v625, %v627
    %v629 = vrot.slane %v137, 4
    %v630 = vsel %vm597, %v627, %v629
    %v631 = vrot.slane %v138, 4
    %v632 = vsel %vm597, %v629, %v631
    %v633 = vrot.slane %v139, 4
    %v634 = vsel %vm597, %v631, %v633
    %v635 = vrot.slane %v140, 4
    %v636 = vsel %vm597, %v633, %v635
    %v637 = vrot.slane %v141, 4
    %v638 = vsel %vm597, %v635, %v637
    %v639 = vrot.slane %v142, 4
    %v640 = vsel %vm597, %v637, %v639
    %v641 = vrot.slane %v143, 4
    %v642 = vsel %vm597, %v639, %v641
    %v643 = vrot.slane %v144, 4
    %v644 = vsel %vm597, %v641, %v643
    %v645 = vrot.slane %v145, 4
    %v646 = vsel %vm597, %v643, %v645
    %v647 = vrot.slane %v146, 4
    %v648 = vsel %vm597, %v645, %v647
    %v649 = vrot.slane %v147, 4
    %v650 = vsel %vm597, %v647, %v649
    %v651 = vrot.slane %v148, 4
    %v652 = vsel %vm597, %v649, %v651
    %653 = vrot.lane.b32.xlu0 %v600, 112
    %v654 = vpop.permute.xlu0 %653
    %655 = vrot.lane.b32.xlu0 %v602, 112
    %v656 = vpop.permute.xlu0 %655
    %657 = vrot.lane.b32.xlu0 %v604, 112
    %v658 = vpop.permute.xlu0 %657
    %659 = vrot.lane.b32.xlu0 %v606, 112
    %v660 = vpop.permute.xlu0 %659
    %661 = vrot.lane.b32.xlu0 %v608, 112
    %v662 = vpop.permute.xlu0 %661
    %663 = vrot.lane.b32.xlu0 %v610, 112
    %v664 = vpop.permute.xlu0 %663
    %665 = vrot.lane.b32.xlu0 %v612, 112
    %v666 = vpop.permute.xlu0 %665
    %667 = vrot.lane.b32.xlu0 %v614, 112
    %v668 = vpop.permute.xlu0 %667
    %669 = vrot.lane.b32.xlu0 %v616, 112
    %v670 = vpop.permute.xlu0 %669
    %671 = vrot.lane.b32.xlu0 %v618, 112
    %v672 = vpop.permute.xlu0 %671
    %673 = vrot.lane.b32.xlu0 %v620, 112
    %v674 = vpop.permute.xlu0 %673
    %675 = vrot.lane.b32.xlu0 %v622, 112
    %v676 = vpop.permute.xlu0 %675
    %677 = vrot.lane.b32.xlu0 %v624, 112
    %v678 = vpop.permute.xlu0 %677
    %679 = vrot.lane.b32.xlu0 %v626, 112
    %v680 = vpop.permute.xlu0 %679
    %681 = vrot.lane.b32.xlu0 %v628, 112
    %v682 = vpop.permute.xlu0 %681
    %683 = vrot.lane.b32.xlu0 %v630, 112
    %v684 = vpop.permute.xlu0 %683
    %685 = vrot.lane.b32.xlu0 %v632, 112
    %v686 = vpop.permute.xlu0 %685
    %687 = vrot.lane.b32.xlu0 %v634, 112
    %v688 = vpop.permute.xlu0 %687
    %689 = vrot.lane.b32.xlu0 %v636, 112
    %v690 = vpop.permute.xlu0 %689
    %691 = vrot.lane.b32.xlu0 %v638, 112
    %v692 = vpop.permute.xlu0 %691
    %693 = vrot.lane.b32.xlu0 %v640, 112
    %v694 = vpop.permute.xlu0 %693
    %695 = vrot.lane.b32.xlu0 %v642, 112
    %v696 = vpop.permute.xlu0 %695
    %697 = vrot.lane.b32.xlu0 %v644, 112
    %v698 = vpop.permute.xlu0 %697
    %699 = vrot.lane.b32.xlu0 %v646, 112
    %v700 = vpop.permute.xlu0 %699
    %701 = vrot.lane.b32.xlu0 %v648, 112
    %v702 = vpop.permute.xlu0 %701
    %703 = vrot.lane.b32.xlu0 %v650, 112
    %v704 = vpop.permute.xlu0 %703
    %705 = vrot.lane.b32.xlu0 %v652, 112
    %v706 = vpop.permute.xlu0 %705
    %707 = vrot.lane.b32.xlu0 %v651, 112
    %v708 = vpop.permute.xlu0 %707
    %vm737 = vcmask 228352
    %v738 = vsel %vm737, %v121, %v234
    %v739 = vsel %vm737, %v122, %v236
    %v740 = vsel %vm737, %v123, %v238
    %v741 = vsel %vm737, %v124, %v240
    %v742 = vsel %vm737, %v125, %v242
    %v743 = vsel %vm737, %v126, %v244
    %v744 = vsel %vm737, %v127, %v246
    %v745 = vsel %vm737, %v128, %v248
    %v746 = vsel %vm737, %v129, %v250
    %v747 = vsel %vm737, %v130, %v252
    %v748 = vsel %vm737, %v131, %v254
    %v749 = vsel %vm737, %v132, %v256
    %v750 = vsel %vm737, %v133, %v258
    %v751 = vsel %vm737, %v134, %v260
    %v752 = vsel %vm737, %v135, %v262
    %v753 = vsel %vm737, %v136, %v264
    %v754 = vsel %vm737, %v137, %v266
    %v755 = vsel %vm737, %v138, %v268
    %v756 = vsel %vm737, %v139, %v270
    %v757 = vsel %vm737, %v140, %v272
    %v758 = vsel %vm737, %v141, %v274
    %v759 = vsel %vm737, %v142, %v276
    %v760 = vsel %vm737, %v143, %v278
    %v761 = vsel %vm737, %v144, %v280
    %v762 = vsel %vm737, %v145, %v282
    %v763 = vsel %vm737, %v146, %v284
    %v764 = vsel %vm737, %v147, %v286
    %v765 = vsel %vm737, %v148, %v288
    %vm766 = vcmask 457728
    %v767 = vsel %vm766, %v738, %v374
    %v768 = vsel %vm766, %v739, %v376
    %v769 = vsel %vm766, %v740, %v378
    %v770 = vsel %vm766, %v741, %v380
    %v771 = vsel %vm766, %v742, %v382
    %v772 = vsel %vm766, %v743, %v384
    %v773 = vsel %vm766, %v744, %v386
    %v774 = vsel %vm766, %v745, %v388
    %v775 = vsel %vm766, %v746, %v390
    %v776 = vsel %vm766, %v747, %v392
    %v777 = vsel %vm766, %v748, %v394
    %v778 = vsel %vm766, %v749, %v396
    %v779 = vsel %vm766, %v750, %v398
    %v780 = vsel %vm766, %v751, %v400
    %v781 = vsel %vm766, %v752, %v402
    %v782 = vsel %vm766, %v753, %v404
    %v783 = vsel %vm766, %v754, %v406
    %v784 = vsel %vm766, %v755, %v408
    %v785 = vsel %vm766, %v756, %v410
    %v786 = vsel %vm766, %v757, %v412
    %v787 = vsel %vm766, %v758, %v414
    %v788 = vsel %vm766, %v759, %v416
    %v789 = vsel %vm766, %v760, %v418
    %v790 = vsel %vm766, %v761, %v420
    %v791 = vsel %vm766, %v762, %v422
    %v792 = vsel %vm766, %v763, %v424
    %v793 = vsel %vm766, %v764, %v426
    %v794 = vsel %vm766, %v765, %v428
    %vm795 = vcmask 687104
    %v796 = vsel %vm795, %v767, %v514
    %v797 = vsel %vm795, %v768, %v516
    %v798 = vsel %vm795, %v769, %v518
    %v799 = vsel %vm795, %v770, %v520
    %v800 = vsel %vm795, %v771, %v522
    %v801 = vsel %vm795, %v772, %v524
    %v802 = vsel %vm795, %v773, %v526
    %v803 = vsel %vm795, %v774, %v528
    %v804 = vsel %vm795, %v775, %v530
    %v805 = vsel %vm795, %v776, %v532
    %v806 = vsel %vm795, %v777, %v534
    %v807 = vsel %vm795, %v778, %v536
    %v808 = vsel %vm795, %v779, %v538
    %v809 = vsel %vm795, %v780, %v540
    %v810 = vsel %vm795, %v781, %v542
    %v811 = vsel %vm795, %v782, %v544
    %v812 = vsel %vm795, %v783, %v546
    %v813 = vsel %vm795, %v784, %v548
    %v814 = vsel %vm795, %v785, %v550
    %v815 = vsel %vm795, %v786, %v552
    %v816 = vsel %vm795, %v787, %v554
    %v817 = vsel %vm795, %v788, %v556
    %v818 = vsel %vm795, %v789, %v558
    %v819 = vsel %vm795, %v790, %v560
    %v820 = vsel %vm795, %v791, %v562
    %v821 = vsel %vm795, %v792, %v564
    %v822 = vsel %vm795, %v793, %v566
    %v823 = vsel %vm795, %v794, %v568
    %vm824 = vcmask 916480
    %v825 = vsel %vm824, %v796, %v654
    %v826 = vsel %vm824, %v797, %v656
    %v827 = vsel %vm824, %v798, %v658
    %v828 = vsel %vm824, %v799, %v660
    %v829 = vsel %vm824, %v800, %v662
    %v830 = vsel %vm824, %v801, %v664
    %v831 = vsel %vm824, %v802, %v666
    %v832 = vsel %vm824, %v803, %v668
    %v833 = vsel %vm824, %v804, %v670
    %v834 = vsel %vm824, %v805, %v672
    %v835 = vsel %vm824, %v806, %v674
    %v836 = vsel %vm824, %v807, %v676
    %v837 = vsel %vm824, %v808, %v678
    %v838 = vsel %vm824, %v809, %v680
    %v839 = vsel %vm824, %v810, %v682
    %v840 = vsel %vm824, %v811, %v684
    %v841 = vsel %vm824, %v812, %v686
    %v842 = vsel %vm824, %v813, %v688
    %v843 = vsel %vm824, %v814, %v690
    %v844 = vsel %vm824, %v815, %v692
    %v845 = vsel %vm824, %v816, %v694
    %v846 = vsel %vm824, %v817, %v696
    %v847 = vsel %vm824, %v818, %v698
    %v848 = vsel %vm824, %v819, %v700
    %v849 = vsel %vm824, %v820, %v702
    %v850 = vsel %vm824, %v821, %v704
    %v851 = vsel %vm824, %v822, %v706
    %v852 = vsel %vm824, %v823, %v708
    %v853 = vpack.c.bf16 %v826, %v825
    %v854 = vpack.c.bf16 %v656, %v654
    %v855 = vpack.c.bf16 %v828, %v827
    %v856 = vpack.c.bf16 %v660, %v658
    %v857 = vpack.c.bf16 %v830, %v829
    %v858 = vpack.c.bf16 %v664, %v662
    %v859 = vpack.c.bf16 %v832, %v831
    %v860 = vpack.c.bf16 %v668, %v666
    %v861 = vpack.c.bf16 %v834, %v833
    %v862 = vpack.c.bf16 %v672, %v670
    %v863 = vpack.c.bf16 %v836, %v835
    %v864 = vpack.c.bf16 %v676, %v674
    %v865 = vpack.c.bf16 %v838, %v837
    %v866 = vpack.c.bf16 %v680, %v678
    %v867 = vpack.c.bf16 %v840, %v839
    %v868 = vpack.c.bf16 %v684, %v682
    %v869 = vpack.c.bf16 %v842, %v841
    %v870 = vpack.c.bf16 %v688, %v686
    %v871 = vpack.c.bf16 %v844, %v843
    %v872 = vpack.c.bf16 %v692, %v690
    %v873 = vpack.c.bf16 %v846, %v845
    %v874 = vpack.c.bf16 %v696, %v694
    %v875 = vpack.c.bf16 %v848, %v847
    %v876 = vpack.c.bf16 %v700, %v698
    %v877 = vpack.c.bf16 %v850, %v849
    %v878 = vpack.c.bf16 %v704, %v702
    %v879 = vpack.c.bf16 %v852, %v851
    %v880 = vpack.c.bf16 %v708, %v706
    %v881 = vld [vmem:[%s1] sm:$0xff]
    %v882 = vld [vmem:[%s1 + $0x8] sm:$0xff]
    %v883 = vld [vmem:[%s1 + $0x10] sm:$0xff]
    %v884 = vld [vmem:[%s1 + $0x18] sm:$0xff]
    %v885 = vld [vmem:[%s1 + $0x20] sm:$0xff]
    %v886 = vld [vmem:[%s1 + $0x28] sm:$0xff]
    %v887 = vld [vmem:[%s1 + $0x30] sm:$0xff]
    %v888 = vld [vmem:[%s1 + $0x38] sm:$0xff]
    %v889 = vld [vmem:[%s1 + $0x40] sm:$0xff]
    %v890 = vld [vmem:[%s1 + $0x48] sm:$0xff]
    %v891 = vld [vmem:[%s1 + $0x50] sm:$0xff]
    %v892 = vld [vmem:[%s1 + $0x58] sm:$0xff]
    %v893 = vld [vmem:[%s1 + $0x60] sm:$0xff]
    %v894 = vld [vmem:[%s1 + $0x68] sm:$0xff]
    %v895 = vld [vmem:[%s1 + $0x70] sm:$0xff]
    %v896 = vld [vmem:[%s1 + $0x78] sm:$0xff]
    %v897 = vld [vmem:[%s1 + $0x80] sm:$0xff]
    %v898 = vld [vmem:[%s1 + $0x88] sm:$0x33]
    %v899 = vld [vmem:[%s2] sm:$0x3]
    %v901 = vlaneseq
    %v902 = vshrl.u32 %v901, 7
    %v903 = vsub.s32 0, %v902
    %v904 = vrot.slane %v899, %v903
    %v905 = vlaneseq
    %v906 = vshrl.u32 %v905, 7
    %v907 = vsub.s32 1, %v906
    %v908 = vrot.slane %v899, %v907
    %v929 = vunpack.c.l.b16 %v881
    %v930 = vunpack.c.h.b16 %v881
    %v931 = vunpack.c.l.b16 %v882
    %v932 = vunpack.c.h.b16 %v882
    %v933 = vunpack.c.l.b16 %v883
    %v934 = vunpack.c.h.b16 %v883
    %v935 = vunpack.c.l.b16 %v884
    %v936 = vunpack.c.h.b16 %v884
    %v937 = vunpack.c.l.b16 %v885
    %v938 = vunpack.c.h.b16 %v885
    %v939 = vunpack.c.l.b16 %v886
    %v940 = vunpack.c.h.b16 %v886
    %v941 = vunpack.c.l.b16 %v887
    %v942 = vunpack.c.h.b16 %v887
    %v943 = vunpack.c.l.b16 %v888
    %v944 = vunpack.c.h.b16 %v888
    %v945 = vunpack.c.l.b16 %v889
    %v946 = vunpack.c.h.b16 %v889
    %v947 = vunpack.c.l.b16 %v890
    %v948 = vunpack.c.h.b16 %v890
    %v949 = vunpack.c.l.b16 %v891
    %v950 = vunpack.c.h.b16 %v891
    %v951 = vunpack.c.l.b16 %v892
    %v952 = vunpack.c.h.b16 %v892
    %v953 = vunpack.c.l.b16 %v893
    %v954 = vunpack.c.h.b16 %v893
    %v955 = vunpack.c.l.b16 %v894
    %v956 = vunpack.c.h.b16 %v894
    %v957 = vunpack.c.l.b16 %v895
    %v958 = vunpack.c.h.b16 %v895
    %v959 = vunpack.c.l.b16 %v896
    %v960 = vunpack.c.h.b16 %v896
    %v961 = vunpack.c.l.b16 %v897
    %v962 = vunpack.c.h.b16 %v897
    %v963 = vunpack.c.l.b16 %v898
    %v964 = vunpack.c.h.b16 %v898
    %v965 = vpack.c.b16 %v931, %v929
    %v966 = vpack.c.b16 %v932, %v930
    %v967 = vpack.c.b16 %v935, %v933
    %v968 = vpack.c.b16 %v936, %v934
    %v969 = vpack.c.b16 %v939, %v937
    %v970 = vpack.c.b16 %v940, %v938
    %v971 = vpack.c.b16 %v943, %v941
    %v972 = vpack.c.b16 %v944, %v942
    %v973 = vpack.c.b16 %v947, %v945
    %v974 = vpack.c.b16 %v948, %v946
    %v975 = vpack.c.b16 %v951, %v949
    %v976 = vpack.c.b16 %v952, %v950
    %v977 = vpack.c.b16 %v955, %v953
    %v978 = vpack.c.b16 %v956, %v954
    %v979 = vpack.c.b16 %v959, %v957
    %v980 = vpack.c.b16 %v960, %v958
    %v981 = vpack.c.b16 %v963, %v961
    %v982 = vpack.c.b16 %v964, %v962
    %vm999 = vcmask 97280
    %v1001 = vsel %vm999, %v854, 0
    %v1004 = vsel %vm999, %v856, 0
    %v1007 = vsel %vm999, %v858, 0
    %v1010 = vsel %vm999, %v860, 0
    %v1013 = vsel %vm999, %v862, 0
    %v1016 = vsel %vm999, %v864, 0
    %v1019 = vsel %vm999, %v866, 0
    %v1022 = vsel %vm999, %v868, 0
    %v1025 = vsel %vm999, %v870, 0
    %v1028 = vsel %vm999, %v872, 0
    %v1031 = vsel %vm999, %v874, 0
    %v1034 = vsel %vm999, %v876, 0
    %v1037 = vsel %vm999, %v878, 0
    %v1040 = vsel %vm999, %v880, 0
    %v1043 = vsel %vm317, %v981, 0
    %v1046 = vsel %vm317, %v982, 0
    %1048 = vmatprep.subr.bf16.mxu0 %v966
    %1049 = vmatpush1.bf16.msra.mxu0 %v965
    %1050 = vmatprep.subr.bf16.mxu0 %v968
    %1051 = vmatpush1.bf16.msra.mxu0 %v967
    %1052 = vmatprep.subr.bf16.mxu0 %v970
    %1053 = vmatpush1.bf16.msra.mxu0 %v969
    %1054 = vmatprep.subr.bf16.mxu0 %v972
    %1055 = vmatpush1.bf16.msra.mxu0 %v971
    %1056 = vmatprep.subr.bf16.mxu0 %v974
    %1057 = vmatpush1.bf16.msra.mxu0 %v973
    %1058 = vmatprep.subr.bf16.mxu0 %v976
    %1059 = vmatpush1.bf16.msra.mxu0 %v975
    %1060 = vmatprep.subr.bf16.mxu0 %v978
    %1061 = vmatpush1.bf16.msra.mxu0 %v977
    %1062 = vmatprep.subr.bf16.mxu0 %v980
    %1063 = vmatpush1.bf16.msra.mxu0 %v979
    %1064 = vmatprep.subr.bf16.mxu0 %v1046
    %1065 = vmatpush1.bf16.msra.mxu0 %v1043
    %1066 = vmatprep.subr.bf16.mxu0 0
    %1067 = vmatpush1.bf16.msra.mxu0 0
    %1068 = vmatprep.subr.bf16.mxu0 0
    %1069 = vmatpush1.bf16.msra.mxu0 0
    %1070 = vmatprep.subr.bf16.mxu0 0
    %1071 = vmatpush1.bf16.msra.mxu0 0
    %1072 = vmatprep.subr.bf16.mxu0 0
    %1073 = vmatpush1.bf16.msra.mxu0 0
    %1074 = vmatprep.subr.bf16.mxu0 0
    %1075 = vmatpush1.bf16.msra.mxu0 0
    %1076 = vmatprep.subr.bf16.mxu0 0
    %1077 = vmatpush1.bf16.msra.mxu0 0
    %1078 = vmatprep.subr.bf16.mxu0 0
    %1079 = vmatpush1.bf16.msra.mxu0 0
    %1080 = vmatprep.mubr.bf16.mxu0 %v1001
    %1081 = vmatmul.mubr.bf16.gmra.mrb[0].mxu0 %v853
    %v1082 = vpop.f32.mrb[0].mxu0
    %v1083 = vadd.f32 %v904, %v1082
    %v1084 = vpop.f32.mrb[0].mxu0
    %v1085 = vadd.f32 %v908, %v1084
    %v1086 = vpop.f32.mrb[0].mxu0
    %v1087 = vadd.f32 %v904, %v1086
    %v1088 = vpop.f32.mrb[0].mxu0
    %v1089 = vadd.f32 %v908, %v1088
    %1090 = vmatprep.mubr.bf16.mxu0 %v1004
    %1091 = vmatmul.mubr.bf16.gmra.mrb[0].mxu0 %v855
    %v1092 = vpop.f32.mrb[0].mxu0
    %v1093 = vadd.f32 %v904, %v1092
    %v1094 = vpop.f32.mrb[0].mxu0
    %v1095 = vadd.f32 %v908, %v1094
    %v1096 = vpop.f32.mrb[0].mxu0
    %v1097 = vadd.f32 %v904, %v1096
    %v1098 = vpop.f32.mrb[0].mxu0
    %v1099 = vadd.f32 %v908, %v1098
    %1100 = vmatprep.mubr.bf16.mxu0 %v1007
    %1101 = vmatmul.mubr.bf16.gmra.mrb[0].mxu0 %v857
    %v1102 = vpop.f32.mrb[0].mxu0
    %v1103 = vadd.f32 %v904, %v1102
    %v1104 = vpop.f32.mrb[0].mxu0
    %v1105 = vadd.f32 %v908, %v1104
    %v1106 = vpop.f32.mrb[0].mxu0
    %v1107 = vadd.f32 %v904, %v1106
    %v1108 = vpop.f32.mrb[0].mxu0
    %v1109 = vadd.f32 %v908, %v1108
    %1110 = vmatprep.mubr.bf16.mxu0 %v1010
    %1111 = vmatmul.mubr.bf16.gmra.mrb[0].mxu0 %v859
    %v1112 = vpop.f32.mrb[0].mxu0
    %v1113 = vadd.f32 %v904, %v1112
    %v1114 = vpop.f32.mrb[0].mxu0
    %v1115 = vadd.f32 %v908, %v1114
    %v1116 = vpop.f32.mrb[0].mxu0
    %v1117 = vadd.f32 %v904, %v1116
    %v1118 = vpop.f32.mrb[0].mxu0
    %v1119 = vadd.f32 %v908, %v1118
    %1120 = vmatprep.mubr.bf16.mxu0 %v1013
    %1121 = vmatmul.mubr.bf16.gmra.mrb[0].mxu0 %v861
    %v1122 = vpop.f32.mrb[0].mxu0
    %v1123 = vadd.f32 %v904, %v1122
    %v1124 = vpop.f32.mrb[0].mxu0
    %v1125 = vadd.f32 %v908, %v1124
    %v1126 = vpop.f32.mrb[0].mxu0
    %v1127 = vadd.f32 %v904, %v1126
    %v1128 = vpop.f32.mrb[0].mxu0
    %v1129 = vadd.f32 %v908, %v1128
    %1130 = vmatprep.mubr.bf16.mxu0 %v1016
    %1131 = vmatmul.mubr.bf16.gmra.mrb[0].mxu0 %v863
    %v1132 = vpop.f32.mrb[0].mxu0
    %v1133 = vadd.f32 %v904, %v1132
    %v1134 = vpop.f32.mrb[0].mxu0
    %v1135 = vadd.f32 %v908, %v1134
    %v1136 = vpop.f32.mrb[0].mxu0
    %v1137 = vadd.f32 %v904, %v1136
    %v1138 = vpop.f32.mrb[0].mxu0
    %v1139 = vadd.f32 %v908, %v1138
    %1140 = vmatprep.mubr.bf16.mxu0 %v1019
    %1141 = vmatmul.mubr.bf16.gmra.mrb[0].mxu0 %v865
    %v1142 = vpop.f32.mrb[0].mxu0
    %v1143 = vadd.f32 %v904, %v1142
    %v1144 = vpop.f32.mrb[0].mxu0
    %v1145 = vadd.f32 %v908, %v1144
    %v1146 = vpop.f32.mrb[0].mxu0
    %v1147 = vadd.f32 %v904, %v1146
    %v1148 = vpop.f32.mrb[0].mxu0
    %v1149 = vadd.f32 %v908, %v1148
    %1150 = vmatprep.mubr.bf16.mxu0 %v1022
    %1151 = vmatmul.mubr.bf16.gmra.mrb[0].mxu0 %v867
    %v1152 = vpop.f32.mrb[0].mxu0
    %v1153 = vadd.f32 %v904, %v1152
    %v1154 = vpop.f32.mrb[0].mxu0
    %v1155 = vadd.f32 %v908, %v1154
    %v1156 = vpop.f32.mrb[0].mxu0
    %v1157 = vadd.f32 %v904, %v1156
    %v1158 = vpop.f32.mrb[0].mxu0
    %v1159 = vadd.f32 %v908, %v1158
    %1160 = vmatprep.mubr.bf16.mxu0 %v1025
    %1161 = vmatmul.mubr.bf16.gmra.mrb[0].mxu0 %v869
    %v1162 = vpop.f32.mrb[0].mxu0
    %v1163 = vadd.f32 %v904, %v1162
    %v1164 = vpop.f32.mrb[0].mxu0
    %v1165 = vadd.f32 %v908, %v1164
    %v1166 = vpop.f32.mrb[0].mxu0
    %v1167 = vadd.f32 %v904, %v1166
    %v1168 = vpop.f32.mrb[0].mxu0
    %v1169 = vadd.f32 %v908, %v1168
    %1170 = vmatprep.mubr.bf16.mxu0 %v1028
    %1171 = vmatmul.mubr.bf16.gmra.mrb[0].mxu0 %v871
    %v1172 = vpop.f32.mrb[0].mxu0
    %v1173 = vadd.f32 %v904, %v1172
    %v1174 = vpop.f32.mrb[0].mxu0
    %v1175 = vadd.f32 %v908, %v1174
    %v1176 = vpop.f32.mrb[0].mxu0
    %v1177 = vadd.f32 %v904, %v1176
    %v1178 = vpop.f32.mrb[0].mxu0
    %v1179 = vadd.f32 %v908, %v1178
    %1180 = vmatprep.mubr.bf16.mxu0 %v1031
    %1181 = vmatmul.mubr.bf16.gmra.mrb[0].mxu0 %v873
    %v1182 = vpop.f32.mrb[0].mxu0
    %v1183 = vadd.f32 %v904, %v1182
    %v1184 = vpop.f32.mrb[0].mxu0
    %v1185 = vadd.f32 %v908, %v1184
    %v1186 = vpop.f32.mrb[0].mxu0
    %v1187 = vadd.f32 %v904, %v1186
    %v1188 = vpop.f32.mrb[0].mxu0
    %v1189 = vadd.f32 %v908, %v1188
    %1190 = vmatprep.mubr.bf16.mxu0 %v1034
    %1191 = vmatmul.mubr.bf16.gmra.mrb[0].mxu0 %v875
    %v1192 = vpop.f32.mrb[0].mxu0
    %v1193 = vadd.f32 %v904, %v1192
    %v1194 = vpop.f32.mrb[0].mxu0
    %v1195 = vadd.f32 %v908, %v1194
    %v1196 = vpop.f32.mrb[0].mxu0
    %v1197 = vadd.f32 %v904, %v1196
    %v1198 = vpop.f32.mrb[0].mxu0
    %v1199 = vadd.f32 %v908, %v1198
    %1200 = vmatprep.mubr.bf16.mxu0 %v1037
    %1201 = vmatmul.mubr.bf16.gmra.mrb[0].mxu0 %v877
    %v1202 = vpop.f32.mrb[0].mxu0
    %v1203 = vadd.f32 %v904, %v1202
    %v1204 = vpop.f32.mrb[0].mxu0
    %v1205 = vadd.f32 %v908, %v1204
    %v1206 = vpop.f32.mrb[0].mxu0
    %v1207 = vadd.f32 %v904, %v1206
    %v1208 = vpop.f32.mrb[0].mxu0
    %v1209 = vadd.f32 %v908, %v1208
    %1210 = vmatprep.mubr.bf16.mxu0 %v1040
    %1211 = vmatmul.mubr.bf16.gmra.mrb[0].mxu0 %v879
    %v1212 = vpop.f32.mrb[0].mxu0
    %v1213 = vadd.f32 %v904, %v1212
    %v1214 = vpop.f32.mrb[0].mxu0
    %v1215 = vadd.f32 %v908, %v1214
    %v1216 = vpop.f32.mrb[0].mxu0
    %v1217 = vadd.f32 %v904, %v1216
    %v1218 = vpop.f32.mrb[0].mxu0
    %v1219 = vadd.f32 %v908, %v1218
    %1220 = vdwg.mxu0
    %v1221 = vmax.f32 %v1083, 0.0
    %v1222 = vmax.f32 %v1085, 0.0
    %v1223 = vmax.f32 %v1087, 0.0
    %v1224 = vmax.f32 %v1089, 0.0
    %v1225 = vmax.f32 %v1093, 0.0
    %v1226 = vmax.f32 %v1095, 0.0
    %v1227 = vmax.f32 %v1097, 0.0
    %v1228 = vmax.f32 %v1099, 0.0
    %v1229 = vmax.f32 %v1103, 0.0
    %v1230 = vmax.f32 %v1105, 0.0
    %v1231 = vmax.f32 %v1107, 0.0
    %v1232 = vmax.f32 %v1109, 0.0
    %v1233 = vmax.f32 %v1113, 0.0
    %v1234 = vmax.f32 %v1115, 0.0
    %v1235 = vmax.f32 %v1117, 0.0
    %v1236 = vmax.f32 %v1119, 0.0
    %v1237 = vmax.f32 %v1123, 0.0
    %v1238 = vmax.f32 %v1125, 0.0
    %v1239 = vmax.f32 %v1127, 0.0
    %v1240 = vmax.f32 %v1129, 0.0
    %v1241 = vmax.f32 %v1133, 0.0
    %v1242 = vmax.f32 %v1135, 0.0
    %v1243 = vmax.f32 %v1137, 0.0
    %v1244 = vmax.f32 %v1139, 0.0
    %v1245 = vmax.f32 %v1143, 0.0
    %v1246 = vmax.f32 %v1145, 0.0
    %v1247 = vmax.f32 %v1147, 0.0
    %v1248 = vmax.f32 %v1149, 0.0
    %v1249 = vmax.f32 %v1153, 0.0
    %v1250 = vmax.f32 %v1155, 0.0
    %v1251 = vmax.f32 %v1157, 0.0
    %v1252 = vmax.f32 %v1159, 0.0
    %v1253 = vmax.f32 %v1163, 0.0
    %v1254 = vmax.f32 %v1165, 0.0
    %v1255 = vmax.f32 %v1167, 0.0
    %v1256 = vmax.f32 %v1169, 0.0
    %v1257 = vmax.f32 %v1173, 0.0
    %v1258 = vmax.f32 %v1175, 0.0
    %v1259 = vmax.f32 %v1177, 0.0
    %v1260 = vmax.f32 %v1179, 0.0
    %v1261 = vmax.f32 %v1183, 0.0
    %v1262 = vmax.f32 %v1185, 0.0
    %v1263 = vmax.f32 %v1187, 0.0
    %v1264 = vmax.f32 %v1189, 0.0
    %v1265 = vmax.f32 %v1193, 0.0
    %v1266 = vmax.f32 %v1195, 0.0
    %v1267 = vmax.f32 %v1197, 0.0
    %v1268 = vmax.f32 %v1199, 0.0
    %v1269 = vmax.f32 %v1203, 0.0
    %v1270 = vmax.f32 %v1205, 0.0
    %v1271 = vmax.f32 %v1207, 0.0
    %v1272 = vmax.f32 %v1209, 0.0
    %v1273 = vmax.f32 %v1213, 0.0
    %v1274 = vmax.f32 %v1215, 0.0
    %v1275 = vmax.f32 %v1217, 0.0
    %v1276 = vmax.f32 %v1219, 0.0
    %v1277 = vpack.c.bf16 %v1223, %v1221
    %v1278 = vpack.c.bf16 %v1224, %v1222
    %v1279 = vpack.c.bf16 %v1227, %v1225
    %v1280 = vpack.c.bf16 %v1228, %v1226
    %v1281 = vpack.c.bf16 %v1231, %v1229
    %v1282 = vpack.c.bf16 %v1232, %v1230
    %v1283 = vpack.c.bf16 %v1235, %v1233
    %v1284 = vpack.c.bf16 %v1236, %v1234
    %v1285 = vpack.c.bf16 %v1239, %v1237
    %v1286 = vpack.c.bf16 %v1240, %v1238
    %v1287 = vpack.c.bf16 %v1243, %v1241
    %v1288 = vpack.c.bf16 %v1244, %v1242
    %v1289 = vpack.c.bf16 %v1247, %v1245
    %v1290 = vpack.c.bf16 %v1248, %v1246
    %v1291 = vpack.c.bf16 %v1251, %v1249
    %v1292 = vpack.c.bf16 %v1252, %v1250
    %v1293 = vpack.c.bf16 %v1255, %v1253
    %v1294 = vpack.c.bf16 %v1256, %v1254
    %v1295 = vpack.c.bf16 %v1259, %v1257
    %v1296 = vpack.c.bf16 %v1260, %v1258
    %v1297 = vpack.c.bf16 %v1263, %v1261
    %v1298 = vpack.c.bf16 %v1264, %v1262
    %v1299 = vpack.c.bf16 %v1267, %v1265
    %v1300 = vpack.c.bf16 %v1268, %v1266
    %v1301 = vpack.c.bf16 %v1271, %v1269
    %v1302 = vpack.c.bf16 %v1272, %v1270
    %v1303 = vpack.c.bf16 %v1275, %v1273
    %v1304 = vpack.c.bf16 %v1276, %v1274
    %v1305 = vld [vmem:[%s3] sm:$0xff]
    %v1306 = vld [vmem:[%s3 + $0x8] sm:$0xff]
    %v1307 = vld [vmem:[%s3 + $0x10] sm:$0xff]
    %v1308 = vld [vmem:[%s3 + $0x18] sm:$0xff]
    %v1309 = vld [vmem:[%s3 + $0x20] sm:$0xff]
    %v1310 = vld [vmem:[%s3 + $0x28] sm:$0xff]
    %v1311 = vld [vmem:[%s3 + $0x30] sm:$0xff]
    %v1312 = vld [vmem:[%s3 + $0x38] sm:$0xff]
    %v1313 = vld [vmem:[%s3 + $0x40] sm:$0xff]
    %v1314 = vld [vmem:[%s3 + $0x48] sm:$0xff]
    %v1315 = vld [vmem:[%s3 + $0x50] sm:$0xff]
    %v1316 = vld [vmem:[%s3 + $0x58] sm:$0xff]
    %v1317 = vld [vmem:[%s3 + $0x60] sm:$0xff]
    %v1318 = vld [vmem:[%s3 + $0x68] sm:$0xff]
    %v1333 = vunpack.c.l.b16 %v1305
    %v1334 = vunpack.c.h.b16 %v1305
    %v1335 = vunpack.c.l.b16 %v1306
    %v1336 = vunpack.c.h.b16 %v1306
    %v1337 = vunpack.c.l.b16 %v1307
    %v1338 = vunpack.c.h.b16 %v1307
    %v1339 = vunpack.c.l.b16 %v1308
    %v1340 = vunpack.c.h.b16 %v1308
    %v1341 = vunpack.c.l.b16 %v1309
    %v1342 = vunpack.c.h.b16 %v1309
    %v1343 = vunpack.c.l.b16 %v1310
    %v1344 = vunpack.c.h.b16 %v1310
    %v1345 = vunpack.c.l.b16 %v1311
    %v1346 = vunpack.c.h.b16 %v1311
    %v1347 = vunpack.c.l.b16 %v1312
    %v1348 = vunpack.c.h.b16 %v1312
    %v1349 = vunpack.c.l.b16 %v1313
    %v1350 = vunpack.c.h.b16 %v1313
    %v1351 = vunpack.c.l.b16 %v1314
    %v1352 = vunpack.c.h.b16 %v1314
    %v1353 = vunpack.c.l.b16 %v1315
    %v1354 = vunpack.c.h.b16 %v1315
    %v1355 = vunpack.c.l.b16 %v1316
    %v1356 = vunpack.c.h.b16 %v1316
    %v1357 = vunpack.c.l.b16 %v1317
    %v1358 = vunpack.c.h.b16 %v1317
    %v1359 = vunpack.c.l.b16 %v1318
    %v1360 = vunpack.c.h.b16 %v1318
    %v1361 = vpack.c.b16 %v1335, %v1333
    %v1362 = vpack.c.b16 %v1336, %v1334
    %v1363 = vpack.c.b16 %v1339, %v1337
    %v1364 = vpack.c.b16 %v1340, %v1338
    %v1365 = vpack.c.b16 %v1343, %v1341
    %v1366 = vpack.c.b16 %v1344, %v1342
    %v1367 = vpack.c.b16 %v1347, %v1345
    %v1368 = vpack.c.b16 %v1348, %v1346
    %v1369 = vpack.c.b16 %v1351, %v1349
    %v1370 = vpack.c.b16 %v1352, %v1350
    %v1371 = vpack.c.b16 %v1355, %v1353
    %v1372 = vpack.c.b16 %v1356, %v1354
    %v1373 = vpack.c.b16 %v1359, %v1357
    %v1374 = vpack.c.b16 %v1360, %v1358
    %vm1382 = vcmask 752640
    %v1384 = vsel %vm1382, %v1362, 0
    %v1387 = vsel %vm1382, %v1364, 0
    %v1390 = vsel %vm1382, %v1366, 0
    %v1393 = vsel %vm1382, %v1368, 0
    %v1396 = vsel %vm1382, %v1370, 0
    %v1399 = vsel %vm1382, %v1372, 0
    %v1402 = vsel %vm1382, %v1374, 0
    %v1405 = vsel %vm317, %v1303, 0
    %v1408 = vsel %vm317, %v1304, 0
    %1410 = vmatprep.subr.bf16.mxu0 %v1278
    %1411 = vmatpush1.bf16.msra.mxu0 %v1277
    %1412 = vmatprep.subr.bf16.mxu0 %v1280
    %1413 = vmatpush1.bf16.msra.mxu0 %v1279
    %1414 = vmatprep.subr.bf16.mxu0 %v1282
    %1415 = vmatpush1.bf16.msra.mxu0 %v1281
    %1416 = vmatprep.subr.bf16.mxu0 %v1284
    %1417 = vmatpush1.bf16.msra.mxu0 %v1283
    %1418 = vmatprep.subr.bf16.mxu0 %v1286
    %1419 = vmatpush1.bf16.msra.mxu0 %v1285
    %1420 = vmatprep.subr.bf16.mxu0 %v1288
    %1421 = vmatpush1.bf16.msra.mxu0 %v1287
    %1422 = vmatprep.subr.bf16.mxu0 %v1290
    %1423 = vmatpush1.bf16.msra.mxu0 %v1289
    %1424 = vmatprep.subr.bf16.mxu0 %v1292
    %1425 = vmatpush1.bf16.msra.mxu0 %v1291
    %1426 = vmatprep.subr.bf16.mxu0 %v1294
    %1427 = vmatpush1.bf16.msra.mxu0 %v1293
    %1428 = vmatprep.subr.bf16.mxu0 %v1296
    %1429 = vmatpush1.bf16.msra.mxu0 %v1295
    %1430 = vmatprep.subr.bf16.mxu0 %v1298
    %1431 = vmatpush1.bf16.msra.mxu0 %v1297
    %1432 = vmatprep.subr.bf16.mxu0 %v1300
    %1433 = vmatpush1.bf16.msra.mxu0 %v1299
    %1434 = vmatprep.subr.bf16.mxu0 %v1302
    %1435 = vmatpush1.bf16.msra.mxu0 %v1301
    %1436 = vmatprep.subr.bf16.mxu0 %v1408
    %1437 = vmatpush1.bf16.msra.mxu0 %v1405
    %1438 = vmatprep.subr.bf16.mxu0 0
    %1439 = vmatpush1.bf16.msra.mxu0 0
    %1440 = vmatprep.subr.bf16.mxu0 0
    %1441 = vmatpush1.bf16.msra.mxu0 0
    %1442 = vmatprep.mubr.bf16.mxu0 %v1384
    %1443 = vmatmul.mubr.bf16.gmra.mrb[0].mxu0 %v1361
    %v1444 = vpop.f32.mrb[0].mxu0
    %v1445 = vadd.f32 0.0, %v1444
    %v1446 = vpop.f32.mrb[0].mxu0
    %v1447 = vadd.f32 0.0, %v1446
    %v1448 = vpop.f32.mrb[0].mxu0
    %v1449 = vadd.f32 0.0, %v1448
    %v1450 = vpop.f32.mrb[0].mxu0
    %v1451 = vadd.f32 0.0, %v1450
    %1452 = vmatprep.mubr.bf16.mxu0 %v1387
    %1453 = vmatmul.mubr.bf16.gmra.mrb[0].mxu0 %v1363
    %v1454 = vpop.f32.mrb[0].mxu0
    %v1455 = vadd.f32 0.0, %v1454
    %v1456 = vpop.f32.mrb[0].mxu0
    %v1457 = vadd.f32 0.0, %v1456
    %v1458 = vpop.f32.mrb[0].mxu0
    %v1459 = vadd.f32 0.0, %v1458
    %v1460 = vpop.f32.mrb[0].mxu0
    %v1461 = vadd.f32 0.0, %v1460
    %1462 = vmatprep.mubr.bf16.mxu0 %v1390
    %1463 = vmatmul.mubr.bf16.gmra.mrb[0].mxu0 %v1365
    %v1464 = vpop.f32.mrb[0].mxu0
    %v1465 = vadd.f32 0.0, %v1464
    %v1466 = vpop.f32.mrb[0].mxu0
    %v1467 = vadd.f32 0.0, %v1466
    %v1468 = vpop.f32.mrb[0].mxu0
    %v1469 = vadd.f32 0.0, %v1468
    %v1470 = vpop.f32.mrb[0].mxu0
    %v1471 = vadd.f32 0.0, %v1470
    %1472 = vmatprep.mubr.bf16.mxu0 %v1393
    %1473 = vmatmul.mubr.bf16.gmra.mrb[0].mxu0 %v1367
    %v1474 = vpop.f32.mrb[0].mxu0
    %v1475 = vadd.f32 0.0, %v1474
    %v1476 = vpop.f32.mrb[0].mxu0
    %v1477 = vadd.f32 0.0, %v1476
    %v1478 = vpop.f32.mrb[0].mxu0
    %v1479 = vadd.f32 0.0, %v1478
    %v1480 = vpop.f32.mrb[0].mxu0
    %v1481 = vadd.f32 0.0, %v1480
    %1482 = vmatprep.mubr.bf16.mxu0 %v1396
    %1483 = vmatmul.mubr.bf16.gmra.mrb[0].mxu0 %v1369
    %v1484 = vpop.f32.mrb[0].mxu0
    %v1485 = vadd.f32 0.0, %v1484
    %v1486 = vpop.f32.mrb[0].mxu0
    %v1487 = vadd.f32 0.0, %v1486
    %v1488 = vpop.f32.mrb[0].mxu0
    %v1489 = vadd.f32 0.0, %v1488
    %v1490 = vpop.f32.mrb[0].mxu0
    %v1491 = vadd.f32 0.0, %v1490
    %1492 = vmatprep.mubr.bf16.mxu0 %v1399
    %1493 = vmatmul.mubr.bf16.gmra.mrb[0].mxu0 %v1371
    %v1494 = vpop.f32.mrb[0].mxu0
    %v1495 = vadd.f32 0.0, %v1494
    %v1496 = vpop.f32.mrb[0].mxu0
    %v1497 = vadd.f32 0.0, %v1496
    %v1498 = vpop.f32.mrb[0].mxu0
    %v1499 = vadd.f32 0.0, %v1498
    %v1500 = vpop.f32.mrb[0].mxu0
    %v1501 = vadd.f32 0.0, %v1500
    %1502 = vmatprep.mubr.bf16.mxu0 %v1402
    %1503 = vmatmul.mubr.bf16.gmra.mrb[0].mxu0 %v1373
    %v1504 = vpop.f32.mrb[0].mxu0
    %v1505 = vadd.f32 0.0, %v1504
    %v1506 = vpop.f32.mrb[0].mxu0
    %v1507 = vadd.f32 0.0, %v1506
    %v1508 = vpop.f32.mrb[0].mxu0
    %v1509 = vadd.f32 0.0, %v1508
    %v1510 = vpop.f32.mrb[0].mxu0
    %v1511 = vadd.f32 0.0, %v1510
    %1512 = vdwg.mxu0
    %v1513 = vld [vmem:[%s4] sm:$0xff]
    %v1514 = vld [vmem:[%s4 + $0x8] sm:$0xff]
    %v1515 = vld [vmem:[%s4 + $0x10] sm:$0xff]
    %v1516 = vld [vmem:[%s4 + $0x18] sm:$0xff]
    %v1517 = vld [vmem:[%s4 + $0x20] sm:$0xff]
    %v1518 = vld [vmem:[%s4 + $0x28] sm:$0xff]
    %v1519 = vld [vmem:[%s4 + $0x30] sm:$0xff]
    %v1520 = vld [vmem:[%s4 + $0x38] sm:$0xff]
    %v1521 = vld [vmem:[%s4 + $0x40] sm:$0xff]
    %v1522 = vld [vmem:[%s4 + $0x48] sm:$0xff]
    %v1523 = vld [vmem:[%s4 + $0x50] sm:$0xff]
    %v1524 = vld [vmem:[%s4 + $0x58] sm:$0xff]
    %v1525 = vld [vmem:[%s4 + $0x60] sm:$0xff]
    %v1526 = vld [vmem:[%s4 + $0x68] sm:$0xff]
    %v1541 = vunpack.c.l.b16 %v1513
    %v1542 = vunpack.c.h.b16 %v1513
    %v1543 = vunpack.c.l.b16 %v1514
    %v1544 = vunpack.c.h.b16 %v1514
    %v1545 = vunpack.c.l.b16 %v1515
    %v1546 = vunpack.c.h.b16 %v1515
    %v1547 = vunpack.c.l.b16 %v1516
    %v1548 = vunpack.c.h.b16 %v1516
    %v1549 = vunpack.c.l.b16 %v1517
    %v1550 = vunpack.c.h.b16 %v1517
    %v1551 = vunpack.c.l.b16 %v1518
    %v1552 = vunpack.c.h.b16 %v1518
    %v1553 = vunpack.c.l.b16 %v1519
    %v1554 = vunpack.c.h.b16 %v1519
    %v1555 = vunpack.c.l.b16 %v1520
    %v1556 = vunpack.c.h.b16 %v1520
    %v1557 = vunpack.c.l.b16 %v1521
    %v1558 = vunpack.c.h.b16 %v1521
    %v1559 = vunpack.c.l.b16 %v1522
    %v1560 = vunpack.c.h.b16 %v1522
    %v1561 = vunpack.c.l.b16 %v1523
    %v1562 = vunpack.c.h.b16 %v1523
    %v1563 = vunpack.c.l.b16 %v1524
    %v1564 = vunpack.c.h.b16 %v1524
    %v1565 = vunpack.c.l.b16 %v1525
    %v1566 = vunpack.c.h.b16 %v1525
    %v1567 = vunpack.c.l.b16 %v1526
    %v1568 = vunpack.c.h.b16 %v1526
    %v1569 = vpack.c.b16 %v1543, %v1541
    %v1570 = vpack.c.b16 %v1544, %v1542
    %v1571 = vpack.c.b16 %v1547, %v1545
    %v1572 = vpack.c.b16 %v1548, %v1546
    %v1573 = vpack.c.b16 %v1551, %v1549
    %v1574 = vpack.c.b16 %v1552, %v1550
    %v1575 = vpack.c.b16 %v1555, %v1553
    %v1576 = vpack.c.b16 %v1556, %v1554
    %v1577 = vpack.c.b16 %v1559, %v1557
    %v1578 = vpack.c.b16 %v1560, %v1558
    %v1579 = vpack.c.b16 %v1563, %v1561
    %v1580 = vpack.c.b16 %v1564, %v1562
    %v1581 = vpack.c.b16 %v1567, %v1565
    %v1582 = vpack.c.b16 %v1568, %v1566
    %v1591 = vsel %vm1382, %v1570, 0
    %v1594 = vsel %vm1382, %v1572, 0
    %v1597 = vsel %vm1382, %v1574, 0
    %v1600 = vsel %vm1382, %v1576, 0
    %v1603 = vsel %vm1382, %v1578, 0
    %v1606 = vsel %vm1382, %v1580, 0
    %v1609 = vsel %vm1382, %v1582, 0
    %1611 = vmatprep.subr.bf16.mxu0 %v1278
    %1612 = vmatpush1.bf16.msra.mxu0 %v1277
    %1613 = vmatprep.subr.bf16.mxu0 %v1280
    %1614 = vmatpush1.bf16.msra.mxu0 %v1279
    %1615 = vmatprep.subr.bf16.mxu0 %v1282
    %1616 = vmatpush1.bf16.msra.mxu0 %v1281
    %1617 = vmatprep.subr.bf16.mxu0 %v1284
    %1618 = vmatpush1.bf16.msra.mxu0 %v1283
    %1619 = vmatprep.subr.bf16.mxu0 %v1286
    %1620 = vmatpush1.bf16.msra.mxu0 %v1285
    %1621 = vmatprep.subr.bf16.mxu0 %v1288
    %1622 = vmatpush1.bf16.msra.mxu0 %v1287
    %1623 = vmatprep.subr.bf16.mxu0 %v1290
    %1624 = vmatpush1.bf16.msra.mxu0 %v1289
    %1625 = vmatprep.subr.bf16.mxu0 %v1292
    %1626 = vmatpush1.bf16.msra.mxu0 %v1291
    %1627 = vmatprep.subr.bf16.mxu0 %v1294
    %1628 = vmatpush1.bf16.msra.mxu0 %v1293
    %1629 = vmatprep.subr.bf16.mxu0 %v1296
    %1630 = vmatpush1.bf16.msra.mxu0 %v1295
    %1631 = vmatprep.subr.bf16.mxu0 %v1298
    %1632 = vmatpush1.bf16.msra.mxu0 %v1297
    %1633 = vmatprep.subr.bf16.mxu0 %v1300
    %1634 = vmatpush1.bf16.msra.mxu0 %v1299
    %1635 = vmatprep.subr.bf16.mxu0 %v1302
    %1636 = vmatpush1.bf16.msra.mxu0 %v1301
    %1637 = vmatprep.subr.bf16.mxu0 %v1408
    %1638 = vmatpush1.bf16.msra.mxu0 %v1405
    %1639 = vmatprep.subr.bf16.mxu0 0
    %1640 = vmatpush1.bf16.msra.mxu0 0
    %1641 = vmatprep.subr.bf16.mxu0 0
    %1642 = vmatpush1.bf16.msra.mxu0 0
    %1643 = vmatprep.mubr.bf16.mxu0 %v1591
    %1644 = vmatmul.mubr.bf16.gmra.mrb[0].mxu0 %v1569
    %v1645 = vpop.f32.mrb[0].mxu0
    %v1646 = vadd.f32 0.0, %v1645
    %v1647 = vpop.f32.mrb[0].mxu0
    %v1648 = vadd.f32 0.0, %v1647
    %v1649 = vpop.f32.mrb[0].mxu0
    %v1650 = vadd.f32 0.0, %v1649
    %v1651 = vpop.f32.mrb[0].mxu0
    %v1652 = vadd.f32 0.0, %v1651
    %1653 = vmatprep.mubr.bf16.mxu0 %v1594
    %1654 = vmatmul.mubr.bf16.gmra.mrb[0].mxu0 %v1571
    %v1655 = vpop.f32.mrb[0].mxu0
    %v1656 = vadd.f32 0.0, %v1655
    %v1657 = vpop.f32.mrb[0].mxu0
    %v1658 = vadd.f32 0.0, %v1657
    %v1659 = vpop.f32.mrb[0].mxu0
    %v1660 = vadd.f32 0.0, %v1659
    %v1661 = vpop.f32.mrb[0].mxu0
    %v1662 = vadd.f32 0.0, %v1661
    %1663 = vmatprep.mubr.bf16.mxu0 %v1597
    %1664 = vmatmul.mubr.bf16.gmra.mrb[0].mxu0 %v1573
    %v1665 = vpop.f32.mrb[0].mxu0
    %v1666 = vadd.f32 0.0, %v1665
    %v1667 = vpop.f32.mrb[0].mxu0
    %v1668 = vadd.f32 0.0, %v1667
    %v1669 = vpop.f32.mrb[0].mxu0
    %v1670 = vadd.f32 0.0, %v1669
    %v1671 = vpop.f32.mrb[0].mxu0
    %v1672 = vadd.f32 0.0, %v1671
    %1673 = vmatprep.mubr.bf16.mxu0 %v1600
    %1674 = vmatmul.mubr.bf16.gmra.mrb[0].mxu0 %v1575
    %v1675 = vpop.f32.mrb[0].mxu0
    %v1676 = vadd.f32 0.0, %v1675
    %v1677 = vpop.f32.mrb[0].mxu0
    %v1678 = vadd.f32 0.0, %v1677
    %v1679 = vpop.f32.mrb[0].mxu0
    %v1680 = vadd.f32 0.0, %v1679
    %v1681 = vpop.f32.mrb[0].mxu0
    %v1682 = vadd.f32 0.0, %v1681
    %1683 = vmatprep.mubr.bf16.mxu0 %v1603
    %1684 = vmatmul.mubr.bf16.gmra.mrb[0].mxu0 %v1577
    %v1685 = vpop.f32.mrb[0].mxu0
    %v1686 = vadd.f32 0.0, %v1685
    %v1687 = vpop.f32.mrb[0].mxu0
    %v1688 = vadd.f32 0.0, %v1687
    %v1689 = vpop.f32.mrb[0].mxu0
    %v1690 = vadd.f32 0.0, %v1689
    %v1691 = vpop.f32.mrb[0].mxu0
    %v1692 = vadd.f32 0.0, %v1691
    %1693 = vmatprep.mubr.bf16.mxu0 %v1606
    %1694 = vmatmul.mubr.bf16.gmra.mrb[0].mxu0 %v1579
    %v1695 = vpop.f32.mrb[0].mxu0
    %v1696 = vadd.f32 0.0, %v1695
    %v1697 = vpop.f32.mrb[0].mxu0
    %v1698 = vadd.f32 0.0, %v1697
    %v1699 = vpop.f32.mrb[0].mxu0
    %v1700 = vadd.f32 0.0, %v1699
    %v1701 = vpop.f32.mrb[0].mxu0
    %v1702 = vadd.f32 0.0, %v1701
    %1703 = vmatprep.mubr.bf16.mxu0 %v1609
    %1704 = vmatmul.mubr.bf16.gmra.mrb[0].mxu0 %v1581
    %v1705 = vpop.f32.mrb[0].mxu0
    %v1706 = vadd.f32 0.0, %v1705
    %v1707 = vpop.f32.mrb[0].mxu0
    %v1708 = vadd.f32 0.0, %v1707
    %v1709 = vpop.f32.mrb[0].mxu0
    %v1710 = vadd.f32 0.0, %v1709
    %v1711 = vpop.f32.mrb[0].mxu0
    %v1712 = vadd.f32 0.0, %v1711
    %1713 = vdwg.mxu0
    %v1714 = vmax.f32 %v1445, %v1646
    %v1715 = vmax.f32 %v1447, %v1648
    %v1716 = vmax.f32 %v1449, %v1650
    %v1717 = vmax.f32 %v1451, %v1652
    %v1718 = vmax.f32 %v1455, %v1656
    %v1719 = vmax.f32 %v1457, %v1658
    %v1720 = vmax.f32 %v1459, %v1660
    %v1721 = vmax.f32 %v1461, %v1662
    %v1722 = vmax.f32 %v1465, %v1666
    %v1723 = vmax.f32 %v1467, %v1668
    %v1724 = vmax.f32 %v1469, %v1670
    %v1725 = vmax.f32 %v1471, %v1672
    %v1726 = vmax.f32 %v1475, %v1676
    %v1727 = vmax.f32 %v1477, %v1678
    %v1728 = vmax.f32 %v1479, %v1680
    %v1729 = vmax.f32 %v1481, %v1682
    %v1730 = vmax.f32 %v1485, %v1686
    %v1731 = vmax.f32 %v1487, %v1688
    %v1732 = vmax.f32 %v1489, %v1690
    %v1733 = vmax.f32 %v1491, %v1692
    %v1734 = vmax.f32 %v1495, %v1696
    %v1735 = vmax.f32 %v1497, %v1698
    %v1736 = vmax.f32 %v1499, %v1700
    %v1737 = vmax.f32 %v1501, %v1702
    %v1738 = vmax.f32 %v1505, %v1706
    %v1739 = vmax.f32 %v1507, %v1708
    %v1740 = vmax.f32 %v1509, %v1710
    %v1741 = vmax.f32 %v1511, %v1712
    %v1742 = vpack.c.bf16 %v1716, %v1714
    %v1743 = vpack.c.bf16 %v1717, %v1715
    %v1744 = vpack.c.bf16 %v1720, %v1718
    %v1745 = vpack.c.bf16 %v1721, %v1719
    %v1746 = vpack.c.bf16 %v1724, %v1722
    %v1747 = vpack.c.bf16 %v1725, %v1723
    %v1748 = vpack.c.bf16 %v1728, %v1726
    %v1749 = vpack.c.bf16 %v1729, %v1727
    %v1750 = vpack.c.bf16 %v1732, %v1730
    %v1751 = vpack.c.bf16 %v1733, %v1731
    %v1752 = vpack.c.bf16 %v1736, %v1734
    %v1753 = vpack.c.bf16 %v1737, %v1735
    %v1754 = vpack.c.bf16 %v1740, %v1738
    %v1755 = vpack.c.bf16 %v1741, %v1739
    %v1756 = vld [vmem:[%s5] sm:$0xf]
    %v1757 = vld [vmem:[%s5 + $0x4] sm:$0xf]
    %v1758 = vld [vmem:[%s5 + $0x8] sm:$0xf]
    %v1759 = vld [vmem:[%s5 + $0xc] sm:$0xf]
    %v1760 = vld [vmem:[%s5 + $0x10] sm:$0xf]
    %v1761 = vld [vmem:[%s5 + $0x14] sm:$0xf]
    %v1762 = vld [vmem:[%s5 + $0x18] sm:$0xf]
    %v1763 = vld [vmem:[%s5 + $0x1c] sm:$0xf]
    %v1764 = vld [vmem:[%s5 + $0x20] sm:$0xf]
    %v1765 = vld [vmem:[%s5 + $0x24] sm:$0xf]
    %v1766 = vld [vmem:[%s5 + $0x28] sm:$0xf]
    %v1767 = vld [vmem:[%s5 + $0x2c] sm:$0xf]
    %v1768 = vld [vmem:[%s5 + $0x30] sm:$0xf]
    %v1769 = vld [vmem:[%s5 + $0x34] sm:$0xf]
    %v1770 = vld [vmem:[%s5 + $0x38] sm:$0xf]
    %v1771 = vld [vmem:[%s5 + $0x3c] sm:$0xf]
    %v1772 = vld [vmem:[%s5 + $0x40] sm:$0xf]
    %v1773 = vld [vmem:[%s5 + $0x44] sm:$0xf]
    %v1774 = vld [vmem:[%s5 + $0x48] sm:$0xf]
    %v1775 = vld [vmem:[%s5 + $0x4c] sm:$0xf]
    %v1776 = vld [vmem:[%s5 + $0x50] sm:$0xf]
    %v1777 = vld [vmem:[%s5 + $0x54] sm:$0xf]
    %v1778 = vld [vmem:[%s5 + $0x58] sm:$0xf]
    %v1779 = vld [vmem:[%s5 + $0x5c] sm:$0xf]
    %v1804 = vunpack.c.l.b16 %v1756
    %v1805 = vunpack.c.l.b16 %v1757
    %v1806 = vunpack.c.l.b16 %v1758
    %v1807 = vunpack.c.l.b16 %v1759
    %v1808 = vunpack.c.l.b16 %v1760
    %v1809 = vunpack.c.l.b16 %v1761
    %v1810 = vunpack.c.l.b16 %v1762
    %v1811 = vunpack.c.l.b16 %v1763
    %v1812 = vunpack.c.l.b16 %v1764
    %v1813 = vunpack.c.l.b16 %v1765
    %v1814 = vunpack.c.l.b16 %v1766
    %v1815 = vunpack.c.l.b16 %v1767
    %v1816 = vunpack.c.l.b16 %v1768
    %v1817 = vunpack.c.l.b16 %v1769
    %v1818 = vunpack.c.l.b16 %v1770
    %v1819 = vunpack.c.l.b16 %v1771
    %v1820 = vunpack.c.l.b16 %v1772
    %v1821 = vunpack.c.l.b16 %v1773
    %v1822 = vunpack.c.l.b16 %v1774
    %v1823 = vunpack.c.l.b16 %v1775
    %v1824 = vunpack.c.l.b16 %v1776
    %v1825 = vunpack.c.l.b16 %v1777
    %v1826 = vunpack.c.l.b16 %v1778
    %v1827 = vunpack.c.l.b16 %v1779
    %v1828 = vpack.c.b16 %v1805, %v1804
    %v1829 = vpack.c.b16 %v1807, %v1806
    %v1830 = vpack.c.b16 %v1809, %v1808
    %v1831 = vpack.c.b16 %v1811, %v1810
    %v1832 = vpack.c.b16 %v1813, %v1812
    %v1833 = vpack.c.b16 %v1815, %v1814
    %v1834 = vpack.c.b16 %v1817, %v1816
    %v1835 = vpack.c.b16 %v1819, %v1818
    %v1836 = vpack.c.b16 %v1821, %v1820
    %v1837 = vpack.c.b16 %v1823, %v1822
    %v1838 = vpack.c.b16 %v1825, %v1824
    %v1839 = vpack.c.b16 %v1827, %v1826
    %vm1852 = vcmask 523264
    %v1854 = vsel %vm1852, %v1743, 0
    %v1857 = vsel %vm1852, %v1745, 0
    %v1860 = vsel %vm1852, %v1747, 0
    %v1863 = vsel %vm1852, %v1749, 0
    %v1866 = vsel %vm1852, %v1751, 0
    %v1869 = vsel %vm1852, %v1753, 0
    %v1872 = vsel %vm1852, %v1755, 0
    %1874 = vmatprep.subr.bf16.mxu0 0
    %1875 = vmatpush1.bf16.msra.mxu0 %v1828
    %1876 = vmatprep.subr.bf16.mxu0 0
    %1877 = vmatpush1.bf16.msra.mxu0 %v1829
    %1878 = vmatprep.subr.bf16.mxu0 0
    %1879 = vmatpush1.bf16.msra.mxu0 %v1830
    %1880 = vmatprep.subr.bf16.mxu0 0
    %1881 = vmatpush1.bf16.msra.mxu0 %v1831
    %1882 = vmatprep.subr.bf16.mxu0 0
    %1883 = vmatpush1.bf16.msra.mxu0 %v1832
    %1884 = vmatprep.subr.bf16.mxu0 0
    %1885 = vmatpush1.bf16.msra.mxu0 %v1833
    %1886 = vmatprep.subr.bf16.mxu0 0
    %1887 = vmatpush1.bf16.msra.mxu0 %v1834
    %1888 = vmatprep.subr.bf16.mxu0 0
    %1889 = vmatpush1.bf16.msra.mxu0 %v1835
    %1890 = vmatprep.subr.bf16.mxu0 0
    %1891 = vmatpush1.bf16.msra.mxu0 %v1836
    %1892 = vmatprep.subr.bf16.mxu0 0
    %1893 = vmatpush1.bf16.msra.mxu0 %v1837
    %1894 = vmatprep.subr.bf16.mxu0 0
    %1895 = vmatpush1.bf16.msra.mxu0 %v1838
    %1896 = vmatprep.subr.bf16.mxu0 0
    %1897 = vmatpush1.bf16.msra.mxu0 %v1839
    %1898 = vmatprep.subr.bf16.mxu0 0
    %1899 = vmatpush1.bf16.msra.mxu0 0
    %1900 = vmatprep.subr.bf16.mxu0 0
    %1901 = vmatpush1.bf16.msra.mxu0 0
    %1902 = vmatprep.subr.bf16.mxu0 0
    %1903 = vmatpush1.bf16.msra.mxu0 0
    %1904 = vmatprep.subr.bf16.mxu0 0
    %1905 = vmatpush1.bf16.msra.mxu0 0
    %1906 = vmatprep.mubr.bf16.mxu0 %v1854
    %1907 = vmatmul.mubr.bf16.gmra.mrb[0].mxu0 %v1742
    %v1908 = vpop.f32.mrb[0].mxu0
    %v1909 = vadd.f32 0.0, %v1908
    %v1910 = vpop.f32.mrb[0].mxu0
    %v1911 = vpop.f32.mrb[0].mxu0
    %v1912 = vadd.f32 0.0, %v1911
    %v1913 = vpop.f32.mrb[0].mxu0
    %1914 = vmatprep.mubr.bf16.mxu0 %v1857
    %1915 = vmatmul.mubr.bf16.gmra.mrb[0].mxu0 %v1744
    %v1916 = vpop.f32.mrb[0].mxu0
    %v1917 = vadd.f32 0.0, %v1916
    %v1918 = vpop.f32.mrb[0].mxu0
    %v1919 = vpop.f32.mrb[0].mxu0
    %v1920 = vadd.f32 0.0, %v1919
    %v1921 = vpop.f32.mrb[0].mxu0
    %1922 = vmatprep.mubr.bf16.mxu0 %v1860
    %1923 = vmatmul.mubr.bf16.gmra.mrb[0].mxu0 %v1746
    %v1924 = vpop.f32.mrb[0].mxu0
    %v1925 = vadd.f32 0.0, %v1924
    %v1926 = vpop.f32.mrb[0].mxu0
    %v1927 = vpop.f32.mrb[0].mxu0
    %v1928 = vadd.f32 0.0, %v1927
    %v1929 = vpop.f32.mrb[0].mxu0
    %1930 = vmatprep.mubr.bf16.mxu0 %v1863
    %1931 = vmatmul.mubr.bf16.gmra.mrb[0].mxu0 %v1748
    %v1932 = vpop.f32.mrb[0].mxu0
    %v1933 = vadd.f32 0.0, %v1932
    %v1934 = vpop.f32.mrb[0].mxu0
    %v1935 = vpop.f32.mrb[0].mxu0
    %v1936 = vadd.f32 0.0, %v1935
    %v1937 = vpop.f32.mrb[0].mxu0
    %1938 = vmatprep.mubr.bf16.mxu0 %v1866
    %1939 = vmatmul.mubr.bf16.gmra.mrb[0].mxu0 %v1750
    %v1940 = vpop.f32.mrb[0].mxu0
    %v1941 = vadd.f32 0.0, %v1940
    %v1942 = vpop.f32.mrb[0].mxu0
    %v1943 = vpop.f32.mrb[0].mxu0
    %v1944 = vadd.f32 0.0, %v1943
    %v1945 = vpop.f32.mrb[0].mxu0
    %1946 = vmatprep.mubr.bf16.mxu0 %v1869
    %1947 = vmatmul.mubr.bf16.gmra.mrb[0].mxu0 %v1752
    %v1948 = vpop.f32.mrb[0].mxu0
    %v1949 = vadd.f32 0.0, %v1948
    %v1950 = vpop.f32.mrb[0].mxu0
    %v1951 = vpop.f32.mrb[0].mxu0
    %v1952 = vadd.f32 0.0, %v1951
    %v1953 = vpop.f32.mrb[0].mxu0
    %1954 = vmatprep.mubr.bf16.mxu0 %v1872
    %1955 = vmatmul.mubr.bf16.gmra.mrb[0].mxu0 %v1754
    %v1956 = vpop.f32.mrb[0].mxu0
    %v1957 = vadd.f32 0.0, %v1956
    %v1958 = vpop.f32.mrb[0].mxu0
    %v1959 = vpop.f32.mrb[0].mxu0
    %v1960 = vadd.f32 0.0, %v1959
    %v1961 = vpop.f32.mrb[0].mxu0
    %1962 = vdwg.mxu0
    %v1963 = vld [vmem:[%s6] sm:$0xf]
    %v1964 = vld [vmem:[%s6 + $0x4] sm:$0xf]
    %v1965 = vld [vmem:[%s6 + $0x8] sm:$0xf]
    %v1966 = vld [vmem:[%s6 + $0xc] sm:$0xf]
    %v1967 = vld [vmem:[%s6 + $0x10] sm:$0xf]
    %v1968 = vld [vmem:[%s6 + $0x14] sm:$0xf]
    %v1969 = vld [vmem:[%s6 + $0x18] sm:$0xf]
    %v1970 = vld [vmem:[%s6 + $0x1c] sm:$0xf]
    %v1971 = vld [vmem:[%s6 + $0x20] sm:$0xf]
    %v1972 = vld [vmem:[%s6 + $0x24] sm:$0xf]
    %v1973 = vld [vmem:[%s6 + $0x28] sm:$0xf]
    %v1974 = vld [vmem:[%s6 + $0x2c] sm:$0xf]
    %v1975 = vld [vmem:[%s6 + $0x30] sm:$0xf]
    %v1976 = vld [vmem:[%s6 + $0x34] sm:$0xf]
    %v1977 = vld [vmem:[%s6 + $0x38] sm:$0xf]
    %v1978 = vld [vmem:[%s6 + $0x3c] sm:$0xf]
    %v1979 = vld [vmem:[%s6 + $0x40] sm:$0xf]
    %v1980 = vld [vmem:[%s6 + $0x44] sm:$0xf]
    %v1981 = vld [vmem:[%s6 + $0x48] sm:$0xf]
    %v1982 = vld [vmem:[%s6 + $0x4c] sm:$0xf]
    %v1983 = vld [vmem:[%s6 + $0x50] sm:$0xf]
    %v1984 = vld [vmem:[%s6 + $0x54] sm:$0xf]
    %v1985 = vld [vmem:[%s6 + $0x58] sm:$0xf]
    %v1986 = vld [vmem:[%s6 + $0x5c] sm:$0xf]
    %v2011 = vunpack.c.l.b16 %v1963
    %v2012 = vunpack.c.l.b16 %v1964
    %v2013 = vunpack.c.l.b16 %v1965
    %v2014 = vunpack.c.l.b16 %v1966
    %v2015 = vunpack.c.l.b16 %v1967
    %v2016 = vunpack.c.l.b16 %v1968
    %v2017 = vunpack.c.l.b16 %v1969
    %v2018 = vunpack.c.l.b16 %v1970
    %v2019 = vunpack.c.l.b16 %v1971
    %v2020 = vunpack.c.l.b16 %v1972
    %v2021 = vunpack.c.l.b16 %v1973
    %v2022 = vunpack.c.l.b16 %v1974
    %v2023 = vunpack.c.l.b16 %v1975
    %v2024 = vunpack.c.l.b16 %v1976
    %v2025 = vunpack.c.l.b16 %v1977
    %v2026 = vunpack.c.l.b16 %v1978
    %v2027 = vunpack.c.l.b16 %v1979
    %v2028 = vunpack.c.l.b16 %v1980
    %v2029 = vunpack.c.l.b16 %v1981
    %v2030 = vunpack.c.l.b16 %v1982
    %v2031 = vunpack.c.l.b16 %v1983
    %v2032 = vunpack.c.l.b16 %v1984
    %v2033 = vunpack.c.l.b16 %v1985
    %v2034 = vunpack.c.l.b16 %v1986
    %v2035 = vpack.c.b16 %v2012, %v2011
    %v2036 = vpack.c.b16 %v2014, %v2013
    %v2037 = vpack.c.b16 %v2016, %v2015
    %v2038 = vpack.c.b16 %v2018, %v2017
    %v2039 = vpack.c.b16 %v2020, %v2019
    %v2040 = vpack.c.b16 %v2022, %v2021
    %v2041 = vpack.c.b16 %v2024, %v2023
    %v2042 = vpack.c.b16 %v2026, %v2025
    %v2043 = vpack.c.b16 %v2028, %v2027
    %v2044 = vpack.c.b16 %v2030, %v2029
    %v2045 = vpack.c.b16 %v2032, %v2031
    %v2046 = vpack.c.b16 %v2034, %v2033
    %2059 = vmatprep.subr.bf16.mxu0 0
    %2060 = vmatpush1.bf16.msra.mxu0 %v2035
    %2061 = vmatprep.subr.bf16.mxu0 0
    %2062 = vmatpush1.bf16.msra.mxu0 %v2036
    %2063 = vmatprep.subr.bf16.mxu0 0
    %2064 = vmatpush1.bf16.msra.mxu0 %v2037
    %2065 = vmatprep.subr.bf16.mxu0 0
    %2066 = vmatpush1.bf16.msra.mxu0 %v2038
    %2067 = vmatprep.subr.bf16.mxu0 0
    %2068 = vmatpush1.bf16.msra.mxu0 %v2039
    %2069 = vmatprep.subr.bf16.mxu0 0
    %2070 = vmatpush1.bf16.msra.mxu0 %v2040
    %2071 = vmatprep.subr.bf16.mxu0 0
    %2072 = vmatpush1.bf16.msra.mxu0 %v2041
    %2073 = vmatprep.subr.bf16.mxu0 0
    %2074 = vmatpush1.bf16.msra.mxu0 %v2042
    %2075 = vmatprep.subr.bf16.mxu0 0
    %2076 = vmatpush1.bf16.msra.mxu0 %v2043
    %2077 = vmatprep.subr.bf16.mxu0 0
    %2078 = vmatpush1.bf16.msra.mxu0 %v2044
    %2079 = vmatprep.subr.bf16.mxu0 0
    %2080 = vmatpush1.bf16.msra.mxu0 %v2045
    %2081 = vmatprep.subr.bf16.mxu0 0
    %2082 = vmatpush1.bf16.msra.mxu0 %v2046
    %2083 = vmatprep.subr.bf16.mxu0 0
    %2084 = vmatpush1.bf16.msra.mxu0 0
    %2085 = vmatprep.subr.bf16.mxu0 0
    %2086 = vmatpush1.bf16.msra.mxu0 0
    %2087 = vmatprep.subr.bf16.mxu0 0
    %2088 = vmatpush1.bf16.msra.mxu0 0
    %2089 = vmatprep.subr.bf16.mxu0 0
    %2090 = vmatpush1.bf16.msra.mxu0 0
    %2091 = vmatprep.mubr.bf16.mxu0 %v1854
    %2092 = vmatmul.mubr.bf16.gmra.mrb[0].mxu0 %v1742
    %v2093 = vpop.f32.mrb[0].mxu0
    %v2094 = vadd.f32 0.0, %v2093
    %v2095 = vpop.f32.mrb[0].mxu0
    %v2096 = vpop.f32.mrb[0].mxu0
    %v2097 = vadd.f32 0.0, %v2096
    %v2098 = vpop.f32.mrb[0].mxu0
    %2099 = vmatprep.mubr.bf16.mxu0 %v1857
    %2100 = vmatmul.mubr.bf16.gmra.mrb[0].mxu0 %v1744
    %v2101 = vpop.f32.mrb[0].mxu0
    %v2102 = vadd.f32 0.0, %v2101
    %v2103 = vpop.f32.mrb[0].mxu0
    %v2104 = vpop.f32.mrb[0].mxu0
    %v2105 = vadd.f32 0.0, %v2104
    %v2106 = vpop.f32.mrb[0].mxu0
    %2107 = vmatprep.mubr.bf16.mxu0 %v1860
    %2108 = vmatmul.mubr.bf16.gmra.mrb[0].mxu0 %v1746
    %v2109 = vpop.f32.mrb[0].mxu0
    %v2110 = vadd.f32 0.0, %v2109
    %v2111 = vpop.f32.mrb[0].mxu0
    %v2112 = vpop.f32.mrb[0].mxu0
    %v2113 = vadd.f32 0.0, %v2112
    %v2114 = vpop.f32.mrb[0].mxu0
    %2115 = vmatprep.mubr.bf16.mxu0 %v1863
    %2116 = vmatmul.mubr.bf16.gmra.mrb[0].mxu0 %v1748
    %v2117 = vpop.f32.mrb[0].mxu0
    %v2118 = vadd.f32 0.0, %v2117
    %v2119 = vpop.f32.mrb[0].mxu0
    %v2120 = vpop.f32.mrb[0].mxu0
    %v2121 = vadd.f32 0.0, %v2120
    %v2122 = vpop.f32.mrb[0].mxu0
    %2123 = vmatprep.mubr.bf16.mxu0 %v1866
    %2124 = vmatmul.mubr.bf16.gmra.mrb[0].mxu0 %v1750
    %v2125 = vpop.f32.mrb[0].mxu0
    %v2126 = vadd.f32 0.0, %v2125
    %v2127 = vpop.f32.mrb[0].mxu0
    %v2128 = vpop.f32.mrb[0].mxu0
    %v2129 = vadd.f32 0.0, %v2128
    %v2130 = vpop.f32.mrb[0].mxu0
    %2131 = vmatprep.mubr.bf16.mxu0 %v1869
    %2132 = vmatmul.mubr.bf16.gmra.mrb[0].mxu0 %v1752
    %v2133 = vpop.f32.mrb[0].mxu0
    %v2134 = vadd.f32 0.0, %v2133
    %v2135 = vpop.f32.mrb[0].mxu0
    %v2136 = vpop.f32.mrb[0].mxu0
    %v2137 = vadd.f32 0.0, %v2136
    %v2138 = vpop.f32.mrb[0].mxu0
    %2139 = vmatprep.mubr.bf16.mxu0 %v1872
    %2140 = vmatmul.mubr.bf16.gmra.mrb[0].mxu0 %v1754
    %v2141 = vpop.f32.mrb[0].mxu0
    %v2142 = vadd.f32 0.0, %v2141
    %v2143 = vpop.f32.mrb[0].mxu0
    %v2144 = vpop.f32.mrb[0].mxu0
    %v2145 = vadd.f32 0.0, %v2144
    %v2146 = vpop.f32.mrb[0].mxu0
    %2147 = vdwg.mxu0
    %v2148 = vmax.f32 %v1909, %v2094
    %v2149 = vmax.f32 %v1912, %v2097
    %v2150 = vmax.f32 %v1917, %v2102
    %v2151 = vmax.f32 %v1920, %v2105
    %v2152 = vmax.f32 %v1925, %v2110
    %v2153 = vmax.f32 %v1928, %v2113
    %v2154 = vmax.f32 %v1933, %v2118
    %v2155 = vmax.f32 %v1936, %v2121
    %v2156 = vmax.f32 %v1941, %v2126
    %v2157 = vmax.f32 %v1944, %v2129
    %v2158 = vmax.f32 %v1949, %v2134
    %v2159 = vmax.f32 %v1952, %v2137
    %v2160 = vmax.f32 %v1957, %v2142
    %v2161 = vmax.f32 %v1960, %v2145
    %v2176 = vrot.slane %v2148, 1
    %v2177 = vrot.slane %v2149, 1
    %v2178 = vsel %vm177, %v2176, %v2177
    %v2179 = vrot.slane %v2150, 1
    %v2180 = vsel %vm177, %v2177, %v2179
    %v2181 = vrot.slane %v2151, 1
    %v2182 = vsel %vm177, %v2179, %v2181
    %v2183 = vrot.slane %v2152, 1
    %v2184 = vsel %vm177, %v2181, %v2183
    %v2185 = vrot.slane %v2153, 1
    %v2186 = vsel %vm177, %v2183, %v2185
    %v2187 = vrot.slane %v2154, 1
    %v2188 = vsel %vm177, %v2185, %v2187
    %v2189 = vrot.slane %v2155, 1
    %v2190 = vsel %vm177, %v2187, %v2189
    %v2191 = vrot.slane %v2156, 1
    %v2192 = vsel %vm177, %v2189, %v2191
    %v2193 = vrot.slane %v2157, 1
    %v2194 = vsel %vm177, %v2191, %v2193
    %v2195 = vrot.slane %v2158, 1
    %v2196 = vsel %vm177, %v2193, %v2195
    %v2197 = vrot.slane %v2159, 1
    %v2198 = vsel %vm177, %v2195, %v2197
    %v2199 = vrot.slane %v2160, 1
    %v2200 = vsel %vm177, %v2197, %v2199
    %v2201 = vrot.slane %v2161, 1
    %v2202 = vsel %vm177, %v2199, %v2201
    %2203 = vrot.lane.b32.xlu0 %v2178, 96
    %v2204 = vpop.permute.xlu0 %2203
    %2205 = vrot.lane.b32.xlu0 %v2180, 96
    %v2206 = vpop.permute.xlu0 %2205
    %2207 = vrot.lane.b32.xlu0 %v2182, 96
    %v2208 = vpop.permute.xlu0 %2207
    %2209 = vrot.lane.b32.xlu0 %v2184, 96
    %v2210 = vpop.permute.xlu0 %2209
    %2211 = vrot.lane.b32.xlu0 %v2186, 96
    %v2212 = vpop.permute.xlu0 %2211
    %2213 = vrot.lane.b32.xlu0 %v2188, 96
    %v2214 = vpop.permute.xlu0 %2213
    %2215 = vrot.lane.b32.xlu0 %v2190, 96
    %v2216 = vpop.permute.xlu0 %2215
    %2217 = vrot.lane.b32.xlu0 %v2192, 96
    %v2218 = vpop.permute.xlu0 %2217
    %2219 = vrot.lane.b32.xlu0 %v2194, 96
    %v2220 = vpop.permute.xlu0 %2219
    %2221 = vrot.lane.b32.xlu0 %v2196, 96
    %v2222 = vpop.permute.xlu0 %2221
    %2223 = vrot.lane.b32.xlu0 %v2198, 96
    %v2224 = vpop.permute.xlu0 %2223
    %2225 = vrot.lane.b32.xlu0 %v2200, 96
    %v2226 = vpop.permute.xlu0 %2225
    %2227 = vrot.lane.b32.xlu0 %v2202, 96
    %v2228 = vpop.permute.xlu0 %2227
    %2229 = vrot.lane.b32.xlu0 %v2201, 96
    %v2230 = vpop.permute.xlu0 %2229
    %v2245 = vrot.slane %v2148, 2
    %v2246 = vrot.slane %v2149, 2
    %v2247 = vsel %vm317, %v2245, %v2246
    %v2248 = vrot.slane %v2150, 2
    %v2249 = vsel %vm317, %v2246, %v2248
    %v2250 = vrot.slane %v2151, 2
    %v2251 = vsel %vm317, %v2248, %v2250
    %v2252 = vrot.slane %v2152, 2
    %v2253 = vsel %vm317, %v2250, %v2252
    %v2254 = vrot.slane %v2153, 2
    %v2255 = vsel %vm317, %v2252, %v2254
    %v2256 = vrot.slane %v2154, 2
    %v2257 = vsel %vm317, %v2254, %v2256
    %v2258 = vrot.slane %v2155, 2
    %v2259 = vsel %vm317, %v2256, %v2258
    %v2260 = vrot.slane %v2156, 2
    %v2261 = vsel %vm317, %v2258, %v2260
    %v2262 = vrot.slane %v2157, 2
    %v2263 = vsel %vm317, %v2260, %v2262
    %v2264 = vrot.slane %v2158, 2
    %v2265 = vsel %vm317, %v2262, %v2264
    %v2266 = vrot.slane %v2159, 2
    %v2267 = vsel %vm317, %v2264, %v2266
    %v2268 = vrot.slane %v2160, 2
    %v2269 = vsel %vm317, %v2266, %v2268
    %v2270 = vrot.slane %v2161, 2
    %v2271 = vsel %vm317, %v2268, %v2270
    %2272 = vrot.lane.b32.xlu0 %v2247, 64
    %v2273 = vpop.permute.xlu0 %2272
    %2274 = vrot.lane.b32.xlu0 %v2249, 64
    %v2275 = vpop.permute.xlu0 %2274
    %2276 = vrot.lane.b32.xlu0 %v2251, 64
    %v2277 = vpop.permute.xlu0 %2276
    %2278 = vrot.lane.b32.xlu0 %v2253, 64
    %v2279 = vpop.permute.xlu0 %2278
    %2280 = vrot.lane.b32.xlu0 %v2255, 64
    %v2281 = vpop.permute.xlu0 %2280
    %2282 = vrot.lane.b32.xlu0 %v2257, 64
    %v2283 = vpop.permute.xlu0 %2282
    %2284 = vrot.lane.b32.xlu0 %v2259, 64
    %v2285 = vpop.permute.xlu0 %2284
    %2286 = vrot.lane.b32.xlu0 %v2261, 64
    %v2287 = vpop.permute.xlu0 %2286
    %2288 = vrot.lane.b32.xlu0 %v2263, 64
    %v2289 = vpop.permute.xlu0 %2288
    %2290 = vrot.lane.b32.xlu0 %v2265, 64
    %v2291 = vpop.permute.xlu0 %2290
    %2292 = vrot.lane.b32.xlu0 %v2267, 64
    %v2293 = vpop.permute.xlu0 %2292
    %2294 = vrot.lane.b32.xlu0 %v2269, 64
    %v2295 = vpop.permute.xlu0 %2294
    %2296 = vrot.lane.b32.xlu0 %v2271, 64
    %v2297 = vpop.permute.xlu0 %2296
    %2298 = vrot.lane.b32.xlu0 %v2270, 64
    %v2299 = vpop.permute.xlu0 %2298
    %v2314 = vrot.slane %v2148, 3
    %v2315 = vrot.slane %v2149, 3
    %v2316 = vsel %vm457, %v2314, %v2315
    %v2317 = vrot.slane %v2150, 3
    %v2318 = vsel %vm457, %v2315, %v2317
    %v2319 = vrot.slane %v2151, 3
    %v2320 = vsel %vm457, %v2317, %v2319
    %v2321 = vrot.slane %v2152, 3
    %v2322 = vsel %vm457, %v2319, %v2321
    %v2323 = vrot.slane %v2153, 3
    %v2324 = vsel %vm457, %v2321, %v2323
    %v2325 = vrot.slane %v2154, 3
    %v2326 = vsel %vm457, %v2323, %v2325
    %v2327 = vrot.slane %v2155, 3
    %v2328 = vsel %vm457, %v2325, %v2327
    %v2329 = vrot.slane %v2156, 3
    %v2330 = vsel %vm457, %v2327, %v2329
    %v2331 = vrot.slane %v2157, 3
    %v2332 = vsel %vm457, %v2329, %v2331
    %v2333 = vrot.slane %v2158, 3
    %v2334 = vsel %vm457, %v2331, %v2333
    %v2335 = vrot.slane %v2159, 3
    %v2336 = vsel %vm457, %v2333, %v2335
    %v2337 = vrot.slane %v2160, 3
    %v2338 = vsel %vm457, %v2335, %v2337
    %v2339 = vrot.slane %v2161, 3
    %v2340 = vsel %vm457, %v2337, %v2339
    %2341 = vrot.lane.b32.xlu0 %v2316, 32
    %v2342 = vpop.permute.xlu0 %2341
    %2343 = vrot.lane.b32.xlu0 %v2318, 32
    %v2344 = vpop.permute.xlu0 %2343
    %2345 = vrot.lane.b32.xlu0 %v2320, 32
    %v2346 = vpop.permute.xlu0 %2345
    %2347 = vrot.lane.b32.xlu0 %v2322, 32
    %v2348 = vpop.permute.xlu0 %2347
    %2349 = vrot.lane.b32.xlu0 %v2324, 32
    %v2350 = vpop.permute.xlu0 %2349
    %2351 = vrot.lane.b32.xlu0 %v2326, 32
    %v2352 = vpop.permute.xlu0 %2351
    %2353 = vrot.lane.b32.xlu0 %v2328, 32
    %v2354 = vpop.permute.xlu0 %2353
    %2355 = vrot.lane.b32.xlu0 %v2330, 32
    %v2356 = vpop.permute.xlu0 %2355
    %2357 = vrot.lane.b32.xlu0 %v2332, 32
    %v2358 = vpop.permute.xlu0 %2357
    %2359 = vrot.lane.b32.xlu0 %v2334, 32
    %v2360 = vpop.permute.xlu0 %2359
    %2361 = vrot.lane.b32.xlu0 %v2336, 32
    %v2362 = vpop.permute.xlu0 %2361
    %2363 = vrot.lane.b32.xlu0 %v2338, 32
    %v2364 = vpop.permute.xlu0 %2363
    %2365 = vrot.lane.b32.xlu0 %v2340, 32
    %v2366 = vpop.permute.xlu0 %2365
    %2367 = vrot.lane.b32.xlu0 %v2339, 32
    %v2368 = vpop.permute.xlu0 %2367
    %v2383 = vrot.slane %v2148, 4
    %v2384 = vrot.slane %v2149, 4
    %v2385 = vsel %vm597, %v2383, %v2384
    %v2386 = vrot.slane %v2150, 4
    %v2387 = vsel %vm597, %v2384, %v2386
    %v2388 = vrot.slane %v2151, 4
    %v2389 = vsel %vm597, %v2386, %v2388
    %v2390 = vrot.slane %v2152, 4
    %v2391 = vsel %vm597, %v2388, %v2390
    %v2392 = vrot.slane %v2153, 4
    %v2393 = vsel %vm597, %v2390, %v2392
    %v2394 = vrot.slane %v2154, 4
    %v2395 = vsel %vm597, %v2392, %v2394
    %v2396 = vrot.slane %v2155, 4
    %v2397 = vsel %vm597, %v2394, %v2396
    %v2398 = vrot.slane %v2156, 4
    %v2399 = vsel %vm597, %v2396, %v2398
    %v2400 = vrot.slane %v2157, 4
    %v2401 = vsel %vm597, %v2398, %v2400
    %v2402 = vrot.slane %v2158, 4
    %v2403 = vsel %vm597, %v2400, %v2402
    %v2404 = vrot.slane %v2159, 4
    %v2405 = vsel %vm597, %v2402, %v2404
    %v2406 = vrot.slane %v2160, 4
    %v2407 = vsel %vm597, %v2404, %v2406
    %v2408 = vrot.slane %v2161, 4
    %v2409 = vsel %vm597, %v2406, %v2408
    %vm2424 = vcmask 785408
    %v2425 = vsel %vm2424, %v2148, %v2204
    %v2426 = vsel %vm2424, %v2149, %v2206
    %v2427 = vsel %vm2424, %v2150, %v2208
    %v2428 = vsel %vm2424, %v2151, %v2210
    %v2429 = vsel %vm2424, %v2152, %v2212
    %v2430 = vsel %vm2424, %v2153, %v2214
    %v2431 = vsel %vm2424, %v2154, %v2216
    %v2432 = vsel %vm2424, %v2155, %v2218
    %v2433 = vsel %vm2424, %v2156, %v2220
    %v2434 = vsel %vm2424, %v2157, %v2222
    %v2435 = vsel %vm2424, %v2158, %v2224
    %v2436 = vsel %vm2424, %v2159, %v2226
    %v2437 = vsel %vm2424, %v2160, %v2228
    %v2438 = vsel %vm2424, %v2161, %v2230
    %v2439 = vsel %vm1852, %v2204, %v2273
    %v2440 = vsel %vm1852, %v2206, %v2275
    %v2441 = vsel %vm1852, %v2208, %v2277
    %v2442 = vsel %vm1852, %v2210, %v2279
    %v2443 = vsel %vm1852, %v2212, %v2281
    %v2444 = vsel %vm1852, %v2214, %v2283
    %v2445 = vsel %vm1852, %v2216, %v2285
    %v2446 = vsel %vm1852, %v2218, %v2287
    %v2447 = vsel %vm1852, %v2220, %v2289
    %v2448 = vsel %vm1852, %v2222, %v2291
    %v2449 = vsel %vm1852, %v2224, %v2293
    %v2450 = vsel %vm1852, %v2226, %v2295
    %v2451 = vsel %vm1852, %v2228, %v2297
    %v2452 = vsel %vm1852, %v2230, %v2299
    %vm2453 = vcmask 261120
    %v2454 = vsel %vm2453, %v2273, %v2342
    %v2455 = vsel %vm2453, %v2275, %v2344
    %v2456 = vsel %vm2453, %v2277, %v2346
    %v2457 = vsel %vm2453, %v2279, %v2348
    %v2458 = vsel %vm2453, %v2281, %v2350
    %v2459 = vsel %vm2453, %v2283, %v2352
    %v2460 = vsel %vm2453, %v2285, %v2354
    %v2461 = vsel %vm2453, %v2287, %v2356
    %v2462 = vsel %vm2453, %v2289, %v2358
    %v2463 = vsel %vm2453, %v2291, %v2360
    %v2464 = vsel %vm2453, %v2293, %v2362
    %v2465 = vsel %vm2453, %v2295, %v2364
    %v2466 = vsel %vm2453, %v2297, %v2366
    %v2467 = vsel %vm2453, %v2299, %v2368
    %v2468 = vpack.c.bf16 %v2426, %v2425
    %v2469 = vpack.c.bf16 %v2440, %v2439
    %v2470 = vpack.c.bf16 %v2455, %v2454
    %v2471 = vpack.c.bf16 %v2387, %v2385
    %v2472 = vpack.c.bf16 %v2428, %v2427
    %v2473 = vpack.c.bf16 %v2442, %v2441
    %v2474 = vpack.c.bf16 %v2457, %v2456
    %v2475 = vpack.c.bf16 %v2391, %v2389
    %v2476 = vpack.c.bf16 %v2430, %v2429
    %v2477 = vpack.c.bf16 %v2444, %v2443
    %v2478 = vpack.c.bf16 %v2459, %v2458
    %v2479 = vpack.c.bf16 %v2395, %v2393
    %v2480 = vpack.c.bf16 %v2432, %v2431
    %v2481 = vpack.c.bf16 %v2446, %v2445
    %v2482 = vpack.c.bf16 %v2461, %v2460
    %v2483 = vpack.c.bf16 %v2399, %v2397
    %v2484 = vpack.c.bf16 %v2434, %v2433
    %v2485 = vpack.c.bf16 %v2448, %v2447
    %v2486 = vpack.c.bf16 %v2463, %v2462
    %v2487 = vpack.c.bf16 %v2403, %v2401
    %v2488 = vpack.c.bf16 %v2436, %v2435
    %v2489 = vpack.c.bf16 %v2450, %v2449
    %v2490 = vpack.c.bf16 %v2465, %v2464
    %v2491 = vpack.c.bf16 %v2407, %v2405
    %v2492 = vpack.c.bf16 %v2438, %v2437
    %v2493 = vpack.c.bf16 %v2452, %v2451
    %v2494 = vpack.c.bf16 %v2467, %v2466
    %v2495 = vpack.c.bf16 %v2408, %v2409
    %v2496 = vld [vmem:[%s7] sm:$0xf]
    %v2497 = vld [vmem:[%s7 + $0x4] sm:$0xf]
    %v2498 = vld [vmem:[%s7 + $0x8] sm:$0xf]
    %v2499 = vld [vmem:[%s7 + $0xc] sm:$0xf]
    %v2500 = vld [vmem:[%s7 + $0x10] sm:$0xf]
    %v2501 = vld [vmem:[%s7 + $0x14] sm:$0xf]
    %v2502 = vld [vmem:[%s7 + $0x18] sm:$0xf]
    %v2503 = vld [vmem:[%s7 + $0x1c] sm:$0xf]
    %v2504 = vld [vmem:[%s7 + $0x20] sm:$0xf]
    %v2505 = vld [vmem:[%s7 + $0x24] sm:$0xf]
    %v2506 = vld [vmem:[%s7 + $0x28] sm:$0xf]
    %v2507 = vld [vmem:[%s7 + $0x2c] sm:$0xf]
    %v2508 = vld [vmem:[%s7 + $0x30] sm:$0xf]
    %v2509 = vld [vmem:[%s7 + $0x34] sm:$0xf]
    %v2510 = vld [vmem:[%s7 + $0x38] sm:$0xf]
    %v2511 = vld [vmem:[%s7 + $0x3c] sm:$0xf]
    %v2512 = vld [vmem:[%s7 + $0x40] sm:$0xf]
    %v2513 = vld [vmem:[%s7 + $0x44] sm:$0xf]
    %v2514 = vld [vmem:[%s7 + $0x48] sm:$0xf]
    %v2515 = vld [vmem:[%s7 + $0x4c] sm:$0xf]
    %v2516 = vld [vmem:[%s7 + $0x50] sm:$0xf]
    %v2517 = vld [vmem:[%s7 + $0x54] sm:$0xf]
    %v2518 = vld [vmem:[%s7 + $0x58] sm:$0xf]
    %v2519 = vld [vmem:[%s7 + $0x5c] sm:$0xf]
    %v2520 = vld [vmem:[%s7 + $0x60] sm:$0xf]
    %v2521 = vld [vmem:[%s7 + $0x64] sm:$0xf]
    %v2522 = vld [vmem:[%s7 + $0x68] sm:$0xf]
    %v2523 = vld [vmem:[%s7 + $0x6c] sm:$0xf]
    %v2524 = vld [vmem:[%s7 + $0x70] sm:$0xf]
    %v2525 = vld [vmem:[%s7 + $0x74] sm:$0xf]
    %v2526 = vld [vmem:[%s7 + $0x78] sm:$0xf]
    %v2527 = vld [vmem:[%s7 + $0x7c] sm:$0xf]
    %v2528 = vld [vmem:[%s7 + $0x80] sm:$0xf]
    %v2529 = vld [vmem:[%s7 + $0x84] sm:$0xf]
    %v2530 = vld [vmem:[%s7 + $0x88] sm:$0xf]
    %v2531 = vld [vmem:[%s7 + $0x8c] sm:$0xf]
    %v2532 = vld [vmem:[%s7 + $0x90] sm:$0xf]
    %v2533 = vld [vmem:[%s7 + $0x94] sm:$0xf]
    %v2534 = vld [vmem:[%s7 + $0x98] sm:$0xf]
    %v2535 = vld [vmem:[%s7 + $0x9c] sm:$0xf]
    %v2536 = vld [vmem:[%s7 + $0xa0] sm:$0xf]
    %v2537 = vld [vmem:[%s7 + $0xa4] sm:$0xf]
    %v2538 = vld [vmem:[%s7 + $0xa8] sm:$0xf]
    %v2539 = vld [vmem:[%s7 + $0xac] sm:$0xf]
    %v2540 = vld [vmem:[%s7 + $0xb0] sm:$0xf]
    %v2541 = vld [vmem:[%s7 + $0xb4] sm:$0xf]
    %v2542 = vld [vmem:[%s7 + $0xb8] sm:$0xf]
    %v2543 = vld [vmem:[%s7 + $0xbc] sm:$0xf]
    %v2544 = vld [vmem:[%s7 + $0xc0] sm:$0xf]
    %v2545 = vld [vmem:[%s7 + $0xc4] sm:$0xf]
    %v2546 = vld [vmem:[%s7 + $0xc8] sm:$0xf]
    %v2547 = vld [vmem:[%s7 + $0xcc] sm:$0xf]
    %v2548 = vld [vmem:[%s7 + $0xd0] sm:$0xf]
    %v2549 = vld [vmem:[%s7 + $0xd4] sm:$0xf]
    %v2550 = vld [vmem:[%s7 + $0xd8] sm:$0xf]
    %v2551 = vld [vmem:[%s7 + $0xdc] sm:$0xf]
    %v2552 = vld [vmem:[%s7 + $0xe0] sm:$0xf]
    %v2553 = vld [vmem:[%s7 + $0xe4] sm:$0xf]
    %v2554 = vld [vmem:[%s7 + $0xe8] sm:$0xf]
    %v2555 = vld [vmem:[%s7 + $0xec] sm:$0xf]
    %v2556 = vld [vmem:[%s8] sm:$0x1]
    %v2558 = vlaneseq
    %v2559 = vshrl.u32 %v2558, 7
    %v2560 = vsub.s32 0, %v2559
    %v2561 = vrot.slane %v2556, %v2560
    %v2623 = vunpack.c.l.b16 %v2496
    %v2624 = vunpack.c.l.b16 %v2497
    %v2625 = vunpack.c.l.b16 %v2498
    %v2626 = vunpack.c.l.b16 %v2499
    %v2627 = vunpack.c.l.b16 %v2500
    %v2628 = vunpack.c.l.b16 %v2501
    %v2629 = vunpack.c.l.b16 %v2502
    %v2630 = vunpack.c.l.b16 %v2503
    %v2631 = vunpack.c.l.b16 %v2504
    %v2632 = vunpack.c.l.b16 %v2505
    %v2633 = vunpack.c.l.b16 %v2506
    %v2634 = vunpack.c.l.b16 %v2507
    %v2635 = vunpack.c.l.b16 %v2508
    %v2636 = vunpack.c.l.b16 %v2509
    %v2637 = vunpack.c.l.b16 %v2510
    %v2638 = vunpack.c.l.b16 %v2511
    %v2639 = vunpack.c.l.b16 %v2512
    %v2640 = vunpack.c.l.b16 %v2513
    %v2641 = vunpack.c.l.b16 %v2514
    %v2642 = vunpack.c.l.b16 %v2515
    %v2643 = vunpack.c.l.b16 %v2516
    %v2644 = vunpack.c.l.b16 %v2517
    %v2645 = vunpack.c.l.b16 %v2518
    %v2646 = vunpack.c.l.b16 %v2519
    %v2647 = vunpack.c.l.b16 %v2520
    %v2648 = vunpack.c.l.b16 %v2521
    %v2649 = vunpack.c.l.b16 %v2522
    %v2650 = vunpack.c.l.b16 %v2523
    %v2651 = vunpack.c.l.b16 %v2524
    %v2652 = vunpack.c.l.b16 %v2525
    %v2653 = vunpack.c.l.b16 %v2526
    %v2654 = vunpack.c.l.b16 %v2527
    %v2655 = vunpack.c.l.b16 %v2528
    %v2656 = vunpack.c.l.b16 %v2529
    %v2657 = vunpack.c.l.b16 %v2530
    %v2658 = vunpack.c.l.b16 %v2531
    %v2659 = vunpack.c.l.b16 %v2532
    %v2660 = vunpack.c.l.b16 %v2533
    %v2661 = vunpack.c.l.b16 %v2534
    %v2662 = vunpack.c.l.b16 %v2535
    %v2663 = vunpack.c.l.b16 %v2536
    %v2664 = vunpack.c.l.b16 %v2537
    %v2665 = vunpack.c.l.b16 %v2538
    %v2666 = vunpack.c.l.b16 %v2539
    %v2667 = vunpack.c.l.b16 %v2540
    %v2668 = vunpack.c.l.b16 %v2541
    %v2669 = vunpack.c.l.b16 %v2542
    %v2670 = vunpack.c.l.b16 %v2543
    %v2671 = vunpack.c.l.b16 %v2544
    %v2672 = vunpack.c.l.b16 %v2545
    %v2673 = vunpack.c.l.b16 %v2546
    %v2674 = vunpack.c.l.b16 %v2547
    %v2675 = vunpack.c.l.b16 %v2548
    %v2676 = vunpack.c.l.b16 %v2549
    %v2677 = vunpack.c.l.b16 %v2550
    %v2678 = vunpack.c.l.b16 %v2551
    %v2679 = vunpack.c.l.b16 %v2552
    %v2680 = vunpack.c.l.b16 %v2553
    %v2681 = vunpack.c.l.b16 %v2554
    %v2682 = vunpack.c.l.b16 %v2555
    %v2683 = vpack.c.b16 %v2624, %v2623
    %v2684 = vpack.c.b16 %v2626, %v2625
    %v2685 = vpack.c.b16 %v2628, %v2627
    %v2686 = vpack.c.b16 %v2630, %v2629
    %v2687 = vpack.c.b16 %v2632, %v2631
    %v2688 = vpack.c.b16 %v2634, %v2633
    %v2689 = vpack.c.b16 %v2636, %v2635
    %v2690 = vpack.c.b16 %v2638, %v2637
    %v2691 = vpack.c.b16 %v2640, %v2639
    %v2692 = vpack.c.b16 %v2642, %v2641
    %v2693 = vpack.c.b16 %v2644, %v2643
    %v2694 = vpack.c.b16 %v2646, %v2645
    %v2695 = vpack.c.b16 %v2648, %v2647
    %v2696 = vpack.c.b16 %v2650, %v2649
    %v2697 = vpack.c.b16 %v2652, %v2651
    %v2698 = vpack.c.b16 %v2654, %v2653
    %v2699 = vpack.c.b16 %v2656, %v2655
    %v2700 = vpack.c.b16 %v2658, %v2657
    %v2701 = vpack.c.b16 %v2660, %v2659
    %v2702 = vpack.c.b16 %v2662, %v2661
    %v2703 = vpack.c.b16 %v2664, %v2663
    %v2704 = vpack.c.b16 %v2666, %v2665
    %v2705 = vpack.c.b16 %v2668, %v2667
    %v2706 = vpack.c.b16 %v2670, %v2669
    %v2707 = vpack.c.b16 %v2672, %v2671
    %v2708 = vpack.c.b16 %v2674, %v2673
    %v2709 = vpack.c.b16 %v2676, %v2675
    %v2710 = vpack.c.b16 %v2678, %v2677
    %v2711 = vpack.c.b16 %v2680, %v2679
    %v2712 = vpack.c.b16 %v2682, %v2681
    %v2744 = vsel %vm2424, %v2471, 0
    %v2747 = vsel %vm2424, %v2475, 0
    %v2750 = vsel %vm2424, %v2479, 0
    %v2753 = vsel %vm2424, %v2483, 0
    %v2756 = vsel %vm2424, %v2487, 0
    %v2759 = vsel %vm2424, %v2491, 0
    %v2762 = vsel %vm2424, %v2495, 0
    %2764 = vmatprep.subr.bf16.mxu0 0
    %2765 = vmatpush1.bf16.msra.mxu0 %v2683
    %2766 = vmatprep.subr.bf16.mxu0 0
    %2767 = vmatpush1.bf16.msra.mxu0 %v2684
    %2768 = vmatprep.subr.bf16.mxu0 0
    %2769 = vmatpush1.bf16.msra.mxu0 %v2685
    %2770 = vmatprep.subr.bf16.mxu0 0
    %2771 = vmatpush1.bf16.msra.mxu0 %v2686
    %2772 = vmatprep.subr.bf16.mxu0 0
    %2773 = vmatpush1.bf16.msra.mxu0 %v2687
    %2774 = vmatprep.subr.bf16.mxu0 0
    %2775 = vmatpush1.bf16.msra.mxu0 %v2688
    %2776 = vmatprep.subr.bf16.mxu0 0
    %2777 = vmatpush1.bf16.msra.mxu0 %v2689
    %2778 = vmatprep.subr.bf16.mxu0 0
    %2779 = vmatpush1.bf16.msra.mxu0 %v2690
    %2780 = vmatprep.subr.bf16.mxu0 0
    %2781 = vmatpush1.bf16.msra.mxu0 %v2691
    %2782 = vmatprep.subr.bf16.mxu0 0
    %2783 = vmatpush1.bf16.msra.mxu0 %v2692
    %2784 = vmatprep.subr.bf16.mxu0 0
    %2785 = vmatpush1.bf16.msra.mxu0 %v2693
    %2786 = vmatprep.subr.bf16.mxu0 0
    %2787 = vmatpush1.bf16.msra.mxu0 %v2694
    %2788 = vmatprep.subr.bf16.mxu0 0
    %2789 = vmatpush1.bf16.msra.mxu0 %v2695
    %2790 = vmatprep.subr.bf16.mxu0 0
    %2791 = vmatpush1.bf16.msra.mxu0 %v2696
    %2792 = vmatprep.subr.bf16.mxu0 0
    %2793 = vmatpush1.bf16.msra.mxu0 %v2697
    %2794 = vmatprep.subr.bf16.mxu0 0
    %2795 = vmatpush1.bf16.msra.mxu0 %v2698
    %2796 = vmatprep.mubr.bf16.mxu0 %v2469
    %2797 = vmatmul.mubr.bf16.gmra.mrb[0].mxu0 %v2468
    %v2798 = vpop.f32.mrb[0].mxu0
    %v2799 = vadd.f32 %v2561, %v2798
    %v2800 = vpop.f32.mrb[0].mxu0
    %v2801 = vpop.f32.mrb[0].mxu0
    %v2802 = vadd.f32 %v2561, %v2801
    %v2803 = vpop.f32.mrb[0].mxu0
    %2804 = vmatprep.mubr.bf16.mxu0 %v2473
    %2805 = vmatmul.mubr.bf16.gmra.mrb[0].mxu0 %v2472
    %v2806 = vpop.f32.mrb[0].mxu0
    %v2807 = vadd.f32 %v2561, %v2806
    %v2808 = vpop.f32.mrb[0].mxu0
    %v2809 = vpop.f32.mrb[0].mxu0
    %v2810 = vadd.f32 %v2561, %v2809
    %v2811 = vpop.f32.mrb[0].mxu0
    %2812 = vmatprep.mubr.bf16.mxu0 %v2477
    %2813 = vmatmul.mubr.bf16.gmra.mrb[0].mxu0 %v2476
    %v2814 = vpop.f32.mrb[0].mxu0
    %v2815 = vadd.f32 %v2561, %v2814
    %v2816 = vpop.f32.mrb[0].mxu0
    %v2817 = vpop.f32.mrb[0].mxu0
    %v2818 = vadd.f32 %v2561, %v2817
    %v2819 = vpop.f32.mrb[0].mxu0
    %2820 = vmatprep.mubr.bf16.mxu0 %v2481
    %2821 = vmatmul.mubr.bf16.gmra.mrb[0].mxu0 %v2480
    %v2822 = vpop.f32.mrb[0].mxu0
    %v2823 = vadd.f32 %v2561, %v2822
    %v2824 = vpop.f32.mrb[0].mxu0
    %v2825 = vpop.f32.mrb[0].mxu0
    %v2826 = vadd.f32 %v2561, %v2825
    %v2827 = vpop.f32.mrb[0].mxu0
    %2828 = vmatprep.mubr.bf16.mxu0 %v2485
    %2829 = vmatmul.mubr.bf16.gmra.mrb[0].mxu0 %v2484
    %v2830 = vpop.f32.mrb[0].mxu0
    %v2831 = vadd.f32 %v2561, %v2830
    %v2832 = vpop.f32.mrb[0].mxu0
    %v2833 = vpop.f32.mrb[0].mxu0
    %v2834 = vadd.f32 %v2561, %v2833
    %v2835 = vpop.f32.mrb[0].mxu0
    %2836 = vmatprep.mubr.bf16.mxu0 %v2489
    %2837 = vmatmul.mubr.bf16.gmra.mrb[0].mxu0 %v2488
    %v2838 = vpop.f32.mrb[0].mxu0
    %v2839 = vadd.f32 %v2561, %v2838
    %v2840 = vpop.f32.mrb[0].mxu0
    %v2841 = vpop.f32.mrb[0].mxu0
    %v2842 = vadd.f32 %v2561, %v2841
    %v2843 = vpop.f32.mrb[0].mxu0
    %2844 = vmatprep.mubr.bf16.mxu0 %v2493
    %2845 = vmatmul.mubr.bf16.gmra.mrb[0].mxu0 %v2492
    %v2846 = vpop.f32.mrb[0].mxu0
    %v2847 = vadd.f32 %v2561, %v2846
    %v2848 = vpop.f32.mrb[0].mxu0
    %v2849 = vpop.f32.mrb[0].mxu0
    %v2850 = vadd.f32 %v2561, %v2849
    %v2851 = vpop.f32.mrb[0].mxu0
    %2852 = vdwg.mxu0
    %2853 = vmatprep.subr.bf16.mxu0 0
    %2854 = vmatpush1.bf16.msra.mxu0 %v2699
    %2855 = vmatprep.subr.bf16.mxu0 0
    %2856 = vmatpush1.bf16.msra.mxu0 %v2700
    %2857 = vmatprep.subr.bf16.mxu0 0
    %2858 = vmatpush1.bf16.msra.mxu0 %v2701
    %2859 = vmatprep.subr.bf16.mxu0 0
    %2860 = vmatpush1.bf16.msra.mxu0 %v2702
    %2861 = vmatprep.subr.bf16.mxu0 0
    %2862 = vmatpush1.bf16.msra.mxu0 %v2703
    %2863 = vmatprep.subr.bf16.mxu0 0
    %2864 = vmatpush1.bf16.msra.mxu0 %v2704
    %2865 = vmatprep.subr.bf16.mxu0 0
    %2866 = vmatpush1.bf16.msra.mxu0 %v2705
    %2867 = vmatprep.subr.bf16.mxu0 0
    %2868 = vmatpush1.bf16.msra.mxu0 %v2706
    %2869 = vmatprep.subr.bf16.mxu0 0
    %2870 = vmatpush1.bf16.msra.mxu0 %v2707
    %2871 = vmatprep.subr.bf16.mxu0 0
    %2872 = vmatpush1.bf16.msra.mxu0 %v2708
    %2873 = vmatprep.subr.bf16.mxu0 0
    %2874 = vmatpush1.bf16.msra.mxu0 %v2709
    %2875 = vmatprep.subr.bf16.mxu0 0
    %2876 = vmatpush1.bf16.msra.mxu0 %v2710
    %2877 = vmatprep.subr.bf16.mxu0 0
    %2878 = vmatpush1.bf16.msra.mxu0 %v2711
    %2879 = vmatprep.subr.bf16.mxu0 0
    %2880 = vmatpush1.bf16.msra.mxu0 %v2712
    %2881 = vmatprep.subr.bf16.mxu0 0
    %2882 = vmatpush1.bf16.msra.mxu0 0
    %2883 = vmatprep.subr.bf16.mxu0 0
    %2884 = vmatpush1.bf16.msra.mxu0 0
    %2885 = vmatprep.mubr.bf16.mxu0 %v2744
    %2886 = vmatmul.mubr.bf16.gmra.mrb[0].mxu0 %v2470
    %v2887 = vpop.f32.mrb[0].mxu0
    %v2888 = vadd.f32 %v2799, %v2887
    %v2889 = vpop.f32.mrb[0].mxu0
    %v2890 = vpop.f32.mrb[0].mxu0
    %v2891 = vadd.f32 %v2802, %v2890
    %v2892 = vpop.f32.mrb[0].mxu0
    %2893 = vmatprep.mubr.bf16.mxu0 %v2747
    %2894 = vmatmul.mubr.bf16.gmra.mrb[0].mxu0 %v2474
    %v2895 = vpop.f32.mrb[0].mxu0
    %v2896 = vadd.f32 %v2807, %v2895
    %v2897 = vpop.f32.mrb[0].mxu0
    %v2898 = vpop.f32.mrb[0].mxu0
    %v2899 = vadd.f32 %v2810, %v2898
    %v2900 = vpop.f32.mrb[0].mxu0
    %2901 = vmatprep.mubr.bf16.mxu0 %v2750
    %2902 = vmatmul.mubr.bf16.gmra.mrb[0].mxu0 %v2478
    %v2903 = vpop.f32.mrb[0].mxu0
    %v2904 = vadd.f32 %v2815, %v2903
    %v2905 = vpop.f32.mrb[0].mxu0
    %v2906 = vpop.f32.mrb[0].mxu0
    %v2907 = vadd.f32 %v2818, %v2906
    %v2908 = vpop.f32.mrb[0].mxu0
    %2909 = vmatprep.mubr.bf16.mxu0 %v2753
    %2910 = vmatmul.mubr.bf16.gmra.mrb[0].mxu0 %v2482
    %v2911 = vpop.f32.mrb[0].mxu0
    %v2912 = vadd.f32 %v2823, %v2911
    %v2913 = vpop.f32.mrb[0].mxu0
    %v2914 = vpop.f32.mrb[0].mxu0
    %v2915 = vadd.f32 %v2826, %v2914
    %v2916 = vpop.f32.mrb[0].mxu0
    %2917 = vmatprep.mubr.bf16.mxu0 %v2756
    %2918 = vmatmul.mubr.bf16.gmra.mrb[0].mxu0 %v2486
    %v2919 = vpop.f32.mrb[0].mxu0
    %v2920 = vadd.f32 %v2831, %v2919
    %v2921 = vpop.f32.mrb[0].mxu0
    %v2922 = vpop.f32.mrb[0].mxu0
    %v2923 = vadd.f32 %v2834, %v2922
    %v2924 = vpop.f32.mrb[0].mxu0
    %2925 = vmatprep.mubr.bf16.mxu0 %v2759
    %2926 = vmatmul.mubr.bf16.gmra.mrb[0].mxu0 %v2490
    %v2927 = vpop.f32.mrb[0].mxu0
    %v2928 = vadd.f32 %v2839, %v2927
    %v2929 = vpop.f32.mrb[0].mxu0
    %v2930 = vpop.f32.mrb[0].mxu0
    %v2931 = vadd.f32 %v2842, %v2930
    %v2932 = vpop.f32.mrb[0].mxu0
    %2933 = vmatprep.mubr.bf16.mxu0 %v2762
    %2934 = vmatmul.mubr.bf16.gmra.mrb[0].mxu0 %v2494
    %v2935 = vpop.f32.mrb[0].mxu0
    %v2936 = vadd.f32 %v2847, %v2935
    %v2937 = vpop.f32.mrb[0].mxu0
    %v2938 = vpop.f32.mrb[0].mxu0
    %v2939 = vadd.f32 %v2850, %v2938
    %v2940 = vpop.f32.mrb[0].mxu0
    %2941 = vdwg.mxu0
    %v2942 = vmax.f32 %v2888, 0.0
    %v2943 = vmax.f32 %v2891, 0.0
    %v2944 = vmax.f32 %v2896, 0.0
    %v2945 = vmax.f32 %v2899, 0.0
    %v2946 = vmax.f32 %v2904, 0.0
    %v2947 = vmax.f32 %v2907, 0.0
    %v2948 = vmax.f32 %v2912, 0.0
    %v2949 = vmax.f32 %v2915, 0.0
    %v2950 = vmax.f32 %v2920, 0.0
    %v2951 = vmax.f32 %v2923, 0.0
    %v2952 = vmax.f32 %v2928, 0.0
    %v2953 = vmax.f32 %v2931, 0.0
    %v2954 = vmax.f32 %v2936, 0.0
    %v2955 = vmax.f32 %v2939, 0.0
    %v2956 = vpack.c.bf16 %v2943, %v2942
    %v2957 = vpack.c.bf16 %v2945, %v2944
    %v2958 = vpack.c.bf16 %v2947, %v2946
    %v2959 = vpack.c.bf16 %v2949, %v2948
    %v2960 = vpack.c.bf16 %v2951, %v2950
    %v2961 = vpack.c.bf16 %v2953, %v2952
    %v2962 = vpack.c.bf16 %v2955, %v2954
    %v2963 = vld [vmem:[#allocation2] sm:$0xf]
    %v2964 = vld [vmem:[#allocation2 + $0x4] sm:$0xf]
    %v2965 = vld [vmem:[#allocation2 + $0x8] sm:$0xf]
    %v2966 = vld [vmem:[#allocation2 + $0xc] sm:$0xf]
    %v2967 = vld [vmem:[#allocation2 + $0x10] sm:$0xf]
    %v2968 = vld [vmem:[#allocation2 + $0x14] sm:$0xf]
    %v2969 = vld [vmem:[#allocation2 + $0x18] sm:$0xf]
    %v2977 = vunpack.c.l.b16 %v2963
    %v2978 = vunpack.c.l.b16 %v2964
    %v2979 = vunpack.c.l.b16 %v2965
    %v2980 = vunpack.c.l.b16 %v2966
    %v2981 = vunpack.c.l.b16 %v2967
    %v2982 = vunpack.c.l.b16 %v2968
    %v2983 = vunpack.c.l.b16 %v2969
    %v2984 = vpack.c.b16 %v2978, %v2977
    %v2985 = vpack.c.b16 %v2980, %v2979
    %v2986 = vpack.c.b16 %v2982, %v2981
    %v2987 = vpack.c.b16 %v2983, %v2983
    %vm2988 = vcmask 883712
    %v2990 = vsel %vm2988, %v2984, 0
    %v2993 = vsel %vm2988, %v2985, 0
    %v2996 = vsel %vm2988, %v2986, 0
    %v2999 = vsel %vm2988, %v2987, 0
    %v3002 = vsel %vm317, %v2962, 0
    %3004 = vmatprep.subr.bf16.mxu0 0
    %3005 = vmatpush1.bf16.msra.mxu0 %v2956
    %3006 = vmatprep.subr.bf16.mxu0 0
    %3007 = vmatpush1.bf16.msra.mxu0 %v2957
    %3008 = vmatprep.subr.bf16.mxu0 0
    %3009 = vmatpush1.bf16.msra.mxu0 %v2958
    %3010 = vmatprep.subr.bf16.mxu0 0
    %3011 = vmatpush1.bf16.msra.mxu0 %v2959
    %3012 = vmatprep.subr.bf16.mxu0 0
    %3013 = vmatpush1.bf16.msra.mxu0 %v2960
    %3014 = vmatprep.subr.bf16.mxu0 0
    %3015 = vmatpush1.bf16.msra.mxu0 %v2961
    %3016 = vmatprep.subr.bf16.mxu0 0
    %3017 = vmatpush1.bf16.msra.mxu0 %v3002
    %3018 = vmatprep.subr.bf16.mxu0 0
    %3019 = vmatpush1.bf16.msra.mxu0 0
    %3020 = vmatprep.subr.bf16.mxu0 0
    %3021 = vmatpush1.bf16.msra.mxu0 0
    %3022 = vmatprep.subr.bf16.mxu0 0
    %3023 = vmatpush1.bf16.msra.mxu0 0
    %3024 = vmatprep.subr.bf16.mxu0 0
    %3025 = vmatpush1.bf16.msra.mxu0 0
    %3026 = vmatprep.subr.bf16.mxu0 0
    %3027 = vmatpush1.bf16.msra.mxu0 0
    %3028 = vmatprep.subr.bf16.mxu0 0
    %3029 = vmatpush1.bf16.msra.mxu0 0
    %3030 = vmatprep.subr.bf16.mxu0 0
    %3031 = vmatpush1.bf16.msra.mxu0 0
    %3032 = vmatprep.subr.bf16.mxu0 0
    %3033 = vmatpush1.bf16.msra.mxu0 0
    %3034 = vmatprep.subr.bf16.mxu0 0
    %3035 = vmatpush1.bf16.msra.mxu0 0
    %3036 = vmatprep.mubr.bf16.mxu0 0
    %3037 = vmatmul.mubr.bf16.gmra.mrb[0].mxu0 %v2990
    %v3038 = vpop.f32.mrb[0].mxu0
    %v3039 = vadd.f32 0.0, %v3038
    %v3040 = vpop.f32.mrb[0].mxu0
    %v3041 = vpop.f32.mrb[0].mxu0
    %v3042 = vadd.f32 0.0, %v3041
    %v3043 = vpop.f32.mrb[0].mxu0
    %3044 = vmatprep.mubr.bf16.mxu0 0
    %3045 = vmatmul.mubr.bf16.gmra.mrb[0].mxu0 %v2993
    %v3046 = vpop.f32.mrb[0].mxu0
    %v3047 = vadd.f32 0.0, %v3046
    %v3048 = vpop.f32.mrb[0].mxu0
    %v3049 = vpop.f32.mrb[0].mxu0
    %v3050 = vadd.f32 0.0, %v3049
    %v3051 = vpop.f32.mrb[0].mxu0
    %3052 = vmatprep.mubr.bf16.mxu0 0
    %3053 = vmatmul.mubr.bf16.gmra.mrb[0].mxu0 %v2996
    %v3054 = vpop.f32.mrb[0].mxu0
    %v3055 = vadd.f32 0.0, %v3054
    %v3056 = vpop.f32.mrb[0].mxu0
    %v3057 = vpop.f32.mrb[0].mxu0
    %v3058 = vadd.f32 0.0, %v3057
    %v3059 = vpop.f32.mrb[0].mxu0
    %3060 = vmatprep.mubr.bf16.mxu0 0
    %3061 = vmatmul.mubr.bf16.gmra.mrb[0].mxu0 %v2999
    %v3062 = vpop.f32.mrb[0].mxu0
    %v3063 = vadd.f32 0.0, %v3062
    %v3064 = vpop.f32.mrb[0].mxu0
    %v3065 = vpop.f32.mrb[0].mxu0
    %v3066 = vpop.f32.mrb[0].mxu0
    %3067 = vdwg.mxu0
    %v3068 = vld [vmem:[#allocation4] sm:$0xf]
    %v3069 = vld [vmem:[#allocation4 + $0x4] sm:$0xf]
    %v3070 = vld [vmem:[#allocation4 + $0x8] sm:$0xf]
    %v3071 = vld [vmem:[#allocation4 + $0xc] sm:$0xf]
    %v3072 = vld [vmem:[#allocation4 + $0x10] sm:$0xf]
    %v3073 = vld [vmem:[#allocation4 + $0x14] sm:$0xf]
    %v3074 = vld [vmem:[#allocation4 + $0x18] sm:$0xf]
    %v3082 = vunpack.c.l.b16 %v3068
    %v3083 = vunpack.c.l.b16 %v3069
    %v3084 = vunpack.c.l.b16 %v3070
    %v3085 = vunpack.c.l.b16 %v3071
    %v3086 = vunpack.c.l.b16 %v3072
    %v3087 = vunpack.c.l.b16 %v3073
    %v3088 = vunpack.c.l.b16 %v3074
    %v3089 = vpack.c.b16 %v3083, %v3082
    %v3090 = vpack.c.b16 %v3085, %v3084
    %v3091 = vpack.c.b16 %v3087, %v3086
    %v3092 = vpack.c.b16 %v3088, %v3088
    %v3094 = vsel %vm2988, %v3089, 0
    %v3097 = vsel %vm2988, %v3090, 0
    %v3100 = vsel %vm2988, %v3091, 0
    %v3103 = vsel %vm2988, %v3092, 0
    %3105 = vmatprep.subr.bf16.mxu0 0
    %3106 = vmatpush1.bf16.msra.mxu0 %v2956
    %3107 = vmatprep.subr.bf16.mxu0 0
    %3108 = vmatpush1.bf16.msra.mxu0 %v2957
    %3109 = vmatprep.subr.bf16.mxu0 0
    %3110 = vmatpush1.bf16.msra.mxu0 %v2958
    %3111 = vmatprep.subr.bf16.mxu0 0
    %3112 = vmatpush1.bf16.msra.mxu0 %v2959
    %3113 = vmatprep.subr.bf16.mxu0 0
    %3114 = vmatpush1.bf16.msra.mxu0 %v2960
    %3115 = vmatprep.subr.bf16.mxu0 0
    %3116 = vmatpush1.bf16.msra.mxu0 %v2961
    %3117 = vmatprep.subr.bf16.mxu0 0
    %3118 = vmatpush1.bf16.msra.mxu0 %v3002
    %3119 = vmatprep.subr.bf16.mxu0 0
    %3120 = vmatpush1.bf16.msra.mxu0 0
    %3121 = vmatprep.subr.bf16.mxu0 0
    %3122 = vmatpush1.bf16.msra.mxu0 0
    %3123 = vmatprep.subr.bf16.mxu0 0
    %3124 = vmatpush1.bf16.msra.mxu0 0
    %3125 = vmatprep.subr.bf16.mxu0 0
    %3126 = vmatpush1.bf16.msra.mxu0 0
    %3127 = vmatprep.subr.bf16.mxu0 0
    %3128 = vmatpush1.bf16.msra.mxu0 0
    %3129 = vmatprep.subr.bf16.mxu0 0
    %3130 = vmatpush1.bf16.msra.mxu0 0
    %3131 = vmatprep.subr.bf16.mxu0 0
    %3132 = vmatpush1.bf16.msra.mxu0 0
    %3133 = vmatprep.subr.bf16.mxu0 0
    %3134 = vmatpush1.bf16.msra.mxu0 0
    %3135 = vmatprep.subr.bf16.mxu0 0
    %3136 = vmatpush1.bf16.msra.mxu0 0
    %3137 = vmatprep.mubr.bf16.mxu0 0
    %3138 = vmatmul.mubr.bf16.gmra.mrb[0].mxu0 %v3094
    %v3139 = vpop.f32.mrb[0].mxu0
    %v3140 = vadd.f32 0.0, %v3139
    %v3141 = vpop.f32.mrb[0].mxu0
    %v3142 = vpop.f32.mrb[0].mxu0
    %v3143 = vadd.f32 0.0, %v3142
    %v3144 = vpop.f32.mrb[0].mxu0
    %3145 = vmatprep.mubr.bf16.mxu0 0
    %3146 = vmatmul.mubr.bf16.gmra.mrb[0].mxu0 %v3097
    %v3147 = vpop.f32.mrb[0].mxu0
    %v3148 = vadd.f32 0.0, %v3147
    %v3149 = vpop.f32.mrb[0].mxu0
    %v3150 = vpop.f32.mrb[0].mxu0
    %v3151 = vadd.f32 0.0, %v3150
    %v3152 = vpop.f32.mrb[0].mxu0
    %3153 = vmatprep.mubr.bf16.mxu0 0
    %3154 = vmatmul.mubr.bf16.gmra.mrb[0].mxu0 %v3100
    %v3155 = vpop.f32.mrb[0].mxu0
    %v3156 = vadd.f32 0.0, %v3155
    %v3157 = vpop.f32.mrb[0].mxu0
    %v3158 = vpop.f32.mrb[0].mxu0
    %v3159 = vadd.f32 0.0, %v3158
    %v3160 = vpop.f32.mrb[0].mxu0
    %3161 = vmatprep.mubr.bf16.mxu0 0
    %3162 = vmatmul.mubr.bf16.gmra.mrb[0].mxu0 %v3103
    %v3163 = vpop.f32.mrb[0].mxu0
    %v3164 = vadd.f32 0.0, %v3163
    %v3165 = vpop.f32.mrb[0].mxu0
    %v3166 = vpop.f32.mrb[0].mxu0
    %v3167 = vpop.f32.mrb[0].mxu0
    %3168 = vdwg.mxu0
    %v3169 = vmax.f32 %v3039, %v3140
    %v3170 = vmax.f32 %v3042, %v3143
    %v3171 = vmax.f32 %v3047, %v3148
    %v3172 = vmax.f32 %v3050, %v3151
    %v3173 = vmax.f32 %v3055, %v3156
    %v3174 = vmax.f32 %v3058, %v3159
    %v3175 = vmax.f32 %v3063, %v3164
    %v3176 = vpack.c.bf16 %v3170, %v3169
    %v3177 = vpack.c.bf16 %v3172, %v3171
    %v3178 = vpack.c.bf16 %v3174, %v3173
    %v3179 = vpack.c.bf16 %v3175, %v3175
    %v3180 = vld [vmem:[#allocation6] sm:$0xf]
    %v3181 = vld [vmem:[#allocation6 + $0x4] sm:$0xf]
    %v3182 = vld [vmem:[#allocation6 + $0x8] sm:$0xf]
    %v3183 = vld [vmem:[#allocation6 + $0xc] sm:$0xf]
    %v3184 = vld [vmem:[#allocation6 + $0x10] sm:$0xf]
    %v3185 = vld [vmem:[#allocation6 + $0x14] sm:$0xf]
    %v3186 = vld [vmem:[#allocation6 + $0x18] sm:$0xf]
    %v3187 = vld [vmem:[#allocation6 + $0x1c] sm:$0xf]
    %v3188 = vld [vmem:[#allocation6 + $0x20] sm:$0xf]
    %v3189 = vld [vmem:[#allocation6 + $0x24] sm:$0xf]
    %v3190 = vld [vmem:[#allocation6 + $0x28] sm:$0xf]
    %v3191 = vld [vmem:[#allocation6 + $0x2c] sm:$0xf]
    %v3192 = vld [vmem:[#allocation6 + $0x30] sm:$0xf]
    %v3193 = vld [vmem:[#allocation6 + $0x34] sm:$0xf]
    %v3194 = vld [vmem:[#allocation6 + $0x38] sm:$0xf]
    %v3195 = vld [vmem:[#allocation6 + $0x3c] sm:$0xf]
    %v3212 = vunpack.c.l.b16 %v3180
    %v3213 = vunpack.c.l.b16 %v3181
    %v3214 = vunpack.c.l.b16 %v3182
    %v3215 = vunpack.c.l.b16 %v3183
    %v3216 = vunpack.c.l.b16 %v3184
    %v3217 = vunpack.c.l.b16 %v3185
    %v3218 = vunpack.c.l.b16 %v3186
    %v3219 = vunpack.c.l.b16 %v3187
    %v3220 = vunpack.c.l.b16 %v3188
    %v3221 = vunpack.c.l.b16 %v3189
    %v3222 = vunpack.c.l.b16 %v3190
    %v3223 = vunpack.c.l.b16 %v3191
    %v3224 = vunpack.c.l.b16 %v3192
    %v3225 = vunpack.c.l.b16 %v3193
    %v3226 = vunpack.c.l.b16 %v3194
    %v3227 = vunpack.c.l.b16 %v3195
    %v3228 = vpack.c.b16 %v3213, %v3212
    %v3229 = vpack.c.b16 %v3215, %v3214
    %v3230 = vpack.c.b16 %v3217, %v3216
    %v3231 = vpack.c.b16 %v3219, %v3218
    %v3232 = vpack.c.b16 %v3221, %v3220
    %v3233 = vpack.c.b16 %v3223, %v3222
    %v3234 = vpack.c.b16 %v3225, %v3224
    %v3235 = vpack.c.b16 %v3227, %v3226
    %3244 = vmatprep.subr.bf16.mxu0 0
    %3245 = vmatpush1.bf16.msra.mxu0 %v3228
    %3246 = vmatprep.subr.bf16.mxu0 0
    %3247 = vmatpush1.bf16.msra.mxu0 %v3229
    %3248 = vmatprep.subr.bf16.mxu0 0
    %3249 = vmatpush1.bf16.msra.mxu0 %v3230
    %3250 = vmatprep.subr.bf16.mxu0 0
    %3251 = vmatpush1.bf16.msra.mxu0 %v3231
    %3252 = vmatprep.subr.bf16.mxu0 0
    %3253 = vmatpush1.bf16.msra.mxu0 %v3232
    %3254 = vmatprep.subr.bf16.mxu0 0
    %3255 = vmatpush1.bf16.msra.mxu0 %v3233
    %3256 = vmatprep.subr.bf16.mxu0 0
    %3257 = vmatpush1.bf16.msra.mxu0 %v3234
    %3258 = vmatprep.subr.bf16.mxu0 0
    %3259 = vmatpush1.bf16.msra.mxu0 %v3235
    %3260 = vmatprep.subr.bf16.mxu0 0
    %3261 = vmatpush1.bf16.msra.mxu0 0
    %3262 = vmatprep.subr.bf16.mxu0 0
    %3263 = vmatpush1.bf16.msra.mxu0 0
    %3264 = vmatprep.subr.bf16.mxu0 0
    %3265 = vmatpush1.bf16.msra.mxu0 0
    %3266 = vmatprep.subr.bf16.mxu0 0
    %3267 = vmatpush1.bf16.msra.mxu0 0
    %3268 = vmatprep.subr.bf16.mxu0 0
    %3269 = vmatpush1.bf16.msra.mxu0 0
    %3270 = vmatprep.subr.bf16.mxu0 0
    %3271 = vmatpush1.bf16.msra.mxu0 0
    %3272 = vmatprep.subr.bf16.mxu0 0
    %3273 = vmatpush1.bf16.msra.mxu0 0
    %3274 = vmatprep.subr.bf16.mxu0 0
    %3275 = vmatpush1.bf16.msra.mxu0 0
    %3276 = vmatprep.mubr.bf16.mxu0 0
    %3277 = vmatmul.mubr.bf16.gmra.mrb[0].mxu0 %v3176
    %v3278 = vpop.f32.mrb[0].mxu0
    %v3279 = vadd.f32 0.0, %v3278
    %v3280 = vpop.f32.mrb[0].mxu0
    %v3281 = vpop.f32.mrb[0].mxu0
    %v3282 = vadd.f32 0.0, %v3281
    %v3283 = vpop.f32.mrb[0].mxu0
    %3284 = vmatprep.mubr.bf16.mxu0 0
    %3285 = vmatmul.mubr.bf16.gmra.mrb[0].mxu0 %v3177
    %v3286 = vpop.f32.mrb[0].mxu0
    %v3287 = vadd.f32 0.0, %v3286
    %v3288 = vpop.f32.mrb[0].mxu0
    %v3289 = vpop.f32.mrb[0].mxu0
    %v3290 = vadd.f32 0.0, %v3289
    %v3291 = vpop.f32.mrb[0].mxu0
    %3292 = vmatprep.mubr.bf16.mxu0 0
    %3293 = vmatmul.mubr.bf16.gmra.mrb[0].mxu0 %v3178
    %v3294 = vpop.f32.mrb[0].mxu0
    %v3295 = vadd.f32 0.0, %v3294
    %v3296 = vpop.f32.mrb[0].mxu0
    %v3297 = vpop.f32.mrb[0].mxu0
    %v3298 = vadd.f32 0.0, %v3297
    %v3299 = vpop.f32.mrb[0].mxu0
    %3300 = vmatprep.mubr.bf16.mxu0 0
    %3301 = vmatmul.mubr.bf16.gmra.mrb[0].mxu0 %v3179
    %v3302 = vpop.f32.mrb[0].mxu0
    %v3303 = vadd.f32 0.0, %v3302
    %v3304 = vpop.f32.mrb[0].mxu0
    %v3305 = vpop.f32.mrb[0].mxu0
    %v3306 = vpop.f32.mrb[0].mxu0
    %3307 = vdwg.mxu0
    %v3308 = vld [vmem:[#allocation7] sm:$0xf]
    %v3309 = vld [vmem:[#allocation7 + $0x4] sm:$0xf]
    %v3310 = vld [vmem:[#allocation7 + $0x8] sm:$0xf]
    %v3311 = vld [vmem:[#allocation7 + $0xc] sm:$0xf]
    %v3312 = vld [vmem:[#allocation7 + $0x10] sm:$0xf]
    %v3313 = vld [vmem:[#allocation7 + $0x14] sm:$0xf]
    %v3314 = vld [vmem:[#allocation7 + $0x18] sm:$0xf]
    %v3315 = vld [vmem:[#allocation7 + $0x1c] sm:$0xf]
    %v3316 = vld [vmem:[#allocation7 + $0x20] sm:$0xf]
    %v3317 = vld [vmem:[#allocation7 + $0x24] sm:$0xf]
    %v3318 = vld [vmem:[#allocation7 + $0x28] sm:$0xf]
    %v3319 = vld [vmem:[#allocation7 + $0x2c] sm:$0xf]
    %v3320 = vld [vmem:[#allocation7 + $0x30] sm:$0xf]
    %v3321 = vld [vmem:[#allocation7 + $0x34] sm:$0xf]
    %v3322 = vld [vmem:[#allocation7 + $0x38] sm:$0xf]
    %v3323 = vld [vmem:[#allocation7 + $0x3c] sm:$0xf]
    %v3340 = vunpack.c.l.b16 %v3308
    %v3341 = vunpack.c.l.b16 %v3309
    %v3342 = vunpack.c.l.b16 %v3310
    %v3343 = vunpack.c.l.b16 %v3311
    %v3344 = vunpack.c.l.b16 %v3312
    %v3345 = vunpack.c.l.b16 %v3313
    %v3346 = vunpack.c.l.b16 %v3314
    %v3347 = vunpack.c.l.b16 %v3315
    %v3348 = vunpack.c.l.b16 %v3316
    %v3349 = vunpack.c.l.b16 %v3317
    %v3350 = vunpack.c.l.b16 %v3318
    %v3351 = vunpack.c.l.b16 %v3319
    %v3352 = vunpack.c.l.b16 %v3320
    %v3353 = vunpack.c.l.b16 %v3321
    %v3354 = vunpack.c.l.b16 %v3322
    %v3355 = vunpack.c.l.b16 %v3323
    %v3356 = vpack.c.b16 %v3341, %v3340
    %v3357 = vpack.c.b16 %v3343, %v3342
    %v3358 = vpack.c.b16 %v3345, %v3344
    %v3359 = vpack.c.b16 %v3347, %v3346
    %v3360 = vpack.c.b16 %v3349, %v3348
    %v3361 = vpack.c.b16 %v3351, %v3350
    %v3362 = vpack.c.b16 %v3353, %v3352
    %v3363 = vpack.c.b16 %v3355, %v3354
    %3372 = vmatprep.subr.bf16.mxu0 0
    %3373 = vmatpush1.bf16.msra.mxu0 %v3356
    %3374 = vmatprep.subr.bf16.mxu0 0
    %3375 = vmatpush1.bf16.msra.mxu0 %v3357
    %3376 = vmatprep.subr.bf16.mxu0 0
    %3377 = vmatpush1.bf16.msra.mxu0 %v3358
    %3378 = vmatprep.subr.bf16.mxu0 0
    %3379 = vmatpush1.bf16.msra.mxu0 %v3359
    %3380 = vmatprep.subr.bf16.mxu0 0
    %3381 = vmatpush1.bf16.msra.mxu0 %v3360
    %3382 = vmatprep.subr.bf16.mxu0 0
    %3383 = vmatpush1.bf16.msra.mxu0 %v3361
    %3384 = vmatprep.subr.bf16.mxu0 0
    %3385 = vmatpush1.bf16.msra.mxu0 %v3362
    %3386 = vmatprep.subr.bf16.mxu0 0
    %3387 = vmatpush1.bf16.msra.mxu0 %v3363
    %3388 = vmatprep.subr.bf16.mxu0 0
    %3389 = vmatpush1.bf16.msra.mxu0 0
    %3390 = vmatprep.subr.bf16.mxu0 0
    %3391 = vmatpush1.bf16.msra.mxu0 0
    %3392 = vmatprep.subr.bf16.mxu0 0
    %3393 = vmatpush1.bf16.msra.mxu0 0
    %3394 = vmatprep.subr.bf16.mxu0 0
    %3395 = vmatpush1.bf16.msra.mxu0 0
    %3396 = vmatprep.subr.bf16.mxu0 0
    %3397 = vmatpush1.bf16.msra.mxu0 0
    %3398 = vmatprep.subr.bf16.mxu0 0
    %3399 = vmatpush1.bf16.msra.mxu0 0
    %3400 = vmatprep.subr.bf16.mxu0 0
    %3401 = vmatpush1.bf16.msra.mxu0 0
    %3402 = vmatprep.subr.bf16.mxu0 0
    %3403 = vmatpush1.bf16.msra.mxu0 0
    %3404 = vmatprep.mubr.bf16.mxu0 0
    %3405 = vmatmul.mubr.bf16.gmra.mrb[0].mxu0 %v3176
    %v3406 = vpop.f32.mrb[0].mxu0
    %v3407 = vadd.f32 0.0, %v3406
    %v3408 = vpop.f32.mrb[0].mxu0
    %v3409 = vpop.f32.mrb[0].mxu0
    %v3410 = vadd.f32 0.0, %v3409
    %v3411 = vpop.f32.mrb[0].mxu0
    %3412 = vmatprep.mubr.bf16.mxu0 0
    %3413 = vmatmul.mubr.bf16.gmra.mrb[0].mxu0 %v3177
    %v3414 = vpop.f32.mrb[0].mxu0
    %v3415 = vadd.f32 0.0, %v3414
    %v3416 = vpop.f32.mrb[0].mxu0
    %v3417 = vpop.f32.mrb[0].mxu0
    %v3418 = vadd.f32 0.0, %v3417
    %v3419 = vpop.f32.mrb[0].mxu0
    %3420 = vmatprep.mubr.bf16.mxu0 0
    %3421 = vmatmul.mubr.bf16.gmra.mrb[0].mxu0 %v3178
    %v3422 = vpop.f32.mrb[0].mxu0
    %v3423 = vadd.f32 0.0, %v3422
    %v3424 = vpop.f32.mrb[0].mxu0
    %v3425 = vpop.f32.mrb[0].mxu0
    %v3426 = vadd.f32 0.0, %v3425
    %v3427 = vpop.f32.mrb[0].mxu0
    %3428 = vmatprep.mubr.bf16.mxu0 0
    %3429 = vmatmul.mubr.bf16.gmra.mrb[0].mxu0 %v3179
    %v3430 = vpop.f32.mrb[0].mxu0
    %v3431 = vadd.f32 0.0, %v3430
    %v3432 = vpop.f32.mrb[0].mxu0
    %v3433 = vpop.f32.mrb[0].mxu0
    %v3434 = vpop.f32.mrb[0].mxu0
    %3435 = vdwg.mxu0
    %v3436 = vmax.f32 %v3279, %v3407
    %v3437 = vmax.f32 %v3282, %v3410
    %v3438 = vmax.f32 %v3287, %v3415
    %v3439 = vmax.f32 %v3290, %v3418
    %v3440 = vmax.f32 %v3295, %v3423
    %v3441 = vmax.f32 %v3298, %v3426
    %v3442 = vmax.f32 %v3303, %v3431
    %v3450 = vrot.slane %v3436, 1
    %v3451 = vrot.slane %v3437, 1
    %v3452 = vsel %vm177, %v3450, %v3451
    %v3453 = vrot.slane %v3438, 1
    %v3454 = vsel %vm177, %v3451, %v3453
    %v3455 = vrot.slane %v3439, 1
    %v3456 = vsel %vm177, %v3453, %v3455
    %v3457 = vrot.slane %v3440, 1
    %v3458 = vsel %vm177, %v3455, %v3457
    %v3459 = vrot.slane %v3441, 1
    %v3460 = vsel %vm177, %v3457, %v3459
    %v3461 = vrot.slane %v3442, 1
    %v3462 = vsel %vm177, %v3459, %v3461
    %3463 = vrot.lane.b32.xlu0 %v3452, 64
    %v3464 = vpop.permute.xlu0 %3463
    %3465 = vrot.lane.b32.xlu0 %v3454, 64
    %v3466 = vpop.permute.xlu0 %3465
    %3467 = vrot.lane.b32.xlu0 %v3456, 64
    %v3468 = vpop.permute.xlu0 %3467
    %3469 = vrot.lane.b32.xlu0 %v3458, 64
    %v3470 = vpop.permute.xlu0 %3469
    %3471 = vrot.lane.b32.xlu0 %v3460, 64
    %v3472 = vpop.permute.xlu0 %3471
    %3473 = vrot.lane.b32.xlu0 %v3462, 64
    %v3474 = vpop.permute.xlu0 %3473
    %3475 = vrot.lane.b32.xlu0 %v3461, 64
    %v3476 = vpop.permute.xlu0 %3475
    %v3484 = vrot.slane %v3436, 2
    %v3485 = vrot.slane %v3437, 2
    %v3486 = vsel %vm317, %v3484, %v3485
    %v3487 = vrot.slane %v3438, 2
    %v3488 = vsel %vm317, %v3485, %v3487
    %v3489 = vrot.slane %v3439, 2
    %v3490 = vsel %vm317, %v3487, %v3489
    %v3491 = vrot.slane %v3440, 2
    %v3492 = vsel %vm317, %v3489, %v3491
    %v3493 = vrot.slane %v3441, 2
    %v3494 = vsel %vm317, %v3491, %v3493
    %v3495 = vrot.slane %v3442, 2
    %v3496 = vsel %vm317, %v3493, %v3495
    %v3504 = vrot.slane %v3436, 3
    %v3505 = vrot.slane %v3437, 3
    %v3506 = vsel %vm457, %v3504, %v3505
    %v3507 = vrot.slane %v3438, 3
    %v3508 = vsel %vm457, %v3505, %v3507
    %v3509 = vrot.slane %v3439, 3
    %v3510 = vsel %vm457, %v3507, %v3509
    %v3511 = vrot.slane %v3440, 3
    %v3512 = vsel %vm457, %v3509, %v3511
    %v3513 = vrot.slane %v3441, 3
    %v3514 = vsel %vm457, %v3511, %v3513
    %v3515 = vrot.slane %v3442, 3
    %v3516 = vsel %vm457, %v3513, %v3515
    %3517 = vrot.lane.b32.xlu0 %v3506, 64
    %v3518 = vpop.permute.xlu0 %3517
    %3519 = vrot.lane.b32.xlu0 %v3508, 64
    %v3520 = vpop.permute.xlu0 %3519
    %3521 = vrot.lane.b32.xlu0 %v3510, 64
    %v3522 = vpop.permute.xlu0 %3521
    %3523 = vrot.lane.b32.xlu0 %v3512, 64
    %v3524 = vpop.permute.xlu0 %3523
    %3525 = vrot.lane.b32.xlu0 %v3514, 64
    %v3526 = vpop.permute.xlu0 %3525
    %3527 = vrot.lane.b32.xlu0 %v3516, 64
    %v3528 = vpop.permute.xlu0 %3527
    %3529 = vrot.lane.b32.xlu0 %v3515, 64
    %v3530 = vpop.permute.xlu0 %3529
    %v3538 = vsel %vm1852, %v3436, %v3464
    %v3539 = vsel %vm1852, %v3437, %v3466
    %v3540 = vsel %vm1852, %v3438, %v3468
    %v3541 = vsel %vm1852, %v3439, %v3470
    %v3542 = vsel %vm1852, %v3440, %v3472
    %v3543 = vsel %vm1852, %v3441, %v3474
    %v3544 = vsel %vm1852, %v3442, %v3476
    %v3545 = vsel %vm1852, %v3486, %v3518
    %v3546 = vsel %vm1852, %v3488, %v3520
    %v3547 = vsel %vm1852, %v3490, %v3522
    %v3548 = vsel %vm1852, %v3492, %v3524
    %v3549 = vsel %vm1852, %v3494, %v3526
    %v3550 = vsel %vm1852, %v3496, %v3528
    %v3551 = vsel %vm1852, %v3495, %v3530
    %v3552 = vld [vmem:[%s13] sm:$0xf]
    %v3553 = vpack.c.bf16 %v3539, %v3538
    %v3554 = vpack.c.bf16 %v3546, %v3545
    %v3555 = vpack.c.bf16 %v3541, %v3540
    %v3556 = vpack.c.bf16 %v3548, %v3547
    %v3557 = vpack.c.bf16 %v3543, %v3542
    %v3558 = vpack.c.bf16 %v3550, %v3549
    %v3559 = vpack.c.bf16 %v3544, %v3544
    %v3560 = vpack.c.bf16 %v3551, %v3551
    %vm3561 = vcmask 433152
    %v3563 = vsel %vm3561, %v3552, 0
    %vm3565 = vcmask 1041408
    %vm3566 = vcmask 1042432
    %v3567 = vsel %vm3565, 4294967295, 65535
    %v3568 = vsel %vm3566, %v3567, 0
    %v3570 = vand.u32 %v3559, %v3568
    %v3573 = vand.u32 %v3560, %v3568
    %3575 = vmatprep.subr.bf16.mxu0 %v3554
    %3576 = vmatpush1.bf16.msra.mxu0 %v3553
    %3577 = vmatprep.subr.bf16.mxu0 %v3556
    %3578 = vmatpush1.bf16.msra.mxu0 %v3555
    %3579 = vmatprep.subr.bf16.mxu0 %v3558
    %3580 = vmatpush1.bf16.msra.mxu0 %v3557
    %3581 = vmatprep.subr.bf16.mxu0 %v3573
    %3582 = vmatpush1.bf16.msra.mxu0 %v3570
    %3583 = vmatprep.subr.bf16.mxu0 0
    %3584 = vmatpush1.bf16.msra.mxu0 0
    %3585 = vmatprep.subr.bf16.mxu0 0
    %3586 = vmatpush1.bf16.msra.mxu0 0
    %3587 = vmatprep.subr.bf16.mxu0 0
    %3588 = vmatpush1.bf16.msra.mxu0 0
    %3589 = vmatprep.subr.bf16.mxu0 0
    %3590 = vmatpush1.bf16.msra.mxu0 0
    %3591 = vmatprep.subr.bf16.mxu0 0
    %3592 = vmatpush1.bf16.msra.mxu0 0
    %3593 = vmatprep.subr.bf16.mxu0 0
    %3594 = vmatpush1.bf16.msra.mxu0 0
    %3595 = vmatprep.subr.bf16.mxu0 0
    %3596 = vmatpush1.bf16.msra.mxu0 0
    %3597 = vmatprep.subr.bf16.mxu0 0
    %3598 = vmatpush1.bf16.msra.mxu0 0
    %3599 = vmatprep.subr.bf16.mxu0 0
    %3600 = vmatpush1.bf16.msra.mxu0 0
    %3601 = vmatprep.subr.bf16.mxu0 0
    %3602 = vmatpush1.bf16.msra.mxu0 0
    %3603 = vmatprep.subr.bf16.mxu0 0
    %3604 = vmatpush1.bf16.msra.mxu0 0
    %3605 = vmatprep.subr.bf16.mxu0 0
    %3606 = vmatpush1.bf16.msra.mxu0 0
    %3607 = vmatprep.mubr.bf16.mxu0 0
    %3608 = vmatmul.mubr.bf16.gmra.mrb[0].mxu0 %v3563
    %v3609 = vpop.f32.mrb[0].mxu0
    %v3610 = vadd.f32 0.0, %v3609
    %v3611 = vpop.f32.mrb[0].mxu0
    %v3612 = vadd.f32 0.0, %v3611
    %v3613 = vpop.f32.mrb[0].mxu0
    %v3614 = vpop.f32.mrb[0].mxu0
    %3615 = vdwg.mxu0
    %v3616 = vpack.c.bf16 %v3610, %v3610
    %v3617 = vpack.c.bf16 %v3612, %v3612
    %v3618 = vld [vmem:[%s14] sm:$0xf]
    %v3619 = vld [vmem:[%s14 + $0x4] sm:$0xf]
    %v3620 = vld [vmem:[%s14 + $0x8] sm:$0xf]
    %v3621 = vld [vmem:[%s14 + $0xc] sm:$0xf]
    %v3622 = vld [vmem:[%s14 + $0x10] sm:$0xf]
    %v3623 = vld [vmem:[%s14 + $0x14] sm:$0xf]
    %v3624 = vld [vmem:[%s14 + $0x18] sm:$0xf]
    %v3625 = vld [vmem:[%s14 + $0x1c] sm:$0xf]
    %v3626 = vld [vmem:[%s14 + $0x20] sm:$0xf]
    %v3627 = vld [vmem:[%s14 + $0x24] sm:$0xf]
    %v3628 = vld [vmem:[%s14 + $0x28] sm:$0xf]
    %v3629 = vld [vmem:[%s14 + $0x2c] sm:$0xf]
    %v3630 = vld [vmem:[%s14 + $0x30] sm:$0xf]
    %v3631 = vld [vmem:[%s14 + $0x34] sm:$0xf]
    %v3632 = vld [vmem:[%s14 + $0x38] sm:$0xf]
    %v3633 = vld [vmem:[%s14 + $0x3c] sm:$0xf]
    %v3634 = vld [vmem:[%s14 + $0x40] sm:$0xf]
    %v3635 = vld [vmem:[%s14 + $0x44] sm:$0xf]
    %v3636 = vld [vmem:[%s14 + $0x48] sm:$0xf]
    %v3637 = vld [vmem:[%s14 + $0x4c] sm:$0xf]
    %v3638 = vld [vmem:[%s14 + $0x50] sm:$0xf]
    %v3639 = vld [vmem:[%s14 + $0x54] sm:$0xf]
    %v3640 = vld [vmem:[%s14 + $0x58] sm:$0xf]
    %v3641 = vld [vmem:[%s14 + $0x5c] sm:$0xf]
    %v3642 = vld [vmem:[%s14 + $0x60] sm:$0xf]
    %v3643 = vld [vmem:[%s14 + $0x64] sm:$0xf]
    %v3644 = vld [vmem:[%s14 + $0x68] sm:$0xf]
    %v3645 = vld [vmem:[%s14 + $0x6c] sm:$0xf]
    %v3646 = vld [vmem:[%s14 + $0x70] sm:$0xf]
    %v3647 = vld [vmem:[%s14 + $0x74] sm:$0xf]
    %v3648 = vld [vmem:[%s14 + $0x78] sm:$0xf]
    %v3649 = vld [vmem:[%s14 + $0x7c] sm:$0xf]
    %v3650 = vld [vmem:[%s15] sm:$0x1]
    %v3652 = vlaneseq
    %v3653 = vshrl.u32 %v3652, 7
    %v3654 = vsub.s32 0, %v3653
    %v3655 = vrot.slane %v3650, %v3654
    %v3689 = vunpack.c.l.b16 %v3618
    %v3690 = vunpack.c.l.b16 %v3619
    %v3691 = vunpack.c.l.b16 %v3620
    %v3692 = vunpack.c.l.b16 %v3621
    %v3693 = vunpack.c.l.b16 %v3622
    %v3694 = vunpack.c.l.b16 %v3623
    %v3695 = vunpack.c.l.b16 %v3624
    %v3696 = vunpack.c.l.b16 %v3625
    %v3697 = vunpack.c.l.b16 %v3626
    %v3698 = vunpack.c.l.b16 %v3627
    %v3699 = vunpack.c.l.b16 %v3628
    %v3700 = vunpack.c.l.b16 %v3629
    %v3701 = vunpack.c.l.b16 %v3630
    %v3702 = vunpack.c.l.b16 %v3631
    %v3703 = vunpack.c.l.b16 %v3632
    %v3704 = vunpack.c.l.b16 %v3633
    %v3705 = vunpack.c.l.b16 %v3634
    %v3706 = vunpack.c.l.b16 %v3635
    %v3707 = vunpack.c.l.b16 %v3636
    %v3708 = vunpack.c.l.b16 %v3637
    %v3709 = vunpack.c.l.b16 %v3638
    %v3710 = vunpack.c.l.b16 %v3639
    %v3711 = vunpack.c.l.b16 %v3640
    %v3712 = vunpack.c.l.b16 %v3641
    %v3713 = vunpack.c.l.b16 %v3642
    %v3714 = vunpack.c.l.b16 %v3643
    %v3715 = vunpack.c.l.b16 %v3644
    %v3716 = vunpack.c.l.b16 %v3645
    %v3717 = vunpack.c.l.b16 %v3646
    %v3718 = vunpack.c.l.b16 %v3647
    %v3719 = vunpack.c.l.b16 %v3648
    %v3720 = vunpack.c.l.b16 %v3649
    %v3721 = vpack.c.b16 %v3690, %v3689
    %v3722 = vpack.c.b16 %v3692, %v3691
    %v3723 = vpack.c.b16 %v3694, %v3693
    %v3724 = vpack.c.b16 %v3696, %v3695
    %v3725 = vpack.c.b16 %v3698, %v3697
    %v3726 = vpack.c.b16 %v3700, %v3699
    %v3727 = vpack.c.b16 %v3702, %v3701
    %v3728 = vpack.c.b16 %v3704, %v3703
    %v3729 = vpack.c.b16 %v3706, %v3705
    %v3730 = vpack.c.b16 %v3708, %v3707
    %v3731 = vpack.c.b16 %v3710, %v3709
    %v3732 = vpack.c.b16 %v3712, %v3711
    %v3733 = vpack.c.b16 %v3714, %v3713
    %v3734 = vpack.c.b16 %v3716, %v3715
    %v3735 = vpack.c.b16 %v3718, %v3717
    %v3736 = vpack.c.b16 %v3720, %v3719
    %3753 = vmatprep.subr.bf16.mxu0 0
    %3754 = vmatpush1.bf16.msra.mxu0 %v3721
    %3755 = vmatprep.subr.bf16.mxu0 0
    %3756 = vmatpush1.bf16.msra.mxu0 %v3722
    %3757 = vmatprep.subr.bf16.mxu0 0
    %3758 = vmatpush1.bf16.msra.mxu0 %v3723
    %3759 = vmatprep.subr.bf16.mxu0 0
    %3760 = vmatpush1.bf16.msra.mxu0 %v3724
    %3761 = vmatprep.subr.bf16.mxu0 0
    %3762 = vmatpush1.bf16.msra.mxu0 %v3725
    %3763 = vmatprep.subr.bf16.mxu0 0
    %3764 = vmatpush1.bf16.msra.mxu0 %v3726
    %3765 = vmatprep.subr.bf16.mxu0 0
    %3766 = vmatpush1.bf16.msra.mxu0 %v3727
    %3767 = vmatprep.subr.bf16.mxu0 0
    %3768 = vmatpush1.bf16.msra.mxu0 %v3728
    %3769 = vmatprep.subr.bf16.mxu0 0
    %3770 = vmatpush1.bf16.msra.mxu0 %v3729
    %3771 = vmatprep.subr.bf16.mxu0 0
    %3772 = vmatpush1.bf16.msra.mxu0 %v3730
    %3773 = vmatprep.subr.bf16.mxu0 0
    %3774 = vmatpush1.bf16.msra.mxu0 %v3731
    %3775 = vmatprep.subr.bf16.mxu0 0
    %3776 = vmatpush1.bf16.msra.mxu0 %v3732
    %3777 = vmatprep.subr.bf16.mxu0 0
    %3778 = vmatpush1.bf16.msra.mxu0 %v3733
    %3779 = vmatprep.subr.bf16.mxu0 0
    %3780 = vmatpush1.bf16.msra.mxu0 %v3734
    %3781 = vmatprep.subr.bf16.mxu0 0
    %3782 = vmatpush1.bf16.msra.mxu0 %v3735
    %3783 = vmatprep.subr.bf16.mxu0 0
    %3784 = vmatpush1.bf16.msra.mxu0 %v3736
    %3785 = vmatprep.mubr.bf16.mxu0 %v3617
    %3786 = vmatmul.mubr.bf16.gmra.mrb[0].mxu0 %v3616
    %v3787 = vpop.f32.mrb[0].mxu0
    %v3788 = vadd.f32 %v3655, %v3787
    %v3789 = vpop.f32.mrb[0].mxu0
    %v3790 = vpop.f32.mrb[0].mxu0
    %v3791 = vpop.f32.mrb[0].mxu0
    %3792 = vdwg.mxu0
    %v3793 = vmax.f32 %v3788, 0.0
    %v3794 = vpack.c.bf16 %v3793, %v3793
    %v3795 = vld [vmem:[%s16] sm:$0xf]
    %v3796 = vld [vmem:[%s16 + $0x4] sm:$0xf]
    %v3797 = vld [vmem:[%s16 + $0x8] sm:$0xf]
    %v3798 = vld [vmem:[%s16 + $0xc] sm:$0xf]
    %v3799 = vld [vmem:[%s16 + $0x10] sm:$0xf]
    %v3800 = vld [vmem:[%s16 + $0x14] sm:$0xf]
    %v3801 = vld [vmem:[%s16 + $0x18] sm:$0xf]
    %v3802 = vld [vmem:[%s16 + $0x1c] sm:$0xf]
    %v3803 = vld [vmem:[%s16 + $0x20] sm:$0xf]
    %v3804 = vld [vmem:[%s16 + $0x24] sm:$0xf]
    %v3805 = vld [vmem:[%s16 + $0x28] sm:$0xf]
    %v3806 = vld [vmem:[%s16 + $0x2c] sm:$0xf]
    %v3807 = vld [vmem:[%s16 + $0x30] sm:$0xf]
    %v3808 = vld [vmem:[%s16 + $0x34] sm:$0xf]
    %v3809 = vld [vmem:[%s16 + $0x38] sm:$0xf]
    %v3810 = vld [vmem:[%s16 + $0x3c] sm:$0xf]
    %v3811 = vld [vmem:[%s17] sm:$0x1]
    %v3813 = vlaneseq
    %v3814 = vshrl.u32 %v3813, 7
    %v3815 = vsub.s32 0, %v3814
    %v3816 = vrot.slane %v3811, %v3815
    %v3834 = vunpack.c.l.b16 %v3795
    %v3835 = vunpack.c.l.b16 %v3796
    %v3836 = vunpack.c.l.b16 %v3797
    %v3837 = vunpack.c.l.b16 %v3798
    %v3838 = vunpack.c.l.b16 %v3799
    %v3839 = vunpack.c.l.b16 %v3800
    %v3840 = vunpack.c.l.b16 %v3801
    %v3841 = vunpack.c.l.b16 %v3802
    %v3842 = vunpack.c.l.b16 %v3803
    %v3843 = vunpack.c.l.b16 %v3804
    %v3844 = vunpack.c.l.b16 %v3805
    %v3845 = vunpack.c.l.b16 %v3806
    %v3846 = vunpack.c.l.b16 %v3807
    %v3847 = vunpack.c.l.b16 %v3808
    %v3848 = vunpack.c.l.b16 %v3809
    %v3849 = vunpack.c.l.b16 %v3810
    %v3850 = vpack.c.b16 %v3835, %v3834
    %v3851 = vpack.c.b16 %v3837, %v3836
    %v3852 = vpack.c.b16 %v3839, %v3838
    %v3853 = vpack.c.b16 %v3841, %v3840
    %v3854 = vpack.c.b16 %v3843, %v3842
    %v3855 = vpack.c.b16 %v3845, %v3844
    %v3856 = vpack.c.b16 %v3847, %v3846
    %v3857 = vpack.c.b16 %v3849, %v3848
    %3866 = vmatprep.subr.bf16.mxu0 0
    %3867 = vmatpush1.bf16.msra.mxu0 %v3850
    %3868 = vmatprep.subr.bf16.mxu0 0
    %3869 = vmatpush1.bf16.msra.mxu0 %v3851
    %3870 = vmatprep.subr.bf16.mxu0 0
    %3871 = vmatpush1.bf16.msra.mxu0 %v3852
    %3872 = vmatprep.subr.bf16.mxu0 0
    %3873 = vmatpush1.bf16.msra.mxu0 %v3853
    %3874 = vmatprep.subr.bf16.mxu0 0
    %3875 = vmatpush1.bf16.msra.mxu0 %v3854
    %3876 = vmatprep.subr.bf16.mxu0 0
    %3877 = vmatpush1.bf16.msra.mxu0 %v3855
    %3878 = vmatprep.subr.bf16.mxu0 0
    %3879 = vmatpush1.bf16.msra.mxu0 %v3856
    %3880 = vmatprep.subr.bf16.mxu0 0
    %3881 = vmatpush1.bf16.msra.mxu0 %v3857
    %3882 = vmatprep.subr.bf16.mxu0 0
    %3883 = vmatpush1.bf16.msra.mxu0 0
    %3884 = vmatprep.subr.bf16.mxu0 0
    %3885 = vmatpush1.bf16.msra.mxu0 0
    %3886 = vmatprep.subr.bf16.mxu0 0
    %3887 = vmatpush1.bf16.msra.mxu0 0
    %3888 = vmatprep.subr.bf16.mxu0 0
    %3889 = vmatpush1.bf16.msra.mxu0 0
    %3890 = vmatprep.subr.bf16.mxu0 0
    %3891 = vmatpush1.bf16.msra.mxu0 0
    %3892 = vmatprep.subr.bf16.mxu0 0
    %3893 = vmatpush1.bf16.msra.mxu0 0
    %3894 = vmatprep.subr.bf16.mxu0 0
    %3895 = vmatpush1.bf16.msra.mxu0 0
    %3896 = vmatprep.subr.bf16.mxu0 0
    %3897 = vmatpush1.bf16.msra.mxu0 0
    %3898 = vmatprep.mubr.bf16.mxu0 0
    %3899 = vmatmul.mubr.bf16.gmra.mrb[0].mxu0 %v3794
    %v3900 = vpop.f32.mrb[0].mxu0
    %v3901 = vadd.f32 %v3816, %v3900
    %v3902 = vpop.f32.mrb[0].mxu0
    %v3903 = vpop.f32.mrb[0].mxu0
    %v3904 = vpop.f32.mrb[0].mxu0
    %3905 = vdwg.mxu0
    %v3906 = vmax.f32 %v3901, 0.0
    %v3907 = vpack.c.bf16 %v3906, %v3906
    %v3908 = vld [vmem:[%s18] sm:$0xf]
    %v3909 = vld [vmem:[%s18 + $0x4] sm:$0xf]
    %v3910 = vld [vmem:[%s18 + $0x8] sm:$0xf]
    %v3911 = vld [vmem:[%s18 + $0xc] sm:$0xf]
    %v3912 = vld [vmem:[%s18 + $0x10] sm:$0xf]
    %v3913 = vld [vmem:[%s18 + $0x14] sm:$0xf]
    %v3914 = vld [vmem:[%s18 + $0x18] sm:$0xf]
    %v3915 = vld [vmem:[%s18 + $0x1c] sm:$0xf]
    %v3916 = vld [vmem:[%s19] sm:$0x1]
    %v3918 = vlaneseq
    %v3919 = vshrl.u32 %v3918, 7
    %v3920 = vsub.s32 0, %v3919
    %v3921 = vrot.slane %v3916, %v3920
    %v3931 = vunpack.c.l.b16 %v3908
    %v3932 = vunpack.c.l.b16 %v3909
    %v3933 = vunpack.c.l.b16 %v3910
    %v3934 = vunpack.c.l.b16 %v3911
    %v3935 = vunpack.c.l.b16 %v3912
    %v3936 = vunpack.c.l.b16 %v3913
    %v3937 = vunpack.c.l.b16 %v3914
    %v3938 = vunpack.c.l.b16 %v3915
    %v3939 = vpack.c.b16 %v3932, %v3931
    %v3940 = vpack.c.b16 %v3934, %v3933
    %v3941 = vpack.c.b16 %v3936, %v3935
    %v3942 = vpack.c.b16 %v3938, %v3937
    %v3948 = vsel %vm1852, %v3907, 0
    %3950 = vmatprep.subr.bf16.mxu0 0
    %3951 = vmatpush1.bf16.msra.mxu0 %v3939
    %3952 = vmatprep.subr.bf16.mxu0 0
    %3953 = vmatpush1.bf16.msra.mxu0 %v3940
    %3954 = vmatprep.subr.bf16.mxu0 0
    %3955 = vmatpush1.bf16.msra.mxu0 %v3941
    %3956 = vmatprep.subr.bf16.mxu0 0
    %3957 = vmatpush1.bf16.msra.mxu0 %v3942
    %3958 = vmatprep.subr.bf16.mxu0 0
    %3959 = vmatpush1.bf16.msra.mxu0 0
    %3960 = vmatprep.subr.bf16.mxu0 0
    %3961 = vmatpush1.bf16.msra.mxu0 0
    %3962 = vmatprep.subr.bf16.mxu0 0
    %3963 = vmatpush1.bf16.msra.mxu0 0
    %3964 = vmatprep.subr.bf16.mxu0 0
    %3965 = vmatpush1.bf16.msra.mxu0 0
    %3966 = vmatprep.subr.bf16.mxu0 0
    %3967 = vmatpush1.bf16.msra.mxu0 0
    %3968 = vmatprep.subr.bf16.mxu0 0
    %3969 = vmatpush1.bf16.msra.mxu0 0
    %3970 = vmatprep.subr.bf16.mxu0 0
    %3971 = vmatpush1.bf16.msra.mxu0 0
    %3972 = vmatprep.subr.bf16.mxu0 0
    %3973 = vmatpush1.bf16.msra.mxu0 0
    %3974 = vmatprep.subr.bf16.mxu0 0
    %3975 = vmatpush1.bf16.msra.mxu0 0
    %3976 = vmatprep.subr.bf16.mxu0 0
    %3977 = vmatpush1.bf16.msra.mxu0 0
    %3978 = vmatprep.subr.bf16.mxu0 0
    %3979 = vmatpush1.bf16.msra.mxu0 0
    %3980 = vmatprep.subr.bf16.mxu0 0
    %3981 = vmatpush1.bf16.msra.mxu0 0
    %3982 = vmatprep.mubr.bf16.mxu0 0
    %3983 = vmatmul.mubr.bf16.gmra.mrb[0].mxu0 %v3948
    %v3984 = vpop.f32.mrb[0].mxu0
    %v3985 = vadd.f32 %v3921, %v3984
    %v3986 = vpop.f32.mrb[0].mxu0
    %v3987 = vpop.f32.mrb[0].mxu0
    %v3988 = vpop.f32.mrb[0].mxu0
    %3989 = vdwg.mxu0
    %vm3990 = vcmask 80896
    %3991 = vst.msk [vmem:[%s20] sm:$0xff] %vm3990, %v3985
    // Predicated region
    $region98: #{mnist_forward.1} parent=1 // pred_check
      _
    $region99: #{mnist_forward.1} parent=1 // pred_check_branch
      %3993 = sbr.rel (0) target = $region101
    $region100: #{mnist_forward.1} parent=1 // pred_region
      _
    $region101: #{mnist_forward.1} parent=1 // pred_fallthru
      _
    // Predicated region
    $region102: #{mnist_forward.1} parent=1 // pred_check
      _
    $region103: #{mnist_forward.1} parent=1 // pred_check_branch
      %3995 = sbr.rel (0) target = $region105
    $region104: #{mnist_forward.1} parent=1 // pred_region
      _
    $region105: #{mnist_forward.1} parent=1 // pred_fallthru
      _
    %3996 = vsyncpa [#allocation3], 1
    %3997 = vsyncpa [#allocation5], 1
    %3998 = vsyncpa [#allocation8], 1

</llo_original>
